<compile_context>
chip_gen: v6e
topology: v6e:2x2x1
jax: 0.10.0
libtpu: 0.0.40
codegen_flags: <defaults>
</compile_context>

<pallas_src>
import jax
import jax.numpy as jnp
from jax import lax
from jax.experimental import pallas as pl
from jax.experimental.pallas import tpu as pltpu


# ----------------------------------------------------------------------------
# Fused kernel: bn1 -> relu -> conv1(stride) -> bn2 -> relu -> conv2 -> +shortcut
# ----------------------------------------------------------------------------
def _make_fused_kernel(H, W, Cin, Cout, stride, equal, cdt):
    assert stride in (1, 2)
    assert not (equal and stride != 1)
    if stride == 1:
        Ho, Wo = H, W
    else:
        Ho, Wo = H // 2, W // 2
    N = Ho * Wo
    Hp = Ho + 1  # rows per space-to-depth phase buffer (stride-2 path)

    def kernel(*refs):
        if equal:
            (x_ref, s1_ref, t1_ref, w1_ref, s2_ref, t2_ref, w2_ref,
             out_ref, pad1_ref, pad2_ref) = refs
            wsc_ref = None
        else:
            (x_ref, s1_ref, t1_ref, w1_ref, s2_ref, t2_ref, w2_ref, wsc_ref,
             out_ref, pad1_ref, pad2_ref) = refs

        s1 = s1_ref[...]                                   # (1, Cin)
        t1 = t1_ref[...]

        # --- zero ONLY the halo border strips (not the whole scratch), every
        #     step: cheap, and correct even if the batch grid is split across
        #     TensorCores (a program_id==0 init guard would not be).
        if stride == 1:
            zr1 = jnp.zeros((1, W + 2, Cin), jnp.float32)
            zc1 = jnp.zeros((H + 2, 1, Cin), jnp.float32)
            pad1_ref[0:1, :, :] = zr1
            pad1_ref[H + 1:H + 2, :, :] = zr1
            pad1_ref[:, 0:1, :] = zc1
            pad1_ref[:, W + 1:W + 2, :] = zc1
        else:
            zr1 = jnp.zeros((1, Wo + 1, Cin), jnp.float32)
            pad1_ref[:, 0:1, :] = jnp.zeros((4 * Hp, 1, Cin), jnp.float32)
            for f in range(4):
                pad1_ref[f * Hp:f * Hp + 1, :, :] = zr1
        zr2 = jnp.zeros((1, Wo + 2, Cout), jnp.float32)
        zc2 = jnp.zeros((Ho + 2, 1, Cout), jnp.float32)
        pad2_ref[0:1, :, :] = zr2
        pad2_ref[Ho + 1:Ho + 2, :, :] = zr2
        pad2_ref[:, 0:1, :] = zc2
        pad2_ref[:, Wo + 1:Wo + 2, :] = zc2

        # --- bn1 + relu -> conv1 halo scratch --------------------------------
        a1 = None
        if stride == 1:
            a1 = jnp.maximum(x_ref[0] * s1 + t1, 0.0)      # (H, W, Cin) f32
            pad1_ref[1:H + 1, 1:W + 1, :] = a1
        else:
            for f in range(4):
                xf = x_ref[0, f * Ho:(f + 1) * Ho, :, :]   # phase f of x
                pad1_ref[f * Hp + 1:f * Hp + 1 + Ho, 1:Wo + 1, :] = (
                    jnp.maximum(xf * s1 + t1, 0.0))

        # --- conv1: 3x3, stride folded into space-to-depth phases; 9 shifted
        #     contiguous matmuls (bf16 operands, f32 accumulation on the MXU).
        acc1 = jnp.zeros((N, Cout), jnp.float32)
        for dy in range(3):
            for dx in range(3):
                if stride == 1:
                    patch = pad1_ref[dy:dy + Ho, dx:dx + Wo, :]
                else:
                    f = 2 * ((dy + 1) % 2) + ((dx + 1) % 2)
                    ry = 0 if dy == 0 else 1
                    rx = 0 if dx == 0 else 1
                    base = f * Hp
                    patch = pad1_ref[base + ry:base + ry + Ho, rx:rx + Wo, :]
                acc1 = acc1 + jnp.dot(patch.reshape(N, Cin).astype(cdt),
                                      w1_ref[dy, dx],
                                      preferred_element_type=jnp.float32)

        # TODO(synk): training-mode dropout (p > 0) not implemented; identity
        #             here reproduces eval / dropRate == 0.0.

        # --- bn2 + relu -> conv2 halo scratch --------------------------------
        a2 = jnp.maximum(acc1 * s2_ref[...] + t2_ref[...], 0.0)   # (N, Cout)
        pad2_ref[1:Ho + 1, 1:Wo + 1, :] = a2.reshape(Ho, Wo, Cout)

        # --- conv2: 3x3, stride 1 --------------------------------------------
        acc2 = jnp.zeros((N, Cout), jnp.float32)
        for dy in range(3):
            for dx in range(3):
                patch = pad2_ref[dy:dy + Ho, dx:dx + Wo, :]
                acc2 = acc2 + jnp.dot(patch.reshape(N, Cout).astype(cdt),
                                      w2_ref[dy, dx],
                                      preferred_element_type=jnp.float32)

        # --- shortcut + residual add (all from VMEM-resident data) -----------
        if equal:
            # This module's forward rebinds x = relu1(bn1(x)) when equalInOut,
            # so the identity shortcut adds a1 (kept in f32 for precision).
            sc = a1.reshape(N, Cin)
        elif stride == 1:
            sc = jnp.dot(x_ref[0].reshape(N, Cin).astype(cdt), wsc_ref[...],
                         preferred_element_type=jnp.float32)
        else:
            x00 = x_ref[0, 0:Ho, :, :]                     # phase (0,0) == x[::2, ::2, :]
            sc = jnp.dot(x00.reshape(N, Cin).astype(cdt), wsc_ref[...],
                         preferred_element_type=jnp.float32)

        out_ref[0] = (acc2 + sc).reshape(Ho, Wo, Cout)

    return kernel


# ----------------------------------------------------------------------------
# Wrapper
# ----------------------------------------------------------------------------
def wide_dropout_block(x_nchw, params, *, stride, drop_rate=0.0, training=False,
                       compute_dtype=jnp.bfloat16):
    B, Cin, H, W = x_nchw.shape
    Cout = params["conv1_w"].shape[0]
    equal = (Cin == Cout)
    eps = 1e-5
    assert stride in (1, 2), "Wide ResNet uses stride 1 or 2 only"
    if equal:
        assert stride == 1, "identity shortcut requires stride == 1"
    if stride == 2:
        assert H % 2 == 0 and W % 2 == 0

    # TODO(synk): training-mode dropout (p>0) / batch-stat BN not implemented.
    del drop_rate, training

    x = jnp.transpose(x_nchw, (0, 2, 3, 1)).astype(jnp.float32)     # NHWC

    # Conv weights: PyTorch OIHW -> HWIO, shipped as bf16 matmul operands.
    w1 = jnp.transpose(params["conv1_w"], (2, 3, 1, 0)).astype(compute_dtype)
    w2 = jnp.transpose(params["conv2_w"], (2, 3, 1, 0)).astype(compute_dtype)

    # Fold BatchNorm (eval / running stats) into per-channel scale & shift.
    inv1 = 1.0 / jnp.sqrt(params["bn1_var"] + eps)
    s1 = (params["bn1_g"] * inv1).reshape(1, Cin).astype(jnp.float32)
    t1 = (params["bn1_b"] - params["bn1_mean"] * params["bn1_g"] * inv1
          ).reshape(1, Cin).astype(jnp.float32)
    inv2 = 1.0 / jnp.sqrt(params["bn2_var"] + eps)
    s2 = (params["bn2_g"] * inv2).reshape(1, Cout).astype(jnp.float32)
    t2 = (params["bn2_b"] - params["bn2_mean"] * params["bn2_g"] * inv2
          ).reshape(1, Cout).astype(jnp.float32)

    if stride == 2:
        Ho, Wo = H // 2, W // 2
        # Space-to-depth: stack the 4 spatial phases along the row axis so the
        # stride-2 conv becomes contiguous stride-1 taps inside the kernel.
        # Phase f = 2*p + q holds x[:, 2m+p, 2n+q, :] at stacked row f*Ho + m.
        x_in = x.reshape(B, Ho, 2, Wo, 2, Cin).transpose(0, 2, 4, 1, 3, 5)
        x_in = x_in.reshape(B, 4 * Ho, Wo, Cin)
        Hx, Wx = 4 * Ho, Wo
        pad1_shape = (4 * (Ho + 1), Wo + 1, Cin)
    else:
        Ho, Wo = H, W
        x_in = x
        Hx, Wx = H, W
        pad1_shape = (H + 2, W + 2, Cin)

    in_specs = [
        pl.BlockSpec((1, Hx, Wx, Cin), lambda b: (b, 0, 0, 0)),
        pl.BlockSpec((1, Cin), lambda b: (0, 0)),
        pl.BlockSpec((1, Cin), lambda b: (0, 0)),
        pl.BlockSpec((3, 3, Cin, Cout), lambda b: (0, 0, 0, 0)),
        pl.BlockSpec((1, Cout), lambda b: (0, 0)),
        pl.BlockSpec((1, Cout), lambda b: (0, 0)),
        pl.BlockSpec((3, 3, Cout, Cout), lambda b: (0, 0, 0, 0)),
    ]
    operands = [x_in, s1, t1, w1, s2, t2, w2]
    if not equal:
        wsc = jnp.transpose(params["convsc_w"].reshape(Cout, Cin),
                            (1, 0)).astype(compute_dtype)
        in_specs.append(pl.BlockSpec((Cin, Cout), lambda b: (0, 0)))
        operands.append(wsc)

    out = pl.pallas_call(
        _make_fused_kernel(H, W, Cin, Cout, stride, equal, compute_dtype),
        out_shape=jax.ShapeDtypeStruct((B, Ho, Wo, Cout), jnp.float32),
        grid_spec=pltpu.PrefetchScalarGridSpec(
            num_scalar_prefetch=0,
            grid=(B,),
            in_specs=in_specs,
            out_specs=pl.BlockSpec((1, Ho, Wo, Cout), lambda b: (b, 0, 0, 0)),
            scratch_shapes=[
                pltpu.VMEM(pad1_shape, jnp.float32),
                pltpu.VMEM((Ho + 2, Wo + 2, Cout), jnp.float32),
            ],
        ),
        compiler_params=pltpu.CompilerParams(
            dimension_semantics=("parallel",)),
    )(*operands)

    return jnp.transpose(out, (0, 3, 1, 2))                         # back to NCHW


# ----------------------------------------------------------------------------
# Deterministic parameter init (same shapes as the PyTorch module __init__)
# ----------------------------------------------------------------------------
def init_params(key, in_planes, out_planes):
    ks = jax.random.split(key, 11)
    p = {
        "bn1_g":    1.0 + 0.1 * jax.random.normal(ks[0], (in_planes,), jnp.float32),
        "bn1_b":    0.1 * jax.random.normal(ks[1], (in_planes,), jnp.float32),
        "bn1_mean": 0.1 * jax.random.normal(ks[2], (in_planes,), jnp.float32),
        "bn1_var":  0.5 + jax.random.uniform(ks[3], (in_planes,), jnp.float32),
        "conv1_w":  0.2 * jax.random.normal(ks[4], (out_planes, in_planes, 3, 3), jnp.float32),
        "bn2_g":    1.0 + 0.1 * jax.random.normal(ks[5], (out_planes,), jnp.float32),
        "bn2_b":    0.1 * jax.random.normal(ks[6], (out_planes,), jnp.float32),
        "bn2_mean": 0.1 * jax.random.normal(ks[7], (out_planes,), jnp.float32),
        "bn2_var":  0.5 + jax.random.uniform(ks[8], (out_planes,), jnp.float32),
        "conv2_w":  0.2 * jax.random.normal(ks[9], (out_planes, out_planes, 3, 3), jnp.float32),
    }
    if in_planes != out_planes:
        p["convsc_w"] = 0.3 * jax.random.normal(ks[10], (out_planes, in_planes, 1, 1), jnp.float32)
    return p


# ----------------------------------------------------------------------------
# Plain-JAX reference (mirrors the PyTorch forward, eval mode, f32 HIGHEST)
# ----------------------------------------------------------------------------
def reference_forward(x_nchw, params, *, stride):
    Cin = x_nchw.shape[1]
    Cout = params["conv1_w"].shape[0]
    equal = Cin == Cout
    eps = 1e-5
    x = jnp.transpose(x_nchw, (0, 2, 3, 1)).astype(jnp.float32)

    def bn_relu(v, g, b, m, var):
        return jnp.maximum((v - m) / jnp.sqrt(var + eps) * g + b, 0.0)

    def conv(v, w_oihw, s, pad):
        w = jnp.transpose(w_oihw, (2, 3, 1, 0))
        dn = lax.conv_dimension_numbers(v.shape, w.shape, ("NHWC", "HWIO", "NHWC"))
        return lax.conv_general_dilated(v, w, (s, s), ((pad, pad), (pad, pad)),
                                        dimension_numbers=dn,
                                        precision=lax.Precision.HIGHEST)

    a1 = bn_relu(x, params["bn1_g"], params["bn1_b"], params["bn1_mean"], params["bn1_var"])
    out = conv(a1, params["conv1_w"], stride, 1)
    out = conv(bn_relu(out, params["bn2_g"], params["bn2_b"],
                       params["bn2_mean"], params["bn2_var"]),
               params["conv2_w"], 1, 1)
    sc = a1 if equal else conv(x, params["convsc_w"], stride, 0)
    out = out + sc
    return jnp.transpose(out, (0, 3, 1, 2))


# ----------------------------------------------------------------------------
if __name__ == "__main__":
    key = jax.random.PRNGKey(0)
    k_x1, k_p1, k_x2, k_p2, k_x3, k_p3 = jax.random.split(key, 6)

    def check(x, params, stride, expect_shape):
        out = jax.block_until_ready(wide_dropout_block(x, params, stride=stride))
        ref = reference_forward(x, params, stride=stride)
        assert out.shape == expect_shape, out.shape
        err = float(jnp.max(jnp.abs(out - ref)))
        # bf16 matmul operands (f32 accumulation): tolerance scaled to output range.
        tol = 4e-2 * float(jnp.max(jnp.abs(ref))) + 4e-2
        assert err < tol, (err, tol)

    # Case 1: downsampling block (4 -> 8, stride 2): projection shortcut +
    #         space-to-depth strided conv1 path.
    x1 = jax.random.normal(k_x1, (2, 4, 16, 16), jnp.float32)
    p1 = init_params(k_p1, 4, 8)
    check(x1, p1, 2, (2, 8, 8, 8))

    # Case 2: equal in/out block (4 -> 4, stride 1): identity shortcut on relu(bn1(x)).
    x2 = jax.random.normal(k_x2, (2, 4, 16, 16), jnp.float32)
    p2 = init_params(k_p2, 4, 4)
    check(x2, p2, 1, (2, 4, 16, 16))

    # Case 3: widening block without downsampling (4 -> 8, stride 1): projection
    #         shortcut at stride 1.
    x3 = jax.random.normal(k_x3, (2, 4, 16, 16), jnp.float32)
    p3 = init_params(k_p3, 4, 8)
    check(x3, p3, 1, (2, 8, 16, 16))

    print("KERNEL_OK")
</pallas_src>

<mosaic_0001>
module attributes {stable_mosaic.version = 11 : i64} {
  func.func @kernel(%arg0: i32, %arg1: memref<1x32x8x4xf32, #tpu.memory_space<vmem>>, %arg2: memref<1x4xf32, #tpu.memory_space<vmem>>, %arg3: memref<1x4xf32, #tpu.memory_space<vmem>>, %arg4: memref<3x3x4x8xbf16, #tpu.memory_space<vmem>>, %arg5: memref<1x8xf32, #tpu.memory_space<vmem>>, %arg6: memref<1x8xf32, #tpu.memory_space<vmem>>, %arg7: memref<3x3x8x8xbf16, #tpu.memory_space<vmem>>, %arg8: memref<4x8xbf16, #tpu.memory_space<vmem>>, %arg9: memref<1x8x8x8xf32, #tpu.memory_space<vmem>>, %arg10: memref<36x9x4xf32, #tpu.memory_space<vmem>>, %arg11: memref<10x10x8xf32, #tpu.memory_space<vmem>>) attributes {dimension_semantics = [#tpu.dimension_semantics<parallel>], iteration_bounds = array<i64: 2>, scalar_prefetch = 0 : i64, scratch_operands = 2 : i64, tpu.core_type = #tpu.core_type<tc>, window_params = [{transform_indices = @transform_0, window_bounds = array<i64: 1, 32, 8, 4>}, {pipeline_mode = #tpu.pipeline_mode<synchronous>, transform_indices = @transform_1, window_bounds = array<i64: 1, 4>}, {pipeline_mode = #tpu.pipeline_mode<synchronous>, transform_indices = @transform_2, window_bounds = array<i64: 1, 4>}, {pipeline_mode = #tpu.pipeline_mode<synchronous>, transform_indices = @transform_3, window_bounds = array<i64: 3, 3, 4, 8>}, {pipeline_mode = #tpu.pipeline_mode<synchronous>, transform_indices = @transform_4, window_bounds = array<i64: 1, 8>}, {pipeline_mode = #tpu.pipeline_mode<synchronous>, transform_indices = @transform_5, window_bounds = array<i64: 1, 8>}, {pipeline_mode = #tpu.pipeline_mode<synchronous>, transform_indices = @transform_6, window_bounds = array<i64: 3, 3, 8, 8>}, {pipeline_mode = #tpu.pipeline_mode<synchronous>, transform_indices = @transform_7, window_bounds = array<i64: 4, 8>}, {transform_indices = @transform_8, window_bounds = array<i64: 1, 8, 8, 8>}]} {
    %c0 = arith.constant 0 : index
    %c0_0 = arith.constant 0 : index
    %0 = vector.load %arg2[%c0, %c0_0] : memref<1x4xf32, #tpu.memory_space<vmem>>, vector<1x4xf32>
    %c0_1 = arith.constant 0 : index
    %c0_2 = arith.constant 0 : index
    %1 = vector.load %arg3[%c0_1, %c0_2] : memref<1x4xf32, #tpu.memory_space<vmem>>, vector<1x4xf32>
    %cst = arith.constant 0.000000e+00 : f32
    %2 = vector.broadcast %cst : f32 to vector<1x9x4xf32>
    %cst_3 = arith.constant 0.000000e+00 : f32
    %3 = vector.broadcast %cst_3 : f32 to vector<36x1x4xf32>
    %c0_4 = arith.constant 0 : index
    %c0_5 = arith.constant 0 : index
    %c0_6 = arith.constant 0 : index
    %4 = vector.load %arg10[%c0_4, %c0_5, %c0_6] : memref<36x9x4xf32, #tpu.memory_space<vmem>>, vector<36x1x4xf32>
    tpu.vector_store %arg10[%c0_4, %c0_5, %c0_6], %3 {strides = array<i32>} : memref<36x9x4xf32, #tpu.memory_space<vmem>>, vector<36x1x4xf32>,
    %c0_7 = arith.constant 0 : index
    %c0_8 = arith.constant 0 : index
    %c0_9 = arith.constant 0 : index
    %5 = vector.load %arg10[%c0_7, %c0_8, %c0_9] : memref<36x9x4xf32, #tpu.memory_space<vmem>>, vector<1x9x4xf32>
    tpu.vector_store %arg10[%c0_7, %c0_8, %c0_9], %2 {strides = array<i32>} : memref<36x9x4xf32, #tpu.memory_space<vmem>>, vector<1x9x4xf32>,
    %c9 = arith.constant 9 : index
    %c0_10 = arith.constant 0 : index
    %c0_11 = arith.constant 0 : index
    %6 = vector.load %arg10[%c9, %c0_10, %c0_11] : memref<36x9x4xf32, #tpu.memory_space<vmem>>, vector<1x9x4xf32>
    tpu.vector_store %arg10[%c9, %c0_10, %c0_11], %2 {strides = array<i32>} : memref<36x9x4xf32, #tpu.memory_space<vmem>>, vector<1x9x4xf32>,
    %c18 = arith.constant 18 : index
    %c0_12 = arith.constant 0 : index
    %c0_13 = arith.constant 0 : index
    %7 = vector.load %arg10[%c18, %c0_12, %c0_13] : memref<36x9x4xf32, #tpu.memory_space<vmem>>, vector<1x9x4xf32>
    tpu.vector_store %arg10[%c18, %c0_12, %c0_13], %2 {strides = array<i32>} : memref<36x9x4xf32, #tpu.memory_space<vmem>>, vector<1x9x4xf32>,
    %c27 = arith.constant 27 : index
    %c0_14 = arith.constant 0 : index
    %c0_15 = arith.constant 0 : index
    %8 = vector.load %arg10[%c27, %c0_14, %c0_15] : memref<36x9x4xf32, #tpu.memory_space<vmem>>, vector<1x9x4xf32>
    tpu.vector_store %arg10[%c27, %c0_14, %c0_15], %2 {strides = array<i32>} : memref<36x9x4xf32, #tpu.memory_space<vmem>>, vector<1x9x4xf32>,
    %cst_16 = arith.constant 0.000000e+00 : f32
    %9 = vector.broadcast %cst_16 : f32 to vector<1x10x8xf32>
    %cst_17 = arith.constant 0.000000e+00 : f32
    %10 = vector.broadcast %cst_17 : f32 to vector<10x1x8xf32>
    %c0_18 = arith.constant 0 : index
    %c0_19 = arith.constant 0 : index
    %c0_20 = arith.constant 0 : index
    %11 = vector.load %arg11[%c0_18, %c0_19, %c0_20] : memref<10x10x8xf32, #tpu.memory_space<vmem>>, vector<1x10x8xf32>
    tpu.vector_store %arg11[%c0_18, %c0_19, %c0_20], %9 {strides = array<i32>} : memref<10x10x8xf32, #tpu.memory_space<vmem>>, vector<1x10x8xf32>,
    %c9_21 = arith.constant 9 : index
    %c0_22 = arith.constant 0 : index
    %c0_23 = arith.constant 0 : index
    %12 = vector.load %arg11[%c9_21, %c0_22, %c0_23] : memref<10x10x8xf32, #tpu.memory_space<vmem>>, vector<1x10x8xf32>
    tpu.vector_store %arg11[%c9_21, %c0_22, %c0_23], %9 {strides = array<i32>} : memref<10x10x8xf32, #tpu.memory_space<vmem>>, vector<1x10x8xf32>,
    %c0_24 = arith.constant 0 : index
    %c0_25 = arith.constant 0 : index
    %c0_26 = arith.constant 0 : index
    %13 = vector.load %arg11[%c0_24, %c0_25, %c0_26] : memref<10x10x8xf32, #tpu.memory_space<vmem>>, vector<10x1x8xf32>
    tpu.vector_store %arg11[%c0_24, %c0_25, %c0_26], %10 {strides = array<i32>} : memref<10x10x8xf32, #tpu.memory_space<vmem>>, vector<10x1x8xf32>,
    %c0_27 = arith.constant 0 : index
    %c9_28 = arith.constant 9 : index
    %c0_29 = arith.constant 0 : index
    %14 = vector.load %arg11[%c0_27, %c9_28, %c0_29] : memref<10x10x8xf32, #tpu.memory_space<vmem>>, vector<10x1x8xf32>
    tpu.vector_store %arg11[%c0_27, %c9_28, %c0_29], %10 {strides = array<i32>} : memref<10x10x8xf32, #tpu.memory_space<vmem>>, vector<10x1x8xf32>,
    %c0_30 = arith.constant 0 : index
    %c0_31 = arith.constant 0 : index
    %c0_32 = arith.constant 0 : index
    %c0_33 = arith.constant 0 : index
    %15 = vector.load %arg1[%c0_30, %c0_31, %c0_32, %c0_33] : memref<1x32x8x4xf32, #tpu.memory_space<vmem>>, vector<1x8x8x4xf32>
    %16 = vector.shape_cast %15 : vector<1x8x8x4xf32> to vector<8x8x4xf32>
    %17 = vector.shape_cast %0 : vector<1x4xf32> to vector<1x1x4xf32>
    %18 = vector.broadcast %17 : vector<1x1x4xf32> to vector<8x8x4xf32>
    %19 = arith.mulf %16, %18 : vector<8x8x4xf32>
    %20 = vector.shape_cast %1 : vector<1x4xf32> to vector<1x1x4xf32>
    %21 = vector.broadcast %20 : vector<1x1x4xf32> to vector<8x8x4xf32>
    %22 = arith.addf %19, %21 : vector<8x8x4xf32>
    %cst_34 = arith.constant 0.000000e+00 : f32
    %23 = vector.broadcast %cst_34 : f32 to vector<8x8x4xf32>
    %24 = arith.maximumf %22, %23 : vector<8x8x4xf32>
    %c1 = arith.constant 1 : index
    %c1_35 = arith.constant 1 : index
    %c0_36 = arith.constant 0 : index
    %25 = vector.load %arg10[%c1, %c1_35, %c0_36] : memref<36x9x4xf32, #tpu.memory_space<vmem>>, vector<8x8x4xf32>
    tpu.vector_store %arg10[%c1, %c1_35, %c0_36], %24 {strides = array<i32>} : memref<36x9x4xf32, #tpu.memory_space<vmem>>, vector<8x8x4xf32>,
    %c0_37 = arith.constant 0 : index
    %c8 = arith.constant 8 : index
    %c0_38 = arith.constant 0 : index
    %c0_39 = arith.constant 0 : index
    %26 = vector.load %arg1[%c0_37, %c8, %c0_38, %c0_39] : memref<1x32x8x4xf32, #tpu.memory_space<vmem>>, vector<1x8x8x4xf32>
    %27 = vector.shape_cast %26 : vector<1x8x8x4xf32> to vector<8x8x4xf32>
    %28 = vector.shape_cast %0 : vector<1x4xf32> to vector<1x1x4xf32>
    %29 = vector.broadcast %28 : vector<1x1x4xf32> to vector<8x8x4xf32>
    %30 = arith.mulf %27, %29 : vector<8x8x4xf32>
    %31 = vector.shape_cast %1 : vector<1x4xf32> to vector<1x1x4xf32>
    %32 = vector.broadcast %31 : vector<1x1x4xf32> to vector<8x8x4xf32>
    %33 = arith.addf %30, %32 : vector<8x8x4xf32>
    %cst_40 = arith.constant 0.000000e+00 : f32
    %34 = vector.broadcast %cst_40 : f32 to vector<8x8x4xf32>
    %35 = arith.maximumf %33, %34 : vector<8x8x4xf32>
    %c10 = arith.constant 10 : index
    %c1_41 = arith.constant 1 : index
    %c0_42 = arith.constant 0 : index
    %36 = vector.load %arg10[%c10, %c1_41, %c0_42] : memref<36x9x4xf32, #tpu.memory_space<vmem>>, vector<8x8x4xf32>
    tpu.vector_store %arg10[%c10, %c1_41, %c0_42], %35 {strides = array<i32>} : memref<36x9x4xf32, #tpu.memory_space<vmem>>, vector<8x8x4xf32>,
    %c0_43 = arith.constant 0 : index
    %c16 = arith.constant 16 : index
    %c0_44 = arith.constant 0 : index
    %c0_45 = arith.constant 0 : index
    %37 = vector.load %arg1[%c0_43, %c16, %c0_44, %c0_45] : memref<1x32x8x4xf32, #tpu.memory_space<vmem>>, vector<1x8x8x4xf32>
    %38 = vector.shape_cast %37 : vector<1x8x8x4xf32> to vector<8x8x4xf32>
    %39 = vector.shape_cast %0 : vector<1x4xf32> to vector<1x1x4xf32>
    %40 = vector.broadcast %39 : vector<1x1x4xf32> to vector<8x8x4xf32>
    %41 = arith.mulf %38, %40 : vector<8x8x4xf32>
    %42 = vector.shape_cast %1 : vector<1x4xf32> to vector<1x1x4xf32>
    %43 = vector.broadcast %42 : vector<1x1x4xf32> to vector<8x8x4xf32>
    %44 = arith.addf %41, %43 : vector<8x8x4xf32>
    %cst_46 = arith.constant 0.000000e+00 : f32
    %45 = vector.broadcast %cst_46 : f32 to vector<8x8x4xf32>
    %46 = arith.maximumf %44, %45 : vector<8x8x4xf32>
    %c19 = arith.constant 19 : index
    %c1_47 = arith.constant 1 : index
    %c0_48 = arith.constant 0 : index
    %47 = vector.load %arg10[%c19, %c1_47, %c0_48] : memref<36x9x4xf32, #tpu.memory_space<vmem>>, vector<8x8x4xf32>
    tpu.vector_store %arg10[%c19, %c1_47, %c0_48], %46 {strides = array<i32>} : memref<36x9x4xf32, #tpu.memory_space<vmem>>, vector<8x8x4xf32>,
    %c0_49 = arith.constant 0 : index
    %c24 = arith.constant 24 : index
    %c0_50 = arith.constant 0 : index
    %c0_51 = arith.constant 0 : index
    %48 = vector.load %arg1[%c0_49, %c24, %c0_50, %c0_51] : memref<1x32x8x4xf32, #tpu.memory_space<vmem>>, vector<1x8x8x4xf32>
    %49 = vector.shape_cast %48 : vector<1x8x8x4xf32> to vector<8x8x4xf32>
    %50 = vector.shape_cast %0 : vector<1x4xf32> to vector<1x1x4xf32>
    %51 = vector.broadcast %50 : vector<1x1x4xf32> to vector<8x8x4xf32>
    %52 = arith.mulf %49, %51 : vector<8x8x4xf32>
    %53 = vector.shape_cast %1 : vector<1x4xf32> to vector<1x1x4xf32>
    %54 = vector.broadcast %53 : vector<1x1x4xf32> to vector<8x8x4xf32>
    %55 = arith.addf %52, %54 : vector<8x8x4xf32>
    %cst_52 = arith.constant 0.000000e+00 : f32
    %56 = vector.broadcast %cst_52 : f32 to vector<8x8x4xf32>
    %57 = arith.maximumf %55, %56 : vector<8x8x4xf32>
    %c28 = arith.constant 28 : index
    %c1_53 = arith.constant 1 : index
    %c0_54 = arith.constant 0 : index
    %58 = vector.load %arg10[%c28, %c1_53, %c0_54] : memref<36x9x4xf32, #tpu.memory_space<vmem>>, vector<8x8x4xf32>
    tpu.vector_store %arg10[%c28, %c1_53, %c0_54], %57 {strides = array<i32>} : memref<36x9x4xf32, #tpu.memory_space<vmem>>, vector<8x8x4xf32>,
    %cst_55 = arith.constant 0.000000e+00 : f32
    %59 = vector.broadcast %cst_55 : f32 to vector<64x8xf32>
    %c27_56 = arith.constant 27 : index
    %c0_57 = arith.constant 0 : index
    %c0_58 = arith.constant 0 : index
    %60 = vector.load %arg10[%c27_56, %c0_57, %c0_58] : memref<36x9x4xf32, #tpu.memory_space<vmem>>, vector<8x8x4xf32>
    %61 = vector.shape_cast %60 : vector<8x8x4xf32> to vector<64x4xf32>
    %62 = arith.truncf %61 : vector<64x4xf32> to vector<64x4xbf16>
    %c0_59 = arith.constant 0 : index
    %c0_60 = arith.constant 0 : index
    %c0_61 = arith.constant 0 : index
    %c0_62 = arith.constant 0 : index
    %63 = vector.load %arg4[%c0_59, %c0_60, %c0_61, %c0_62] : memref<3x3x4x8xbf16, #tpu.memory_space<vmem>>, vector<1x1x4x8xbf16>
    %64 = vector.shape_cast %63 : vector<1x1x4x8xbf16> to vector<4x8xbf16>
    %cst_63 = arith.constant dense<0.000000e+00> : vector<64x8xf32>
    %65 = tpu.matmul %62, %64, %cst_63 {dimension_numbers = #tpu.dot_dimension_numbers<[1], [0], [0], [1], [0, 0, 1, 1], [], []>} : vector<64x4xbf16>, vector<4x8xbf16>, vector<64x8xf32> -> vector<64x8xf32>
    %66 = arith.addf %59, %65 : vector<64x8xf32>
    %c18_64 = arith.constant 18 : index
    %c1_65 = arith.constant 1 : index
    %c0_66 = arith.constant 0 : index
    %67 = vector.load %arg10[%c18_64, %c1_65, %c0_66] : memref<36x9x4xf32, #tpu.memory_space<vmem>>, vector<8x8x4xf32>
    %68 = vector.shape_cast %67 : vector<8x8x4xf32> to vector<64x4xf32>
    %69 = arith.truncf %68 : vector<64x4xf32> to vector<64x4xbf16>
    %c0_67 = arith.constant 0 : index
    %c1_68 = arith.constant 1 : index
    %c0_69 = arith.constant 0 : index
    %c0_70 = arith.constant 0 : index
    %70 = vector.load %arg4[%c0_67, %c1_68, %c0_69, %c0_70] : memref<3x3x4x8xbf16, #tpu.memory_space<vmem>>, vector<1x1x4x8xbf16>
    %71 = vector.shape_cast %70 : vector<1x1x4x8xbf16> to vector<4x8xbf16>
    %cst_71 = arith.constant dense<0.000000e+00> : vector<64x8xf32>
    %72 = tpu.matmul %69, %71, %cst_71 {dimension_numbers = #tpu.dot_dimension_numbers<[1], [0], [0], [1], [0, 0, 1, 1], [], []>} : vector<64x4xbf16>, vector<4x8xbf16>, vector<64x8xf32> -> vector<64x8xf32>
    %73 = arith.addf %66, %72 : vector<64x8xf32>
    %c27_72 = arith.constant 27 : index
    %c1_73 = arith.constant 1 : index
    %c0_74 = arith.constant 0 : index
    %74 = vector.load %arg10[%c27_72, %c1_73, %c0_74] : memref<36x9x4xf32, #tpu.memory_space<vmem>>, vector<8x8x4xf32>
    %75 = vector.shape_cast %74 : vector<8x8x4xf32> to vector<64x4xf32>
    %76 = arith.truncf %75 : vector<64x4xf32> to vector<64x4xbf16>
    %c0_75 = arith.constant 0 : index
    %c2 = arith.constant 2 : index
    %c0_76 = arith.constant 0 : index
    %c0_77 = arith.constant 0 : index
    %77 = vector.load %arg4[%c0_75, %c2, %c0_76, %c0_77] : memref<3x3x4x8xbf16, #tpu.memory_space<vmem>>, vector<1x1x4x8xbf16>
    %78 = vector.shape_cast %77 : vector<1x1x4x8xbf16> to vector<4x8xbf16>
    %cst_78 = arith.constant dense<0.000000e+00> : vector<64x8xf32>
    %79 = tpu.matmul %76, %78, %cst_78 {dimension_numbers = #tpu.dot_dimension_numbers<[1], [0], [0], [1], [0, 0, 1, 1], [], []>} : vector<64x4xbf16>, vector<4x8xbf16>, vector<64x8xf32> -> vector<64x8xf32>
    %80 = arith.addf %73, %79 : vector<64x8xf32>
    %c10_79 = arith.constant 10 : index
    %c0_80 = arith.constant 0 : index
    %c0_81 = arith.constant 0 : index
    %81 = vector.load %arg10[%c10_79, %c0_80, %c0_81] : memref<36x9x4xf32, #tpu.memory_space<vmem>>, vector<8x8x4xf32>
    %82 = vector.shape_cast %81 : vector<8x8x4xf32> to vector<64x4xf32>
    %83 = arith.truncf %82 : vector<64x4xf32> to vector<64x4xbf16>
    %c1_82 = arith.constant 1 : index
    %c0_83 = arith.constant 0 : index
    %c0_84 = arith.constant 0 : index
    %c0_85 = arith.constant 0 : index
    %84 = vector.load %arg4[%c1_82, %c0_83, %c0_84, %c0_85] : memref<3x3x4x8xbf16, #tpu.memory_space<vmem>>, vector<1x1x4x8xbf16>
    %85 = vector.shape_cast %84 : vector<1x1x4x8xbf16> to vector<4x8xbf16>
    %cst_86 = arith.constant dense<0.000000e+00> : vector<64x8xf32>
    %86 = tpu.matmul %83, %85, %cst_86 {dimension_numbers = #tpu.dot_dimension_numbers<[1], [0], [0], [1], [0, 0, 1, 1], [], []>} : vector<64x4xbf16>, vector<4x8xbf16>, vector<64x8xf32> -> vector<64x8xf32>
    %87 = arith.addf %80, %86 : vector<64x8xf32>
    %c1_87 = arith.constant 1 : index
    %c1_88 = arith.constant 1 : index
    %c0_89 = arith.constant 0 : index
    %88 = vector.load %arg10[%c1_87, %c1_88, %c0_89] : memref<36x9x4xf32, #tpu.memory_space<vmem>>, vector<8x8x4xf32>
    %89 = vector.shape_cast %88 : vector<8x8x4xf32> to vector<64x4xf32>
    %90 = arith.truncf %89 : vector<64x4xf32> to vector<64x4xbf16>
    %c1_90 = arith.constant 1 : index
    %c1_91 = arith.constant 1 : index
    %c0_92 = arith.constant 0 : index
    %c0_93 = arith.constant 0 : index
    %91 = vector.load %arg4[%c1_90, %c1_91, %c0_92, %c0_93] : memref<3x3x4x8xbf16, #tpu.memory_space<vmem>>, vector<1x1x4x8xbf16>
    %92 = vector.shape_cast %91 : vector<1x1x4x8xbf16> to vector<4x8xbf16>
    %cst_94 = arith.constant dense<0.000000e+00> : vector<64x8xf32>
    %93 = tpu.matmul %90, %92, %cst_94 {dimension_numbers = #tpu.dot_dimension_numbers<[1], [0], [0], [1], [0, 0, 1, 1], [], []>} : vector<64x4xbf16>, vector<4x8xbf16>, vector<64x8xf32> -> vector<64x8xf32>
    %94 = arith.addf %87, %93 : vector<64x8xf32>
    %c10_95 = arith.constant 10 : index
    %c1_96 = arith.constant 1 : index
    %c0_97 = arith.constant 0 : index
    %95 = vector.load %arg10[%c10_95, %c1_96, %c0_97] : memref<36x9x4xf32, #tpu.memory_space<vmem>>, vector<8x8x4xf32>
    %96 = vector.shape_cast %95 : vector<8x8x4xf32> to vector<64x4xf32>
    %97 = arith.truncf %96 : vector<64x4xf32> to vector<64x4xbf16>
    %c1_98 = arith.constant 1 : index
    %c2_99 = arith.constant 2 : index
    %c0_100 = arith.constant 0 : index
    %c0_101 = arith.constant 0 : index
    %98 = vector.load %arg4[%c1_98, %c2_99, %c0_100, %c0_101] : memref<3x3x4x8xbf16, #tpu.memory_space<vmem>>, vector<1x1x4x8xbf16>
    %99 = vector.shape_cast %98 : vector<1x1x4x8xbf16> to vector<4x8xbf16>
    %cst_102 = arith.constant dense<0.000000e+00> : vector<64x8xf32>
    %100 = tpu.matmul %97, %99, %cst_102 {dimension_numbers = #tpu.dot_dimension_numbers<[1], [0], [0], [1], [0, 0, 1, 1], [], []>} : vector<64x4xbf16>, vector<4x8xbf16>, vector<64x8xf32> -> vector<64x8xf32>
    %101 = arith.addf %94, %100 : vector<64x8xf32>
    %c28_103 = arith.constant 28 : index
    %c0_104 = arith.constant 0 : index
    %c0_105 = arith.constant 0 : index
    %102 = vector.load %arg10[%c28_103, %c0_104, %c0_105] : memref<36x9x4xf32, #tpu.memory_space<vmem>>, vector<8x8x4xf32>
    %103 = vector.shape_cast %102 : vector<8x8x4xf32> to vector<64x4xf32>
    %104 = arith.truncf %103 : vector<64x4xf32> to vector<64x4xbf16>
    %c2_106 = arith.constant 2 : index
    %c0_107 = arith.constant 0 : index
    %c0_108 = arith.constant 0 : index
    %c0_109 = arith.constant 0 : index
    %105 = vector.load %arg4[%c2_106, %c0_107, %c0_108, %c0_109] : memref<3x3x4x8xbf16, #tpu.memory_space<vmem>>, vector<1x1x4x8xbf16>
    %106 = vector.shape_cast %105 : vector<1x1x4x8xbf16> to vector<4x8xbf16>
    %cst_110 = arith.constant dense<0.000000e+00> : vector<64x8xf32>
    %107 = tpu.matmul %104, %106, %cst_110 {dimension_numbers = #tpu.dot_dimension_numbers<[1], [0], [0], [1], [0, 0, 1, 1], [], []>} : vector<64x4xbf16>, vector<4x8xbf16>, vector<64x8xf32> -> vector<64x8xf32>
    %108 = arith.addf %101, %107 : vector<64x8xf32>
    %c19_111 = arith.constant 19 : index
    %c1_112 = arith.constant 1 : index
    %c0_113 = arith.constant 0 : index
    %109 = vector.load %arg10[%c19_111, %c1_112, %c0_113] : memref<36x9x4xf32, #tpu.memory_space<vmem>>, vector<8x8x4xf32>
    %110 = vector.shape_cast %109 : vector<8x8x4xf32> to vector<64x4xf32>
    %111 = arith.truncf %110 : vector<64x4xf32> to vector<64x4xbf16>
    %c2_114 = arith.constant 2 : index
    %c1_115 = arith.constant 1 : index
    %c0_116 = arith.constant 0 : index
    %c0_117 = arith.constant 0 : index
    %112 = vector.load %arg4[%c2_114, %c1_115, %c0_116, %c0_117] : memref<3x3x4x8xbf16, #tpu.memory_space<vmem>>, vector<1x1x4x8xbf16>
    %113 = vector.shape_cast %112 : vector<1x1x4x8xbf16> to vector<4x8xbf16>
    %cst_118 = arith.constant dense<0.000000e+00> : vector<64x8xf32>
    %114 = tpu.matmul %111, %113, %cst_118 {dimension_numbers = #tpu.dot_dimension_numbers<[1], [0], [0], [1], [0, 0, 1, 1], [], []>} : vector<64x4xbf16>, vector<4x8xbf16>, vector<64x8xf32> -> vector<64x8xf32>
    %115 = arith.addf %108, %114 : vector<64x8xf32>
    %c28_119 = arith.constant 28 : index
    %c1_120 = arith.constant 1 : index
    %c0_121 = arith.constant 0 : index
    %116 = vector.load %arg10[%c28_119, %c1_120, %c0_121] : memref<36x9x4xf32, #tpu.memory_space<vmem>>, vector<8x8x4xf32>
    %117 = vector.shape_cast %116 : vector<8x8x4xf32> to vector<64x4xf32>
    %118 = arith.truncf %117 : vector<64x4xf32> to vector<64x4xbf16>
    %c2_122 = arith.constant 2 : index
    %c2_123 = arith.constant 2 : index
    %c0_124 = arith.constant 0 : index
    %c0_125 = arith.constant 0 : index
    %119 = vector.load %arg4[%c2_122, %c2_123, %c0_124, %c0_125] : memref<3x3x4x8xbf16, #tpu.memory_space<vmem>>, vector<1x1x4x8xbf16>
    %120 = vector.shape_cast %119 : vector<1x1x4x8xbf16> to vector<4x8xbf16>
    %cst_126 = arith.constant dense<0.000000e+00> : vector<64x8xf32>
    %121 = tpu.matmul %118, %120, %cst_126 {dimension_numbers = #tpu.dot_dimension_numbers<[1], [0], [0], [1], [0, 0, 1, 1], [], []>} : vector<64x4xbf16>, vector<4x8xbf16>, vector<64x8xf32> -> vector<64x8xf32>
    %122 = arith.addf %115, %121 : vector<64x8xf32>
    %c0_127 = arith.constant 0 : index
    %c0_128 = arith.constant 0 : index
    %123 = vector.load %arg5[%c0_127, %c0_128] : memref<1x8xf32, #tpu.memory_space<vmem>>, vector<1x8xf32>
    %124 = vector.broadcast %123 : vector<1x8xf32> to vector<64x8xf32>
    %125 = arith.mulf %122, %124 : vector<64x8xf32>
    %c0_129 = arith.constant 0 : index
    %c0_130 = arith.constant 0 : index
    %126 = vector.load %arg6[%c0_129, %c0_130] : memref<1x8xf32, #tpu.memory_space<vmem>>, vector<1x8xf32>
    %127 = vector.broadcast %126 : vector<1x8xf32> to vector<64x8xf32>
    %128 = arith.addf %125, %127 : vector<64x8xf32>
    %cst_131 = arith.constant 0.000000e+00 : f32
    %129 = vector.broadcast %cst_131 : f32 to vector<64x8xf32>
    %130 = arith.maximumf %128, %129 : vector<64x8xf32>
    %131 = vector.shape_cast %130 : vector<64x8xf32> to vector<8x8x8xf32>
    %c1_132 = arith.constant 1 : index
    %c1_133 = arith.constant 1 : index
    %c0_134 = arith.constant 0 : index
    %132 = vector.load %arg11[%c1_132, %c1_133, %c0_134] : memref<10x10x8xf32, #tpu.memory_space<vmem>>, vector<8x8x8xf32>
    tpu.vector_store %arg11[%c1_132, %c1_133, %c0_134], %131 {strides = array<i32>} : memref<10x10x8xf32, #tpu.memory_space<vmem>>, vector<8x8x8xf32>,
    %cst_135 = arith.constant 0.000000e+00 : f32
    %133 = vector.broadcast %cst_135 : f32 to vector<64x8xf32>
    %c0_136 = arith.constant 0 : index
    %c0_137 = arith.constant 0 : index
    %c0_138 = arith.constant 0 : index
    %134 = vector.load %arg11[%c0_136, %c0_137, %c0_138] : memref<10x10x8xf32, #tpu.memory_space<vmem>>, vector<8x8x8xf32>
    %135 = vector.shape_cast %134 : vector<8x8x8xf32> to vector<64x8xf32>
    %136 = arith.truncf %135 : vector<64x8xf32> to vector<64x8xbf16>
    %c0_139 = arith.constant 0 : index
    %c0_140 = arith.constant 0 : index
    %c0_141 = arith.constant 0 : index
    %c0_142 = arith.constant 0 : index
    %137 = vector.load %arg7[%c0_139, %c0_140, %c0_141, %c0_142] : memref<3x3x8x8xbf16, #tpu.memory_space<vmem>>, vector<1x1x8x8xbf16>
    %138 = vector.shape_cast %137 : vector<1x1x8x8xbf16> to vector<8x8xbf16>
    %cst_143 = arith.constant dense<0.000000e+00> : vector<64x8xf32>
    %139 = tpu.matmul %136, %138, %cst_143 {dimension_numbers = #tpu.dot_dimension_numbers<[1], [0], [0], [1], [0, 0, 1, 1], [], []>} : vector<64x8xbf16>, vector<8x8xbf16>, vector<64x8xf32> -> vector<64x8xf32>
    %140 = arith.addf %133, %139 : vector<64x8xf32>
    %c0_144 = arith.constant 0 : index
    %c1_145 = arith.constant 1 : index
    %c0_146 = arith.constant 0 : index
    %141 = vector.load %arg11[%c0_144, %c1_145, %c0_146] : memref<10x10x8xf32, #tpu.memory_space<vmem>>, vector<8x8x8xf32>
    %142 = vector.shape_cast %141 : vector<8x8x8xf32> to vector<64x8xf32>
    %143 = arith.truncf %142 : vector<64x8xf32> to vector<64x8xbf16>
    %c0_147 = arith.constant 0 : index
    %c1_148 = arith.constant 1 : index
    %c0_149 = arith.constant 0 : index
    %c0_150 = arith.constant 0 : index
    %144 = vector.load %arg7[%c0_147, %c1_148, %c0_149, %c0_150] : memref<3x3x8x8xbf16, #tpu.memory_space<vmem>>, vector<1x1x8x8xbf16>
    %145 = vector.shape_cast %144 : vector<1x1x8x8xbf16> to vector<8x8xbf16>
    %cst_151 = arith.constant dense<0.000000e+00> : vector<64x8xf32>
    %146 = tpu.matmul %143, %145, %cst_151 {dimension_numbers = #tpu.dot_dimension_numbers<[1], [0], [0], [1], [0, 0, 1, 1], [], []>} : vector<64x8xbf16>, vector<8x8xbf16>, vector<64x8xf32> -> vector<64x8xf32>
    %147 = arith.addf %140, %146 : vector<64x8xf32>
    %c0_152 = arith.constant 0 : index
    %c2_153 = arith.constant 2 : index
    %c0_154 = arith.constant 0 : index
    %148 = vector.load %arg11[%c0_152, %c2_153, %c0_154] : memref<10x10x8xf32, #tpu.memory_space<vmem>>, vector<8x8x8xf32>
    %149 = vector.shape_cast %148 : vector<8x8x8xf32> to vector<64x8xf32>
    %150 = arith.truncf %149 : vector<64x8xf32> to vector<64x8xbf16>
    %c0_155 = arith.constant 0 : index
    %c2_156 = arith.constant 2 : index
    %c0_157 = arith.constant 0 : index
    %c0_158 = arith.constant 0 : index
    %151 = vector.load %arg7[%c0_155, %c2_156, %c0_157, %c0_158] : memref<3x3x8x8xbf16, #tpu.memory_space<vmem>>, vector<1x1x8x8xbf16>
    %152 = vector.shape_cast %151 : vector<1x1x8x8xbf16> to vector<8x8xbf16>
    %cst_159 = arith.constant dense<0.000000e+00> : vector<64x8xf32>
    %153 = tpu.matmul %150, %152, %cst_159 {dimension_numbers = #tpu.dot_dimension_numbers<[1], [0], [0], [1], [0, 0, 1, 1], [], []>} : vector<64x8xbf16>, vector<8x8xbf16>, vector<64x8xf32> -> vector<64x8xf32>
    %154 = arith.addf %147, %153 : vector<64x8xf32>
    %c1_160 = arith.constant 1 : index
    %c0_161 = arith.constant 0 : index
    %c0_162 = arith.constant 0 : index
    %155 = vector.load %arg11[%c1_160, %c0_161, %c0_162] : memref<10x10x8xf32, #tpu.memory_space<vmem>>, vector<8x8x8xf32>
    %156 = vector.shape_cast %155 : vector<8x8x8xf32> to vector<64x8xf32>
    %157 = arith.truncf %156 : vector<64x8xf32> to vector<64x8xbf16>
    %c1_163 = arith.constant 1 : index
    %c0_164 = arith.constant 0 : index
    %c0_165 = arith.constant 0 : index
    %c0_166 = arith.constant 0 : index
    %158 = vector.load %arg7[%c1_163, %c0_164, %c0_165, %c0_166] : memref<3x3x8x8xbf16, #tpu.memory_space<vmem>>, vector<1x1x8x8xbf16>
    %159 = vector.shape_cast %158 : vector<1x1x8x8xbf16> to vector<8x8xbf16>
    %cst_167 = arith.constant dense<0.000000e+00> : vector<64x8xf32>
    %160 = tpu.matmul %157, %159, %cst_167 {dimension_numbers = #tpu.dot_dimension_numbers<[1], [0], [0], [1], [0, 0, 1, 1], [], []>} : vector<64x8xbf16>, vector<8x8xbf16>, vector<64x8xf32> -> vector<64x8xf32>
    %161 = arith.addf %154, %160 : vector<64x8xf32>
    %c1_168 = arith.constant 1 : index
    %c1_169 = arith.constant 1 : index
    %c0_170 = arith.constant 0 : index
    %162 = vector.load %arg11[%c1_168, %c1_169, %c0_170] : memref<10x10x8xf32, #tpu.memory_space<vmem>>, vector<8x8x8xf32>
    %163 = vector.shape_cast %162 : vector<8x8x8xf32> to vector<64x8xf32>
    %164 = arith.truncf %163 : vector<64x8xf32> to vector<64x8xbf16>
    %c1_171 = arith.constant 1 : index
    %c1_172 = arith.constant 1 : index
    %c0_173 = arith.constant 0 : index
    %c0_174 = arith.constant 0 : index
    %165 = vector.load %arg7[%c1_171, %c1_172, %c0_173, %c0_174] : memref<3x3x8x8xbf16, #tpu.memory_space<vmem>>, vector<1x1x8x8xbf16>
    %166 = vector.shape_cast %165 : vector<1x1x8x8xbf16> to vector<8x8xbf16>
    %cst_175 = arith.constant dense<0.000000e+00> : vector<64x8xf32>
    %167 = tpu.matmul %164, %166, %cst_175 {dimension_numbers = #tpu.dot_dimension_numbers<[1], [0], [0], [1], [0, 0, 1, 1], [], []>} : vector<64x8xbf16>, vector<8x8xbf16>, vector<64x8xf32> -> vector<64x8xf32>
    %168 = arith.addf %161, %167 : vector<64x8xf32>
    %c1_176 = arith.constant 1 : index
    %c2_177 = arith.constant 2 : index
    %c0_178 = arith.constant 0 : index
    %169 = vector.load %arg11[%c1_176, %c2_177, %c0_178] : memref<10x10x8xf32, #tpu.memory_space<vmem>>, vector<8x8x8xf32>
    %170 = vector.shape_cast %169 : vector<8x8x8xf32> to vector<64x8xf32>
    %171 = arith.truncf %170 : vector<64x8xf32> to vector<64x8xbf16>
    %c1_179 = arith.constant 1 : index
    %c2_180 = arith.constant 2 : index
    %c0_181 = arith.constant 0 : index
    %c0_182 = arith.constant 0 : index
    %172 = vector.load %arg7[%c1_179, %c2_180, %c0_181, %c0_182] : memref<3x3x8x8xbf16, #tpu.memory_space<vmem>>, vector<1x1x8x8xbf16>
    %173 = vector.shape_cast %172 : vector<1x1x8x8xbf16> to vector<8x8xbf16>
    %cst_183 = arith.constant dense<0.000000e+00> : vector<64x8xf32>
    %174 = tpu.matmul %171, %173, %cst_183 {dimension_numbers = #tpu.dot_dimension_numbers<[1], [0], [0], [1], [0, 0, 1, 1], [], []>} : vector<64x8xbf16>, vector<8x8xbf16>, vector<64x8xf32> -> vector<64x8xf32>
    %175 = arith.addf %168, %174 : vector<64x8xf32>
    %c2_184 = arith.constant 2 : index
    %c0_185 = arith.constant 0 : index
    %c0_186 = arith.constant 0 : index
    %176 = vector.load %arg11[%c2_184, %c0_185, %c0_186] : memref<10x10x8xf32, #tpu.memory_space<vmem>>, vector<8x8x8xf32>
    %177 = vector.shape_cast %176 : vector<8x8x8xf32> to vector<64x8xf32>
    %178 = arith.truncf %177 : vector<64x8xf32> to vector<64x8xbf16>
    %c2_187 = arith.constant 2 : index
    %c0_188 = arith.constant 0 : index
    %c0_189 = arith.constant 0 : index
    %c0_190 = arith.constant 0 : index
    %179 = vector.load %arg7[%c2_187, %c0_188, %c0_189, %c0_190] : memref<3x3x8x8xbf16, #tpu.memory_space<vmem>>, vector<1x1x8x8xbf16>
    %180 = vector.shape_cast %179 : vector<1x1x8x8xbf16> to vector<8x8xbf16>
    %cst_191 = arith.constant dense<0.000000e+00> : vector<64x8xf32>
    %181 = tpu.matmul %178, %180, %cst_191 {dimension_numbers = #tpu.dot_dimension_numbers<[1], [0], [0], [1], [0, 0, 1, 1], [], []>} : vector<64x8xbf16>, vector<8x8xbf16>, vector<64x8xf32> -> vector<64x8xf32>
    %182 = arith.addf %175, %181 : vector<64x8xf32>
    %c2_192 = arith.constant 2 : index
    %c1_193 = arith.constant 1 : index
    %c0_194 = arith.constant 0 : index
    %183 = vector.load %arg11[%c2_192, %c1_193, %c0_194] : memref<10x10x8xf32, #tpu.memory_space<vmem>>, vector<8x8x8xf32>
    %184 = vector.shape_cast %183 : vector<8x8x8xf32> to vector<64x8xf32>
    %185 = arith.truncf %184 : vector<64x8xf32> to vector<64x8xbf16>
    %c2_195 = arith.constant 2 : index
    %c1_196 = arith.constant 1 : index
    %c0_197 = arith.constant 0 : index
    %c0_198 = arith.constant 0 : index
    %186 = vector.load %arg7[%c2_195, %c1_196, %c0_197, %c0_198] : memref<3x3x8x8xbf16, #tpu.memory_space<vmem>>, vector<1x1x8x8xbf16>
    %187 = vector.shape_cast %186 : vector<1x1x8x8xbf16> to vector<8x8xbf16>
    %cst_199 = arith.constant dense<0.000000e+00> : vector<64x8xf32>
    %188 = tpu.matmul %185, %187, %cst_199 {dimension_numbers = #tpu.dot_dimension_numbers<[1], [0], [0], [1], [0, 0, 1, 1], [], []>} : vector<64x8xbf16>, vector<8x8xbf16>, vector<64x8xf32> -> vector<64x8xf32>
    %189 = arith.addf %182, %188 : vector<64x8xf32>
    %c2_200 = arith.constant 2 : index
    %c2_201 = arith.constant 2 : index
    %c0_202 = arith.constant 0 : index
    %190 = vector.load %arg11[%c2_200, %c2_201, %c0_202] : memref<10x10x8xf32, #tpu.memory_space<vmem>>, vector<8x8x8xf32>
    %191 = vector.shape_cast %190 : vector<8x8x8xf32> to vector<64x8xf32>
    %192 = arith.truncf %191 : vector<64x8xf32> to vector<64x8xbf16>
    %c2_203 = arith.constant 2 : index
    %c2_204 = arith.constant 2 : index
    %c0_205 = arith.constant 0 : index
    %c0_206 = arith.constant 0 : index
    %193 = vector.load %arg7[%c2_203, %c2_204, %c0_205, %c0_206] : memref<3x3x8x8xbf16, #tpu.memory_space<vmem>>, vector<1x1x8x8xbf16>
    %194 = vector.shape_cast %193 : vector<1x1x8x8xbf16> to vector<8x8xbf16>
    %cst_207 = arith.constant dense<0.000000e+00> : vector<64x8xf32>
    %195 = tpu.matmul %192, %194, %cst_207 {dimension_numbers = #tpu.dot_dimension_numbers<[1], [0], [0], [1], [0, 0, 1, 1], [], []>} : vector<64x8xbf16>, vector<8x8xbf16>, vector<64x8xf32> -> vector<64x8xf32>
    %196 = arith.addf %189, %195 : vector<64x8xf32>
    %c0_208 = arith.constant 0 : index
    %c0_209 = arith.constant 0 : index
    %c0_210 = arith.constant 0 : index
    %c0_211 = arith.constant 0 : index
    %197 = vector.load %arg1[%c0_208, %c0_209, %c0_210, %c0_211] : memref<1x32x8x4xf32, #tpu.memory_space<vmem>>, vector<1x8x8x4xf32>
    %198 = vector.shape_cast %197 : vector<1x8x8x4xf32> to vector<8x8x4xf32>
    %199 = vector.shape_cast %198 : vector<8x8x4xf32> to vector<64x4xf32>
    %200 = arith.truncf %199 : vector<64x4xf32> to vector<64x4xbf16>
    %c0_212 = arith.constant 0 : index
    %c0_213 = arith.constant 0 : index
    %201 = vector.load %arg8[%c0_212, %c0_213] : memref<4x8xbf16, #tpu.memory_space<vmem>>, vector<4x8xbf16>
    %cst_214 = arith.constant dense<0.000000e+00> : vector<64x8xf32>
    %202 = tpu.matmul %200, %201, %cst_214 {dimension_numbers = #tpu.dot_dimension_numbers<[1], [0], [0], [1], [0, 0, 1, 1], [], []>} : vector<64x4xbf16>, vector<4x8xbf16>, vector<64x8xf32> -> vector<64x8xf32>
    %203 = arith.addf %196, %202 : vector<64x8xf32>
    %204 = vector.shape_cast %203 : vector<64x8xf32> to vector<8x8x8xf32>
    %c0_215 = arith.constant 0 : index
    %c0_216 = arith.constant 0 : index
    %c0_217 = arith.constant 0 : index
    %c0_218 = arith.constant 0 : index
    %205 = vector.load %arg9[%c0_215, %c0_216, %c0_217, %c0_218] : memref<1x8x8x8xf32, #tpu.memory_space<vmem>>, vector<1x8x8x8xf32>
    %206 = vector.shape_cast %205 : vector<1x8x8x8xf32> to vector<8x8x8xf32>
    %207 = vector.shape_cast %204 : vector<8x8x8xf32> to vector<1x8x8x8xf32>
    tpu.vector_store %arg9[%c0_215, %c0_216, %c0_217, %c0_218], %207 {strides = array<i32>} : memref<1x8x8x8xf32, #tpu.memory_space<vmem>>, vector<1x8x8x8xf32>,
    return
  }
  func.func @transform_0(%arg0: i32) -> (i32, i32, i32, i32) {
    %c0_i32 = arith.constant 0 : i32
    %c0_i32_0 = arith.constant 0 : i32
    %c0_i32_1 = arith.constant 0 : i32
    %c0_i32_2 = arith.constant 0 : i32
    return %arg0, %c0_i32, %c0_i32_0, %c0_i32_1 : i32, i32, i32, i32
  }
  func.func @transform_1(%arg0: i32) -> (i32, i32) {
    %c0_i32 = arith.constant 0 : i32
    %c0_i32_0 = arith.constant 0 : i32
    %c0_i32_1 = arith.constant 0 : i32
    return %c0_i32, %c0_i32_0 : i32, i32
  }
  func.func @transform_2(%arg0: i32) -> (i32, i32) {
    %c0_i32 = arith.constant 0 : i32
    %c0_i32_0 = arith.constant 0 : i32
    %c0_i32_1 = arith.constant 0 : i32
    return %c0_i32, %c0_i32_0 : i32, i32
  }
  func.func @transform_3(%arg0: i32) -> (i32, i32, i32, i32) {
    %c0_i32 = arith.constant 0 : i32
    %c0_i32_0 = arith.constant 0 : i32
    %c0_i32_1 = arith.constant 0 : i32
    %c0_i32_2 = arith.constant 0 : i32
    %c0_i32_3 = arith.constant 0 : i32
    return %c0_i32, %c0_i32_0, %c0_i32_1, %c0_i32_2 : i32, i32, i32, i32
  }
  func.func @transform_4(%arg0: i32) -> (i32, i32) {
    %c0_i32 = arith.constant 0 : i32
    %c0_i32_0 = arith.constant 0 : i32
    %c0_i32_1 = arith.constant 0 : i32
    return %c0_i32, %c0_i32_0 : i32, i32
  }
  func.func @transform_5(%arg0: i32) -> (i32, i32) {
    %c0_i32 = arith.constant 0 : i32
    %c0_i32_0 = arith.constant 0 : i32
    %c0_i32_1 = arith.constant 0 : i32
    return %c0_i32, %c0_i32_0 : i32, i32
  }
  func.func @transform_6(%arg0: i32) -> (i32, i32, i32, i32) {
    %c0_i32 = arith.constant 0 : i32
    %c0_i32_0 = arith.constant 0 : i32
    %c0_i32_1 = arith.constant 0 : i32
    %c0_i32_2 = arith.constant 0 : i32
    %c0_i32_3 = arith.constant 0 : i32
    return %c0_i32, %c0_i32_0, %c0_i32_1, %c0_i32_2 : i32, i32, i32, i32
  }
  func.func @transform_7(%arg0: i32) -> (i32, i32) {
    %c0_i32 = arith.constant 0 : i32
    %c0_i32_0 = arith.constant 0 : i32
    %c0_i32_1 = arith.constant 0 : i32
    return %c0_i32, %c0_i32_0 : i32, i32
  }
  func.func @transform_8(%arg0: i32) -> (i32, i32, i32, i32) {
    %c0_i32 = arith.constant 0 : i32
    %c0_i32_0 = arith.constant 0 : i32
    %c0_i32_1 = arith.constant 0 : i32
    %c0_i32_2 = arith.constant 0 : i32
    return %arg0, %c0_i32, %c0_i32_0, %c0_i32_1 : i32, i32, i32, i32
  }
}

</mosaic_0001>

<llo_original>
// kernel: tpu_custom_call.1
$region0: #{tpu_custom_call.1}
  #allocation0 [shape = 'u32[]', space=smem, size = 0x4, offset = 0x4, fixed_abs, tag = 'smem constant byte address 0x4 - core index']
  #allocation1 [shape = 'u32[144,128]{1,0:T(1,128)}', space=vmem, size = 0x12000, scoped, tag = 'internal scratch']
  #allocation2 [shape = 'f32[36,9,4]{2,1,0:T(8,128)}', space=vmem, size = 0x48000, scoped, tag = 'scratch operand']
  #allocation3 [shape = 'f32[10,10,8]{2,1,0:T(8,128)}', space=vmem, size = 0x14000, scoped, tag = 'scratch operand']
  %s0 = inlined_call_operand.vmem [shape: f32[2,32,8,4], index: 0, kind: input, shape index: {}]
  %s1 = inlined_call_operand.vmem [shape: f32[1,4], index: 1, kind: input, shape index: {}]
  %s2 = inlined_call_operand.vmem [shape: f32[1,4], index: 2, kind: input, shape index: {}]
  %s3 = inlined_call_operand.vmem [shape: bf16[3,3,4,8], index: 3, kind: input, shape index: {}]
  %s4 = inlined_call_operand.vmem [shape: f32[1,8], index: 4, kind: input, shape index: {}]
  %s5 = inlined_call_operand.vmem [shape: f32[1,8], index: 5, kind: input, shape index: {}]
  %s6 = inlined_call_operand.vmem [shape: bf16[3,3,8,8], index: 6, kind: input, shape index: {}]
  %s7 = inlined_call_operand.vmem [shape: bf16[4,8], index: 7, kind: input, shape index: {}]
  %s8 = inlined_call_operand.hbm [shape: f32[2,8,8,8], index: 8, kind: output, shape index: {}]
  %s9 = sld [smem:[#allocation0]]
  $region65: #{tpu_custom_call.1} parent=0
    _
  %s11 = ssub.s32 1, %s9
  %s12 = scalar_select 0, %s11, %s9
  $region1: #{tpu_custom_call.1} parent=0
    #allocation4 [shape = 'u8[65536]{0}', space=vmem, size = 0x10000, scoped, tag = 'output window, operand 0']
    #allocation5 [shape = 's32[2]{0}', space=sflag, size = 0x8, scoped, tag = 'scoped memory for tpu_custom_call.1']
    %13 = vsyncpa [#allocation5], 0
    %s14 = scalar_lea.sflag [#allocation5], 1
    %15 = vsyncpa %s14, 0
    loop: start=0, step=1, limit=4
    $region2: #{tpu_custom_call.1} parent=1 // loop_pre_header
      _
    $region3: #{tpu_custom_call.1} parent=1 // loop_header
      %s17 = sphi 0, %s21
      %p18 = scmp.ge.s32.totalorder %s17, 4
      %s27 = sphi 0, %s29
      %s30 = sphi 0, %s27
      %s31 = sphi 0, %s30
      %s47 = sphi 0, %s31
      %s51 = sphi 0, %s51
      %s53 = sphi 0, %s51
      %s54 = sphi 0, %s53
      %s68 = sphi 0, %s54
      %s72 = sphi 0, %s72
      %s74 = sphi 0, %s72
      %s75 = sphi 0, %s74
      %s89 = sphi 0, %s75
      %s93 = sphi 0, %s93
      %s95 = sphi 0, %s93
      %s96 = sphi 0, %s95
      %s110 = sphi 0, %s96
      %s114 = sphi 0, %s114
      %s116 = sphi 0, %s114
      %s117 = sphi 0, %s116
      %s131 = sphi 0, %s117
      %s135 = sphi 0, %s135
      %s137 = sphi 0, %s135
      %s138 = sphi 0, %s137
      %s152 = sphi 0, %s138
      %s156 = sphi 0, %s156
      %s158 = sphi 0, %s156
      %s159 = sphi 0, %s158
      %s173 = sphi 0, %s159
      %s177 = sphi 0, %s177
      %s179 = sphi 0, %s177
      %s180 = sphi 0, %s179
      %s194 = sphi 0, %s180
      %s200 = sphi 0, %s202
      %s203 = sphi 0, %s200
      %s204 = sphi 0, %s203
      %s220 = sphi 0, %s204
    $region4: #{tpu_custom_call.1} parent=1 // loop_header_branch
      %20 = sbr.rel (%p18) target = $region8
    $region5: #{tpu_custom_call.1} parent=1 // loop_body
      %s22 = ssub.s32 %s17, 1
      %s23 = ssub.s32 %s17, 2
      %s24 = sadd.s32 %s17, 1
      %s25 = ssub.s32 %s17, %s24
      %p26 = scmp.eq.s32.totalorder %s25, 0
      %s28 = sadd.s32 %s27, 1
      %s29 = scalar_select %p26, %s27, %s28
      %p32 = pneg %p26
      %p33 = scmp.eq.s32.totalorder %s17, 1
      %p34 = por %p32, %p33
      %p35 = scmp.ne.s32.totalorder %s27, %s30
      %p36 = scmp.eq.s32.totalorder %s17, 0
      %p37 = por %p35, %p36
      %p38 = scmp.ne.s32.totalorder %s27, %s30
      %p39 = scmp.eq.s32.totalorder %s22, 1
      %p40 = por %p38, %p39
      %p41 = scmp.ne.s32.totalorder %s30, %s31
      %p42 = scmp.eq.s32.totalorder %s22, 0
      %p43 = por %p41, %p42
      %p44 = scmp.ne.s32.totalorder %s30, %s31
      %p45 = scmp.eq.s32.totalorder %s23, 1
      %p46 = por %p44, %p45
      %p48 = scmp.ne.s32.totalorder %s31, %s47
      %p49 = scmp.eq.s32.totalorder %s23, 0
      %p50 = por %p48, %p49
      %s52 = sadd.s32 %s51, 1
      %p55 = scmp.eq.s32.totalorder %s17, 1
      %p56 = scmp.ne.s32.totalorder %s51, %s53
      %p57 = scmp.eq.s32.totalorder %s17, 0
      %p58 = por %p56, %p57
      %p59 = scmp.ne.s32.totalorder %s51, %s53
      %p60 = scmp.eq.s32.totalorder %s22, 1
      %p61 = por %p59, %p60
      %p62 = scmp.ne.s32.totalorder %s53, %s54
      %p63 = scmp.eq.s32.totalorder %s22, 0
      %p64 = por %p62, %p63
      %p65 = scmp.ne.s32.totalorder %s53, %s54
      %p66 = scmp.eq.s32.totalorder %s23, 1
      %p67 = por %p65, %p66
      %p69 = scmp.ne.s32.totalorder %s54, %s68
      %p70 = scmp.eq.s32.totalorder %s23, 0
      %p71 = por %p69, %p70
      %s73 = sadd.s32 %s72, 1
      %p76 = scmp.eq.s32.totalorder %s17, 1
      %p77 = scmp.ne.s32.totalorder %s72, %s74
      %p78 = scmp.eq.s32.totalorder %s17, 0
      %p79 = por %p77, %p78
      %p80 = scmp.ne.s32.totalorder %s72, %s74
      %p81 = scmp.eq.s32.totalorder %s22, 1
      %p82 = por %p80, %p81
      %p83 = scmp.ne.s32.totalorder %s74, %s75
      %p84 = scmp.eq.s32.totalorder %s22, 0
      %p85 = por %p83, %p84
      %p86 = scmp.ne.s32.totalorder %s74, %s75
      %p87 = scmp.eq.s32.totalorder %s23, 1
      %p88 = por %p86, %p87
      %p90 = scmp.ne.s32.totalorder %s75, %s89
      %p91 = scmp.eq.s32.totalorder %s23, 0
      %p92 = por %p90, %p91
      %s94 = sadd.s32 %s93, 1
      %p97 = scmp.eq.s32.totalorder %s17, 1
      %p98 = scmp.ne.s32.totalorder %s93, %s95
      %p99 = scmp.eq.s32.totalorder %s17, 0
      %p100 = por %p98, %p99
      %p101 = scmp.ne.s32.totalorder %s93, %s95
      %p102 = scmp.eq.s32.totalorder %s22, 1
      %p103 = por %p101, %p102
      %p104 = scmp.ne.s32.totalorder %s95, %s96
      %p105 = scmp.eq.s32.totalorder %s22, 0
      %p106 = por %p104, %p105
      %p107 = scmp.ne.s32.totalorder %s95, %s96
      %p108 = scmp.eq.s32.totalorder %s23, 1
      %p109 = por %p107, %p108
      %p111 = scmp.ne.s32.totalorder %s96, %s110
      %p112 = scmp.eq.s32.totalorder %s23, 0
      %p113 = por %p111, %p112
      %s115 = sadd.s32 %s114, 1
      %p118 = scmp.eq.s32.totalorder %s17, 1
      %p119 = scmp.ne.s32.totalorder %s114, %s116
      %p120 = scmp.eq.s32.totalorder %s17, 0
      %p121 = por %p119, %p120
      %p122 = scmp.ne.s32.totalorder %s114, %s116
      %p123 = scmp.eq.s32.totalorder %s22, 1
      %p124 = por %p122, %p123
      %p125 = scmp.ne.s32.totalorder %s116, %s117
      %p126 = scmp.eq.s32.totalorder %s22, 0
      %p127 = por %p125, %p126
      %p128 = scmp.ne.s32.totalorder %s116, %s117
      %p129 = scmp.eq.s32.totalorder %s23, 1
      %p130 = por %p128, %p129
      %p132 = scmp.ne.s32.totalorder %s117, %s131
      %p133 = scmp.eq.s32.totalorder %s23, 0
      %p134 = por %p132, %p133
      %s136 = sadd.s32 %s135, 1
      %p139 = scmp.eq.s32.totalorder %s17, 1
      %p140 = scmp.ne.s32.totalorder %s135, %s137
      %p141 = scmp.eq.s32.totalorder %s17, 0
      %p142 = por %p140, %p141
      %p143 = scmp.ne.s32.totalorder %s135, %s137
      %p144 = scmp.eq.s32.totalorder %s22, 1
      %p145 = por %p143, %p144
      %p146 = scmp.ne.s32.totalorder %s137, %s138
      %p147 = scmp.eq.s32.totalorder %s22, 0
      %p148 = por %p146, %p147
      %p149 = scmp.ne.s32.totalorder %s137, %s138
      %p150 = scmp.eq.s32.totalorder %s23, 1
      %p151 = por %p149, %p150
      %p153 = scmp.ne.s32.totalorder %s138, %s152
      %p154 = scmp.eq.s32.totalorder %s23, 0
      %p155 = por %p153, %p154
      %s157 = sadd.s32 %s156, 1
      %p160 = scmp.eq.s32.totalorder %s17, 1
      %p161 = scmp.ne.s32.totalorder %s156, %s158
      %p162 = scmp.eq.s32.totalorder %s17, 0
      %p163 = por %p161, %p162
      %p164 = scmp.ne.s32.totalorder %s156, %s158
      %p165 = scmp.eq.s32.totalorder %s22, 1
      %p166 = por %p164, %p165
      %p167 = scmp.ne.s32.totalorder %s158, %s159
      %p168 = scmp.eq.s32.totalorder %s22, 0
      %p169 = por %p167, %p168
      %p170 = scmp.ne.s32.totalorder %s158, %s159
      %p171 = scmp.eq.s32.totalorder %s23, 1
      %p172 = por %p170, %p171
      %p174 = scmp.ne.s32.totalorder %s159, %s173
      %p175 = scmp.eq.s32.totalorder %s23, 0
      %p176 = por %p174, %p175
      %s178 = sadd.s32 %s177, 1
      %p181 = scmp.eq.s32.totalorder %s17, 1
      %p182 = scmp.ne.s32.totalorder %s177, %s179
      %p183 = scmp.eq.s32.totalorder %s17, 0
      %p184 = por %p182, %p183
      %p185 = scmp.ne.s32.totalorder %s177, %s179
      %p186 = scmp.eq.s32.totalorder %s22, 1
      %p187 = por %p185, %p186
      %p188 = scmp.ne.s32.totalorder %s179, %s180
      %p189 = scmp.eq.s32.totalorder %s22, 0
      %p190 = por %p188, %p189
      %p191 = scmp.ne.s32.totalorder %s179, %s180
      %p192 = scmp.eq.s32.totalorder %s23, 1
      %p193 = por %p191, %p192
      %p195 = scmp.ne.s32.totalorder %s180, %s194
      %p196 = scmp.eq.s32.totalorder %s23, 0
      %p197 = por %p195, %p196
      %s198 = ssub.s32 %s17, %s24
      %p199 = scmp.eq.s32.totalorder %s198, 0
      %s201 = sadd.s32 %s200, 1
      %s202 = scalar_select %p199, %s200, %s201
      %p205 = pneg %p199
      %p206 = scmp.eq.s32.totalorder %s17, 1
      %p207 = por %p205, %p206
      %p208 = scmp.ne.s32.totalorder %s200, %s203
      %p209 = scmp.eq.s32.totalorder %s17, 0
      %p210 = por %p208, %p209
      %p211 = scmp.ne.s32.totalorder %s200, %s203
      %p212 = scmp.eq.s32.totalorder %s22, 1
      %p213 = por %p211, %p212
      %p214 = scmp.ne.s32.totalorder %s203, %s204
      %p215 = scmp.eq.s32.totalorder %s22, 0
      %p216 = por %p214, %p215
      %p217 = scmp.ne.s32.totalorder %s203, %s204
      %p218 = scmp.eq.s32.totalorder %s23, 1
      %p219 = por %p217, %p218
      %p221 = scmp.ne.s32.totalorder %s204, %s220
      %p222 = scmp.eq.s32.totalorder %s23, 0
      %p223 = por %p221, %p222
      %p224 = scmp.le.s32.totalorder 1, %s17
      %p225 = scmp.lt.s32.totalorder %s17, 3
      %p226 = pnand %p224, %p225
      %p227 = pneg %p226
      // Predicated region
      $region9: #{tpu_custom_call.1} parent=5 // pred_check
        _
      $region10: #{tpu_custom_call.1} parent=5 // pred_check_branch
        %229 = sbr.rel (%p226) target = $region12
      $region11: #{tpu_custom_call.1} parent=5 // pred_region
        %s230 = ssub.s32 %s17, 1
        // Predicated region
        $region13: #{tpu_custom_call.1} parent=11 // pred_check
          %p231 = pneg %p64
        $region14: #{tpu_custom_call.1} parent=11 // pred_check_branch
          %233 = sbr.rel (%p231) target = $region16
        $region15: #{tpu_custom_call.1} parent=11 // pred_region
          _
        $region16: #{tpu_custom_call.1} parent=11 // pred_fallthru
          _
        // Predicated region
        $region17: #{tpu_custom_call.1} parent=11 // pred_check
          %p234 = pneg %p85
        $region18: #{tpu_custom_call.1} parent=11 // pred_check_branch
          %236 = sbr.rel (%p234) target = $region20
        $region19: #{tpu_custom_call.1} parent=11 // pred_region
          _
        $region20: #{tpu_custom_call.1} parent=11 // pred_fallthru
          _
        // Predicated region
        $region21: #{tpu_custom_call.1} parent=11 // pred_check
          %p237 = pneg %p106
        $region22: #{tpu_custom_call.1} parent=11 // pred_check_branch
          %239 = sbr.rel (%p237) target = $region24
        $region23: #{tpu_custom_call.1} parent=11 // pred_region
          _
        $region24: #{tpu_custom_call.1} parent=11 // pred_fallthru
          _
        // Predicated region
        $region25: #{tpu_custom_call.1} parent=11 // pred_check
          %p240 = pneg %p127
        $region26: #{tpu_custom_call.1} parent=11 // pred_check_branch
          %242 = sbr.rel (%p240) target = $region28
        $region27: #{tpu_custom_call.1} parent=11 // pred_region
          _
        $region28: #{tpu_custom_call.1} parent=11 // pred_fallthru
          _
        // Predicated region
        $region29: #{tpu_custom_call.1} parent=11 // pred_check
          %p243 = pneg %p148
        $region30: #{tpu_custom_call.1} parent=11 // pred_check_branch
          %245 = sbr.rel (%p243) target = $region32
        $region31: #{tpu_custom_call.1} parent=11 // pred_region
          _
        $region32: #{tpu_custom_call.1} parent=11 // pred_fallthru
          _
        // Predicated region
        $region33: #{tpu_custom_call.1} parent=11 // pred_check
          %p246 = pneg %p169
        $region34: #{tpu_custom_call.1} parent=11 // pred_check_branch
          %248 = sbr.rel (%p246) target = $region36
        $region35: #{tpu_custom_call.1} parent=11 // pred_region
          _
        $region36: #{tpu_custom_call.1} parent=11 // pred_fallthru
          _
        // Predicated region
        $region37: #{tpu_custom_call.1} parent=11 // pred_check
          %p249 = pneg %p190
        $region38: #{tpu_custom_call.1} parent=11 // pred_check_branch
          %251 = sbr.rel (%p249) target = $region40
        $region39: #{tpu_custom_call.1} parent=11 // pred_region
          _
        $region40: #{tpu_custom_call.1} parent=11 // pred_fallthru
          _
      $region12: #{tpu_custom_call.1} parent=5 // pred_fallthru
        _
      %p252 = scmp.lt.s32.totalorder %s17, 2
      // Predicated region
      $region41: #{tpu_custom_call.1} parent=5 // pred_check
        %p253 = pneg %p252
      $region42: #{tpu_custom_call.1} parent=5 // pred_check_branch
        %255 = sbr.rel (%p253) target = $region44
      $region43: #{tpu_custom_call.1} parent=5 // pred_region
        // Predicated region
        $region45: #{tpu_custom_call.1} parent=43 // pred_check
          %p256 = pneg %p37
        $region46: #{tpu_custom_call.1} parent=43 // pred_check_branch
          %258 = sbr.rel (%p256) target = $region48
        $region47: #{tpu_custom_call.1} parent=43 // pred_region
          %p259 = scmp.lt.s32.totalorder %s17, 1
          %s260 = scalar_select %p259, %s17, 1
          %s261 = smul.addr %s260, 32
          %s262 = smul.addr %s261, 8
          %s263 = scalar_lea.vmem %s0, %s262
        $region48: #{tpu_custom_call.1} parent=43 // pred_fallthru
          _
      $region44: #{tpu_custom_call.1} parent=5 // pred_fallthru
        _
      %p264 = scmp.le.s32.totalorder 1, %s17
      %p265 = scmp.lt.s32.totalorder %s17, 3
      %p266 = pnand %p264, %p265
      %p267 = pneg %p266
      // Predicated region
      $region49: #{tpu_custom_call.1} parent=5 // pred_check
        _
      $region50: #{tpu_custom_call.1} parent=5 // pred_check_branch
        %269 = sbr.rel (%p266) target = $region52
      $region51: #{tpu_custom_call.1} parent=5 // pred_region
        %s270 = ssub.s32 %s17, 1
        %p271 = scmp.lt.s32.totalorder %s22, 1
        %s272 = scalar_select %p271, %s22, 1
        %s273 = smul.addr %s272, 32
        %s274 = smul.addr %s273, 8
        %s275 = scalar_lea.vmem %s0, %s274
        %p276 = pneg %p43
        %p277 = pneg %p40
        %p278 = pneg %p64
        %p279 = pneg %p61
        %p280 = pneg %p85
        %p281 = pneg %p82
        %p282 = pneg %p106
        %p283 = pneg %p103
        %p284 = pneg %p127
        %p285 = pneg %p124
        %p286 = pneg %p148
        %p287 = pneg %p145
        %p288 = pneg %p169
        %p289 = pneg %p166
        %p290 = pneg %p190
        %p291 = pneg %p187
        %p292 = pneg %p216
        %p293 = pneg %p213
        %s294 = sand.u32 %s203, 1
        %s295 = scalar_lea.sflag [#allocation5], %s294
        %s296 = sand.u32 %s203, 1
        %s297 = smul.addr %s296, 64
        %s298 = scalar_lea.vmem [#allocation4], %s297
        %p299 = scmp.lt.s32.totalorder %s22, 1
        %s300 = scalar_select %p299, %s22, 1
        %s301 = smul.addr %s300, 32
        %s302 = smul.addr %s301, 8
        %s303 = scalar_lea.vmem %s0, %s302
        %v305 = vld [vmem:[%s1] sm:$0x1]
        %v306 = vld [vmem:[%s2] sm:$0x1]
        %vm307 = vcmask 24576
        %308 = vst.msk [vmem:[#allocation2] sm:$0x1] %vm307, 0.0
        %309 = vst.msk [vmem:[#allocation2 + $0x10] sm:$0x1] %vm307, 0.0
        %310 = vst.msk [vmem:[#allocation2 + $0x20] sm:$0x1] %vm307, 0.0
        %311 = vst.msk [vmem:[#allocation2 + $0x30] sm:$0x1] %vm307, 0.0
        %312 = vst.msk [vmem:[#allocation2 + $0x40] sm:$0x1] %vm307, 0.0
        %313 = vst.msk [vmem:[#allocation2 + $0x50] sm:$0x1] %vm307, 0.0
        %314 = vst.msk [vmem:[#allocation2 + $0x60] sm:$0x1] %vm307, 0.0
        %315 = vst.msk [vmem:[#allocation2 + $0x70] sm:$0x1] %vm307, 0.0
        %316 = vst.msk [vmem:[#allocation2 + $0x80] sm:$0x1] %vm307, 0.0
        %317 = vst.msk [vmem:[#allocation2 + $0x90] sm:$0x1] %vm307, 0.0
        %318 = vst.msk [vmem:[#allocation2 + $0xa0] sm:$0x1] %vm307, 0.0
        %319 = vst.msk [vmem:[#allocation2 + $0xb0] sm:$0x1] %vm307, 0.0
        %320 = vst.msk [vmem:[#allocation2 + $0xc0] sm:$0x1] %vm307, 0.0
        %321 = vst.msk [vmem:[#allocation2 + $0xd0] sm:$0x1] %vm307, 0.0
        %322 = vst.msk [vmem:[#allocation2 + $0xe0] sm:$0x1] %vm307, 0.0
        %323 = vst.msk [vmem:[#allocation2 + $0xf0] sm:$0x1] %vm307, 0.0
        %324 = vst.msk [vmem:[#allocation2 + $0x100] sm:$0x1] %vm307, 0.0
        %325 = vst.msk [vmem:[#allocation2 + $0x110] sm:$0x1] %vm307, 0.0
        %326 = vst.msk [vmem:[#allocation2 + $0x120] sm:$0x1] %vm307, 0.0
        %327 = vst.msk [vmem:[#allocation2 + $0x130] sm:$0x1] %vm307, 0.0
        %328 = vst.msk [vmem:[#allocation2 + $0x140] sm:$0x1] %vm307, 0.0
        %329 = vst.msk [vmem:[#allocation2 + $0x150] sm:$0x1] %vm307, 0.0
        %330 = vst.msk [vmem:[#allocation2 + $0x160] sm:$0x1] %vm307, 0.0
        %331 = vst.msk [vmem:[#allocation2 + $0x170] sm:$0x1] %vm307, 0.0
        %332 = vst.msk [vmem:[#allocation2 + $0x180] sm:$0x1] %vm307, 0.0
        %333 = vst.msk [vmem:[#allocation2 + $0x190] sm:$0x1] %vm307, 0.0
        %334 = vst.msk [vmem:[#allocation2 + $0x1a0] sm:$0x1] %vm307, 0.0
        %335 = vst.msk [vmem:[#allocation2 + $0x1b0] sm:$0x1] %vm307, 0.0
        %336 = vst.msk [vmem:[#allocation2 + $0x1c0] sm:$0x1] %vm307, 0.0
        %337 = vst.msk [vmem:[#allocation2 + $0x1d0] sm:$0x1] %vm307, 0.0
        %338 = vst.msk [vmem:[#allocation2 + $0x1e0] sm:$0x1] %vm307, 0.0
        %339 = vst.msk [vmem:[#allocation2 + $0x1f0] sm:$0x1] %vm307, 0.0
        %340 = vst.msk [vmem:[#allocation2 + $0x200] sm:$0x1] %vm307, 0.0
        %341 = vst.msk [vmem:[#allocation2 + $0x210] sm:$0x1] %vm307, 0.0
        %342 = vst.msk [vmem:[#allocation2 + $0x220] sm:$0x1] %vm307, 0.0
        %343 = vst.msk [vmem:[#allocation2 + $0x230] sm:$0x1] %vm307, 0.0
        %vm344 = vcmask 31744
        %345 = vst.msk [vmem:[#allocation2] sm:$0xff] %vm344, 0.0
        %346 = vst.msk [vmem:[#allocation2 + $0x8] sm:$0x1] %vm307, 0.0
        %s347 = scalar_lea.vmem [#allocation2], 144
        %348 = vst.msk [vmem:[%s347] sm:$0xff] %vm344, 0.0
        %349 = vst.msk [vmem:[%s347 + $0x8] sm:$0x1] %vm307, 0.0
        %s350 = scalar_lea.vmem [#allocation2], 288
        %351 = vst.msk [vmem:[%s350] sm:$0xff] %vm344, 0.0
        %352 = vst.msk [vmem:[%s350 + $0x8] sm:$0x1] %vm307, 0.0
        %s353 = scalar_lea.vmem [#allocation2], 432
        %354 = vst.msk [vmem:[%s353] sm:$0xff] %vm344, 0.0
        %355 = vst.msk [vmem:[%s353 + $0x8] sm:$0x1] %vm307, 0.0
        %vm356 = vcmask 64512
        %357 = vst.msk [vmem:[#allocation3] sm:$0xff] %vm356, 0.0
        %vm358 = vcmask 58368
        %359 = vst.msk [vmem:[#allocation3 + $0x8] sm:$0x3] %vm358, 0.0
        %s360 = scalar_lea.vmem [#allocation3], 144
        %361 = vst.msk [vmem:[%s360] sm:$0xff] %vm356, 0.0
        %362 = vst.msk [vmem:[%s360 + $0x8] sm:$0x3] %vm358, 0.0
        %vm363 = vcmask 57344
        %364 = vst.msk [vmem:[#allocation3] sm:$0x1] %vm363, 0.0
        %365 = vst.msk [vmem:[#allocation3 + $0x10] sm:$0x1] %vm363, 0.0
        %366 = vst.msk [vmem:[#allocation3 + $0x20] sm:$0x1] %vm363, 0.0
        %367 = vst.msk [vmem:[#allocation3 + $0x30] sm:$0x1] %vm363, 0.0
        %368 = vst.msk [vmem:[#allocation3 + $0x40] sm:$0x1] %vm363, 0.0
        %369 = vst.msk [vmem:[#allocation3 + $0x50] sm:$0x1] %vm363, 0.0
        %370 = vst.msk [vmem:[#allocation3 + $0x60] sm:$0x1] %vm363, 0.0
        %371 = vst.msk [vmem:[#allocation3 + $0x70] sm:$0x1] %vm363, 0.0
        %372 = vst.msk [vmem:[#allocation3 + $0x80] sm:$0x1] %vm363, 0.0
        %373 = vst.msk [vmem:[#allocation3 + $0x90] sm:$0x1] %vm363, 0.0
        %374 = vst.msk [vmem:[#allocation3 + $0x9] sm:$0x1] %vm363, 0.0
        %375 = vst.msk [vmem:[#allocation3 + $0x19] sm:$0x1] %vm363, 0.0
        %376 = vst.msk [vmem:[#allocation3 + $0x29] sm:$0x1] %vm363, 0.0
        %377 = vst.msk [vmem:[#allocation3 + $0x39] sm:$0x1] %vm363, 0.0
        %378 = vst.msk [vmem:[#allocation3 + $0x49] sm:$0x1] %vm363, 0.0
        %379 = vst.msk [vmem:[#allocation3 + $0x59] sm:$0x1] %vm363, 0.0
        %380 = vst.msk [vmem:[#allocation3 + $0x69] sm:$0x1] %vm363, 0.0
        %381 = vst.msk [vmem:[#allocation3 + $0x79] sm:$0x1] %vm363, 0.0
        %382 = vst.msk [vmem:[#allocation3 + $0x89] sm:$0x1] %vm363, 0.0
        %383 = vst.msk [vmem:[#allocation3 + $0x99] sm:$0x1] %vm363, 0.0
        %v384 = vld [vmem:[%s303] sm:$0xff]
        %v385 = vld [vmem:[%s303 + $0x8] sm:$0xff]
        %v386 = vld [vmem:[%s303 + $0x10] sm:$0xff]
        %v387 = vld [vmem:[%s303 + $0x18] sm:$0xff]
        %v388 = vld [vmem:[%s303 + $0x20] sm:$0xff]
        %v389 = vld [vmem:[%s303 + $0x28] sm:$0xff]
        %v390 = vld [vmem:[%s303 + $0x30] sm:$0xff]
        %v391 = vld [vmem:[%s303 + $0x38] sm:$0xff]
        %v393 = vlaneseq
        %v394 = vshrl.u32 %v393, 7
        %v395 = vsub.s32 0, %v394
        %v396 = vrot.slane %v305, %v395
        %v398 = vmul.f32 %v384, %v396
        %v399 = vmul.f32 %v385, %v396
        %v400 = vmul.f32 %v386, %v396
        %v401 = vmul.f32 %v387, %v396
        %v402 = vmul.f32 %v388, %v396
        %v403 = vmul.f32 %v389, %v396
        %v404 = vmul.f32 %v390, %v396
        %v405 = vmul.f32 %v391, %v396
        %v407 = vlaneseq
        %v408 = vshrl.u32 %v407, 7
        %v409 = vsub.s32 0, %v408
        %v410 = vrot.slane %v306, %v409
        %v412 = vadd.f32 %v398, %v410
        %v413 = vadd.f32 %v399, %v410
        %v414 = vadd.f32 %v400, %v410
        %v415 = vadd.f32 %v401, %v410
        %v416 = vadd.f32 %v402, %v410
        %v417 = vadd.f32 %v403, %v410
        %v418 = vadd.f32 %v404, %v410
        %v419 = vadd.f32 %v405, %v410
        %v420 = vmax.f32 %v412, 0.0
        %v421 = vmax.f32 %v413, 0.0
        %v422 = vmax.f32 %v414, 0.0
        %v423 = vmax.f32 %v415, 0.0
        %v424 = vmax.f32 %v416, 0.0
        %v425 = vmax.f32 %v417, 0.0
        %v426 = vmax.f32 %v418, 0.0
        %v427 = vmax.f32 %v419, 0.0
        %s428 = scalar_lea.vmem [#allocation2], 16
        %429 = vst.msk [vmem:[%s428 + $0x1] sm:$0xff] %vm344, %v420
        %430 = vst.msk [vmem:[%s428 + $0x11] sm:$0xff] %vm344, %v421
        %431 = vst.msk [vmem:[%s428 + $0x21] sm:$0xff] %vm344, %v422
        %432 = vst.msk [vmem:[%s428 + $0x31] sm:$0xff] %vm344, %v423
        %433 = vst.msk [vmem:[%s428 + $0x41] sm:$0xff] %vm344, %v424
        %434 = vst.msk [vmem:[%s428 + $0x51] sm:$0xff] %vm344, %v425
        %435 = vst.msk [vmem:[%s428 + $0x61] sm:$0xff] %vm344, %v426
        %436 = vst.msk [vmem:[%s428 + $0x71] sm:$0xff] %vm344, %v427
        %s437 = scalar_lea.vmem %s303, 64
        %v438 = vld [vmem:[%s437] sm:$0xff]
        %v439 = vld [vmem:[%s437 + $0x8] sm:$0xff]
        %v440 = vld [vmem:[%s437 + $0x10] sm:$0xff]
        %v441 = vld [vmem:[%s437 + $0x18] sm:$0xff]
        %v442 = vld [vmem:[%s437 + $0x20] sm:$0xff]
        %v443 = vld [vmem:[%s437 + $0x28] sm:$0xff]
        %v444 = vld [vmem:[%s437 + $0x30] sm:$0xff]
        %v445 = vld [vmem:[%s437 + $0x38] sm:$0xff]
        %v446 = vmul.f32 %v438, %v396
        %v447 = vmul.f32 %v439, %v396
        %v448 = vmul.f32 %v440, %v396
        %v449 = vmul.f32 %v441, %v396
        %v450 = vmul.f32 %v442, %v396
        %v451 = vmul.f32 %v443, %v396
        %v452 = vmul.f32 %v444, %v396
        %v453 = vmul.f32 %v445, %v396
        %v454 = vadd.f32 %v446, %v410
        %v455 = vadd.f32 %v447, %v410
        %v456 = vadd.f32 %v448, %v410
        %v457 = vadd.f32 %v449, %v410
        %v458 = vadd.f32 %v450, %v410
        %v459 = vadd.f32 %v451, %v410
        %v460 = vadd.f32 %v452, %v410
        %v461 = vadd.f32 %v453, %v410
        %v462 = vmax.f32 %v454, 0.0
        %v463 = vmax.f32 %v455, 0.0
        %v464 = vmax.f32 %v456, 0.0
        %v465 = vmax.f32 %v457, 0.0
        %v466 = vmax.f32 %v458, 0.0
        %v467 = vmax.f32 %v459, 0.0
        %v468 = vmax.f32 %v460, 0.0
        %v469 = vmax.f32 %v461, 0.0
        %s470 = scalar_lea.vmem [#allocation2], 160
        %471 = vst.msk [vmem:[%s470 + $0x1] sm:$0xff] %vm344, %v462
        %472 = vst.msk [vmem:[%s470 + $0x11] sm:$0xff] %vm344, %v463
        %473 = vst.msk [vmem:[%s470 + $0x21] sm:$0xff] %vm344, %v464
        %474 = vst.msk [vmem:[%s470 + $0x31] sm:$0xff] %vm344, %v465
        %475 = vst.msk [vmem:[%s470 + $0x41] sm:$0xff] %vm344, %v466
        %476 = vst.msk [vmem:[%s470 + $0x51] sm:$0xff] %vm344, %v467
        %477 = vst.msk [vmem:[%s470 + $0x61] sm:$0xff] %vm344, %v468
        %478 = vst.msk [vmem:[%s470 + $0x71] sm:$0xff] %vm344, %v469
        %s479 = scalar_lea.vmem %s303, 128
        %v480 = vld [vmem:[%s479] sm:$0xff]
        %v481 = vld [vmem:[%s479 + $0x8] sm:$0xff]
        %v482 = vld [vmem:[%s479 + $0x10] sm:$0xff]
        %v483 = vld [vmem:[%s479 + $0x18] sm:$0xff]
        %v484 = vld [vmem:[%s479 + $0x20] sm:$0xff]
        %v485 = vld [vmem:[%s479 + $0x28] sm:$0xff]
        %v486 = vld [vmem:[%s479 + $0x30] sm:$0xff]
        %v487 = vld [vmem:[%s479 + $0x38] sm:$0xff]
        %v488 = vmul.f32 %v480, %v396
        %v489 = vmul.f32 %v481, %v396
        %v490 = vmul.f32 %v482, %v396
        %v491 = vmul.f32 %v483, %v396
        %v492 = vmul.f32 %v484, %v396
        %v493 = vmul.f32 %v485, %v396
        %v494 = vmul.f32 %v486, %v396
        %v495 = vmul.f32 %v487, %v396
        %v496 = vadd.f32 %v488, %v410
        %v497 = vadd.f32 %v489, %v410
        %v498 = vadd.f32 %v490, %v410
        %v499 = vadd.f32 %v491, %v410
        %v500 = vadd.f32 %v492, %v410
        %v501 = vadd.f32 %v493, %v410
        %v502 = vadd.f32 %v494, %v410
        %v503 = vadd.f32 %v495, %v410
        %v504 = vmax.f32 %v496, 0.0
        %v505 = vmax.f32 %v497, 0.0
        %v506 = vmax.f32 %v498, 0.0
        %v507 = vmax.f32 %v499, 0.0
        %v508 = vmax.f32 %v500, 0.0
        %v509 = vmax.f32 %v501, 0.0
        %v510 = vmax.f32 %v502, 0.0
        %v511 = vmax.f32 %v503, 0.0
        %s512 = scalar_lea.vmem [#allocation2], 304
        %513 = vst.msk [vmem:[%s512 + $0x1] sm:$0xff] %vm344, %v504
        %514 = vst.msk [vmem:[%s512 + $0x11] sm:$0xff] %vm344, %v505
        %515 = vst.msk [vmem:[%s512 + $0x21] sm:$0xff] %vm344, %v506
        %516 = vst.msk [vmem:[%s512 + $0x31] sm:$0xff] %vm344, %v507
        %517 = vst.msk [vmem:[%s512 + $0x41] sm:$0xff] %vm344, %v508
        %518 = vst.msk [vmem:[%s512 + $0x51] sm:$0xff] %vm344, %v509
        %519 = vst.msk [vmem:[%s512 + $0x61] sm:$0xff] %vm344, %v510
        %520 = vst.msk [vmem:[%s512 + $0x71] sm:$0xff] %vm344, %v511
        %s521 = scalar_lea.vmem %s303, 192
        %v522 = vld [vmem:[%s521] sm:$0xff]
        %v523 = vld [vmem:[%s521 + $0x8] sm:$0xff]
        %v524 = vld [vmem:[%s521 + $0x10] sm:$0xff]
        %v525 = vld [vmem:[%s521 + $0x18] sm:$0xff]
        %v526 = vld [vmem:[%s521 + $0x20] sm:$0xff]
        %v527 = vld [vmem:[%s521 + $0x28] sm:$0xff]
        %v528 = vld [vmem:[%s521 + $0x30] sm:$0xff]
        %v529 = vld [vmem:[%s521 + $0x38] sm:$0xff]
        %v530 = vmul.f32 %v522, %v396
        %v531 = vmul.f32 %v523, %v396
        %v532 = vmul.f32 %v524, %v396
        %v533 = vmul.f32 %v525, %v396
        %v534 = vmul.f32 %v526, %v396
        %v535 = vmul.f32 %v527, %v396
        %v536 = vmul.f32 %v528, %v396
        %v537 = vmul.f32 %v529, %v396
        %v538 = vadd.f32 %v530, %v410
        %v539 = vadd.f32 %v531, %v410
        %v540 = vadd.f32 %v532, %v410
        %v541 = vadd.f32 %v533, %v410
        %v542 = vadd.f32 %v534, %v410
        %v543 = vadd.f32 %v535, %v410
        %v544 = vadd.f32 %v536, %v410
        %v545 = vadd.f32 %v537, %v410
        %v546 = vmax.f32 %v538, 0.0
        %v547 = vmax.f32 %v539, 0.0
        %v548 = vmax.f32 %v540, 0.0
        %v549 = vmax.f32 %v541, 0.0
        %v550 = vmax.f32 %v542, 0.0
        %v551 = vmax.f32 %v543, 0.0
        %v552 = vmax.f32 %v544, 0.0
        %v553 = vmax.f32 %v545, 0.0
        %s554 = scalar_lea.vmem [#allocation2], 448
        %555 = vst.msk [vmem:[%s554 + $0x1] sm:$0xff] %vm344, %v546
        %556 = vst.msk [vmem:[%s554 + $0x11] sm:$0xff] %vm344, %v547
        %557 = vst.msk [vmem:[%s554 + $0x21] sm:$0xff] %vm344, %v548
        %558 = vst.msk [vmem:[%s554 + $0x31] sm:$0xff] %vm344, %v549
        %559 = vst.msk [vmem:[%s554 + $0x41] sm:$0xff] %vm344, %v550
        %560 = vst.msk [vmem:[%s554 + $0x51] sm:$0xff] %vm344, %v551
        %561 = vst.msk [vmem:[%s554 + $0x61] sm:$0xff] %vm344, %v552
        %562 = vst.msk [vmem:[%s554 + $0x71] sm:$0xff] %vm344, %v553
        %v563 = vld [vmem:[%s353] sm:$0xff]
        %v564 = vld [vmem:[%s353 + $0x10] sm:$0xff]
        %v565 = vld [vmem:[%s353 + $0x20] sm:$0xff]
        %v566 = vld [vmem:[%s353 + $0x30] sm:$0xff]
        %v567 = vld [vmem:[%s353 + $0x40] sm:$0xff]
        %v568 = vld [vmem:[%s353 + $0x50] sm:$0xff]
        %v569 = vld [vmem:[%s353 + $0x60] sm:$0xff]
        %v570 = vld [vmem:[%s353 + $0x70] sm:$0xff]
        %v571 = vpack.c.bf16 %v564, %v563
        %v572 = vpack.c.bf16 %v566, %v565
        %v573 = vpack.c.bf16 %v568, %v567
        %v574 = vpack.c.bf16 %v570, %v569
        %v575 = vld [vmem:[%s3] sm:$0x3]
        %v576 = vld [vmem:[%s350 + $0x1] sm:$0xff]
        %v577 = vld [vmem:[%s350 + $0x11] sm:$0xff]
        %v578 = vld [vmem:[%s350 + $0x21] sm:$0xff]
        %v579 = vld [vmem:[%s350 + $0x31] sm:$0xff]
        %v580 = vld [vmem:[%s350 + $0x41] sm:$0xff]
        %v581 = vld [vmem:[%s350 + $0x51] sm:$0xff]
        %v582 = vld [vmem:[%s350 + $0x61] sm:$0xff]
        %v583 = vld [vmem:[%s350 + $0x71] sm:$0xff]
        %v584 = vpack.c.bf16 %v577, %v576
        %v585 = vpack.c.bf16 %v579, %v578
        %v586 = vpack.c.bf16 %v581, %v580
        %v587 = vpack.c.bf16 %v583, %v582
        %s588 = scalar_lea.vmem %s3, 2
        %v589 = vld [vmem:[%s588] sm:$0x3]
        %v591 = vsel %vm344, %v584, 0
        %v594 = vsel %vm344, %v585, 0
        %v597 = vsel %vm344, %v586, 0
        %v600 = vsel %vm344, %v587, 0
        %vm602 = vcmask 1041408
        %v604 = vsel %vm602, %v589, 0
        %606 = vmatprep.subr.bf16.mxu0 0
        %607 = vmatpush1.bf16.msra.mxu0 0
        %608 = vmatprep.subr.bf16.mxu0 0
        %609 = vmatpush1.bf16.msra.mxu0 0
        %610 = vmatprep.subr.bf16.mxu0 0
        %611 = vmatpush1.bf16.msra.mxu0 0
        %612 = vmatprep.subr.bf16.mxu0 0
        %613 = vmatpush1.bf16.msra.mxu0 0
        %614 = vmatprep.subr.bf16.mxu0 0
        %615 = vmatpush1.bf16.msra.mxu0 0
        %616 = vmatprep.subr.bf16.mxu0 0
        %617 = vmatpush1.bf16.msra.mxu0 0
        %618 = vmatprep.subr.bf16.mxu0 0
        %619 = vmatpush1.bf16.msra.mxu0 0
        %620 = vmatprep.subr.bf16.mxu0 0
        %621 = vmatpush1.bf16.msra.mxu0 %v604
        %622 = vmatprep.subr.bf16.mxu0 0
        %623 = vmatpush2.bf16.msra.mxu0 0
        %624 = vmatprep.subr.bf16.mxu0 0
        %625 = vmatpush2.bf16.msra.mxu0 0
        %626 = vmatprep.subr.bf16.mxu0 0
        %627 = vmatpush2.bf16.msra.mxu0 0
        %628 = vmatprep.subr.bf16.mxu0 0
        %629 = vmatpush2.bf16.msra.mxu0 0
        %630 = vmatprep.subr.bf16.mxu0 0
        %631 = vmatpush2.bf16.msra.mxu0 0
        %632 = vmatprep.subr.bf16.mxu0 0
        %633 = vmatpush2.bf16.msra.mxu0 0
        %634 = vmatprep.subr.bf16.mxu0 0
        %635 = vmatpush2.bf16.msra.mxu0 0
        %636 = vmatprep.subr.bf16.mxu0 0
        %637 = vmatpush2.bf16.msra.mxu0 0
        %638 = vmatprep.mubr.bf16.mxu0 0
        %639 = vmatmul.mubr.bf16.gmra.mxu0 %v591
        %v640 = vpop.f32.mrf.mxu0
        %v641 = vadd.f32 0.0, %v640
        %v642 = vpop.f32.mrf.mxu0
        %v643 = vpop.f32.mrf.mxu0
        %v644 = vadd.f32 0.0, %v643
        %v645 = vpop.f32.mrf.mxu0
        %646 = vmatprep.mubr.bf16.mxu0 0
        %647 = vmatmul.mubr.bf16.gmra.mxu0 %v594
        %v648 = vpop.f32.mrf.mxu0
        %v649 = vadd.f32 0.0, %v648
        %v650 = vpop.f32.mrf.mxu0
        %v651 = vpop.f32.mrf.mxu0
        %v652 = vadd.f32 0.0, %v651
        %v653 = vpop.f32.mrf.mxu0
        %654 = vmatprep.mubr.bf16.mxu0 0
        %655 = vmatmul.mubr.bf16.gmra.mxu0 %v597
        %v656 = vpop.f32.mrf.mxu0
        %v657 = vadd.f32 0.0, %v656
        %v658 = vpop.f32.mrf.mxu0
        %v659 = vpop.f32.mrf.mxu0
        %v660 = vadd.f32 0.0, %v659
        %v661 = vpop.f32.mrf.mxu0
        %662 = vmatprep.mubr.bf16.mxu0 0
        %663 = vmatmul.mubr.bf16.gmra.mxu0 %v600
        %v664 = vpop.f32.mrf.mxu0
        %v665 = vadd.f32 0.0, %v664
        %v666 = vpop.f32.mrf.mxu0
        %v667 = vpop.f32.mrf.mxu0
        %v668 = vadd.f32 0.0, %v667
        %v669 = vpop.f32.mrf.mxu0
        %670 = vdwg.mxu0
        %v672 = vsel %vm344, %v571, 0
        %v675 = vsel %vm344, %v572, 0
        %v678 = vsel %vm344, %v573, 0
        %v681 = vsel %vm344, %v574, 0
        %v684 = vsel %vm602, %v575, 0
        %686 = vmatprep.subr.bf16.mxu0 0
        %687 = vmatpush1.bf16.msra.mxu0 0
        %688 = vmatprep.subr.bf16.mxu0 0
        %689 = vmatpush1.bf16.msra.mxu0 0
        %690 = vmatprep.subr.bf16.mxu0 0
        %691 = vmatpush1.bf16.msra.mxu0 0
        %692 = vmatprep.subr.bf16.mxu0 0
        %693 = vmatpush1.bf16.msra.mxu0 0
        %694 = vmatprep.subr.bf16.mxu0 0
        %695 = vmatpush1.bf16.msra.mxu0 0
        %696 = vmatprep.subr.bf16.mxu0 0
        %697 = vmatpush1.bf16.msra.mxu0 0
        %698 = vmatprep.subr.bf16.mxu0 0
        %699 = vmatpush1.bf16.msra.mxu0 0
        %700 = vmatprep.subr.bf16.mxu0 0
        %701 = vmatpush1.bf16.msra.mxu0 %v684
        %702 = vmatprep.subr.bf16.mxu0 0
        %703 = vmatpush2.bf16.msra.mxu0 0
        %704 = vmatprep.subr.bf16.mxu0 0
        %705 = vmatpush2.bf16.msra.mxu0 0
        %706 = vmatprep.subr.bf16.mxu0 0
        %707 = vmatpush2.bf16.msra.mxu0 0
        %708 = vmatprep.subr.bf16.mxu0 0
        %709 = vmatpush2.bf16.msra.mxu0 0
        %710 = vmatprep.subr.bf16.mxu0 0
        %711 = vmatpush2.bf16.msra.mxu0 0
        %712 = vmatprep.subr.bf16.mxu0 0
        %713 = vmatpush2.bf16.msra.mxu0 0
        %714 = vmatprep.subr.bf16.mxu0 0
        %715 = vmatpush2.bf16.msra.mxu0 0
        %716 = vmatprep.subr.bf16.mxu0 0
        %717 = vmatpush2.bf16.msra.mxu0 0
        %718 = vmatprep.mubr.bf16.mxu0 0
        %719 = vmatmul.mubr.bf16.gmra.mxu0 %v672
        %v720 = vpop.f32.mrf.mxu0
        %v721 = vadd.f32 %v641, %v720
        %v722 = vpop.f32.mrf.mxu0
        %v723 = vpop.f32.mrf.mxu0
        %v724 = vadd.f32 %v644, %v723
        %v725 = vpop.f32.mrf.mxu0
        %726 = vmatprep.mubr.bf16.mxu0 0
        %727 = vmatmul.mubr.bf16.gmra.mxu0 %v675
        %v728 = vpop.f32.mrf.mxu0
        %v729 = vadd.f32 %v649, %v728
        %v730 = vpop.f32.mrf.mxu0
        %v731 = vpop.f32.mrf.mxu0
        %v732 = vadd.f32 %v652, %v731
        %v733 = vpop.f32.mrf.mxu0
        %734 = vmatprep.mubr.bf16.mxu0 0
        %735 = vmatmul.mubr.bf16.gmra.mxu0 %v678
        %v736 = vpop.f32.mrf.mxu0
        %v737 = vadd.f32 %v657, %v736
        %v738 = vpop.f32.mrf.mxu0
        %v739 = vpop.f32.mrf.mxu0
        %v740 = vadd.f32 %v660, %v739
        %v741 = vpop.f32.mrf.mxu0
        %742 = vmatprep.mubr.bf16.mxu0 0
        %743 = vmatmul.mubr.bf16.gmra.mxu0 %v681
        %v744 = vpop.f32.mrf.mxu0
        %v745 = vadd.f32 %v665, %v744
        %v746 = vpop.f32.mrf.mxu0
        %v747 = vpop.f32.mrf.mxu0
        %v748 = vadd.f32 %v668, %v747
        %v749 = vpop.f32.mrf.mxu0
        %750 = vdwg.mxu0
        %v751 = vld [vmem:[%s353 + $0x1] sm:$0xff]
        %v752 = vld [vmem:[%s353 + $0x11] sm:$0xff]
        %v753 = vld [vmem:[%s353 + $0x21] sm:$0xff]
        %v754 = vld [vmem:[%s353 + $0x31] sm:$0xff]
        %v755 = vld [vmem:[%s353 + $0x41] sm:$0xff]
        %v756 = vld [vmem:[%s353 + $0x51] sm:$0xff]
        %v757 = vld [vmem:[%s353 + $0x61] sm:$0xff]
        %v758 = vld [vmem:[%s353 + $0x71] sm:$0xff]
        %v759 = vpack.c.bf16 %v752, %v751
        %v760 = vpack.c.bf16 %v754, %v753
        %v761 = vpack.c.bf16 %v756, %v755
        %v762 = vpack.c.bf16 %v758, %v757
        %s763 = scalar_lea.vmem %s3, 4
        %v764 = vld [vmem:[%s763] sm:$0x3]
        %v766 = vsel %vm344, %v759, 0
        %v769 = vsel %vm344, %v760, 0
        %v772 = vsel %vm344, %v761, 0
        %v775 = vsel %vm344, %v762, 0
        %v778 = vsel %vm602, %v764, 0
        %780 = vmatprep.subr.bf16.mxu0 0
        %781 = vmatpush1.bf16.msra.mxu0 0
        %782 = vmatprep.subr.bf16.mxu0 0
        %783 = vmatpush1.bf16.msra.mxu0 0
        %784 = vmatprep.subr.bf16.mxu0 0
        %785 = vmatpush1.bf16.msra.mxu0 0
        %786 = vmatprep.subr.bf16.mxu0 0
        %787 = vmatpush1.bf16.msra.mxu0 0
        %788 = vmatprep.subr.bf16.mxu0 0
        %789 = vmatpush1.bf16.msra.mxu0 0
        %790 = vmatprep.subr.bf16.mxu0 0
        %791 = vmatpush1.bf16.msra.mxu0 0
        %792 = vmatprep.subr.bf16.mxu0 0
        %793 = vmatpush1.bf16.msra.mxu0 0
        %794 = vmatprep.subr.bf16.mxu0 0
        %795 = vmatpush1.bf16.msra.mxu0 %v778
        %796 = vmatprep.subr.bf16.mxu0 0
        %797 = vmatpush2.bf16.msra.mxu0 0
        %798 = vmatprep.subr.bf16.mxu0 0
        %799 = vmatpush2.bf16.msra.mxu0 0
        %800 = vmatprep.subr.bf16.mxu0 0
        %801 = vmatpush2.bf16.msra.mxu0 0
        %802 = vmatprep.subr.bf16.mxu0 0
        %803 = vmatpush2.bf16.msra.mxu0 0
        %804 = vmatprep.subr.bf16.mxu0 0
        %805 = vmatpush2.bf16.msra.mxu0 0
        %806 = vmatprep.subr.bf16.mxu0 0
        %807 = vmatpush2.bf16.msra.mxu0 0
        %808 = vmatprep.subr.bf16.mxu0 0
        %809 = vmatpush2.bf16.msra.mxu0 0
        %810 = vmatprep.subr.bf16.mxu0 0
        %811 = vmatpush2.bf16.msra.mxu0 0
        %812 = vmatprep.mubr.bf16.mxu0 0
        %813 = vmatmul.mubr.bf16.gmra.mxu0 %v766
        %v814 = vpop.f32.mrf.mxu0
        %v815 = vadd.f32 0.0, %v814
        %v816 = vpop.f32.mrf.mxu0
        %v817 = vpop.f32.mrf.mxu0
        %v818 = vadd.f32 0.0, %v817
        %v819 = vpop.f32.mrf.mxu0
        %820 = vmatprep.mubr.bf16.mxu0 0
        %821 = vmatmul.mubr.bf16.gmra.mxu0 %v769
        %v822 = vpop.f32.mrf.mxu0
        %v823 = vadd.f32 0.0, %v822
        %v824 = vpop.f32.mrf.mxu0
        %v825 = vpop.f32.mrf.mxu0
        %v826 = vadd.f32 0.0, %v825
        %v827 = vpop.f32.mrf.mxu0
        %828 = vmatprep.mubr.bf16.mxu0 0
        %829 = vmatmul.mubr.bf16.gmra.mxu0 %v772
        %v830 = vpop.f32.mrf.mxu0
        %v831 = vadd.f32 0.0, %v830
        %v832 = vpop.f32.mrf.mxu0
        %v833 = vpop.f32.mrf.mxu0
        %v834 = vadd.f32 0.0, %v833
        %v835 = vpop.f32.mrf.mxu0
        %836 = vmatprep.mubr.bf16.mxu0 0
        %837 = vmatmul.mubr.bf16.gmra.mxu0 %v775
        %v838 = vpop.f32.mrf.mxu0
        %v839 = vadd.f32 0.0, %v838
        %v840 = vpop.f32.mrf.mxu0
        %v841 = vpop.f32.mrf.mxu0
        %v842 = vadd.f32 0.0, %v841
        %v843 = vpop.f32.mrf.mxu0
        %844 = vdwg.mxu0
        %v845 = vadd.f32 %v721, %v815
        %v846 = vadd.f32 %v724, %v818
        %v847 = vadd.f32 %v729, %v823
        %v848 = vadd.f32 %v732, %v826
        %v849 = vadd.f32 %v737, %v831
        %v850 = vadd.f32 %v740, %v834
        %v851 = vadd.f32 %v745, %v839
        %v852 = vadd.f32 %v748, %v842
        %v853 = vld [vmem:[%s470] sm:$0xff]
        %v854 = vld [vmem:[%s470 + $0x10] sm:$0xff]
        %v855 = vld [vmem:[%s470 + $0x20] sm:$0xff]
        %v856 = vld [vmem:[%s470 + $0x30] sm:$0xff]
        %v857 = vld [vmem:[%s470 + $0x40] sm:$0xff]
        %v858 = vld [vmem:[%s470 + $0x50] sm:$0xff]
        %v859 = vld [vmem:[%s470 + $0x60] sm:$0xff]
        %v860 = vld [vmem:[%s470 + $0x70] sm:$0xff]
        %v861 = vpack.c.bf16 %v854, %v853
        %v862 = vpack.c.bf16 %v856, %v855
        %v863 = vpack.c.bf16 %v858, %v857
        %v864 = vpack.c.bf16 %v860, %v859
        %s865 = scalar_lea.vmem %s3, 6
        %v866 = vld [vmem:[%s865] sm:$0x3]
        %v868 = vsel %vm344, %v861, 0
        %v871 = vsel %vm344, %v862, 0
        %v874 = vsel %vm344, %v863, 0
        %v877 = vsel %vm344, %v864, 0
        %v880 = vsel %vm602, %v866, 0
        %882 = vmatprep.subr.bf16.mxu0 0
        %883 = vmatpush1.bf16.msra.mxu0 0
        %884 = vmatprep.subr.bf16.mxu0 0
        %885 = vmatpush1.bf16.msra.mxu0 0
        %886 = vmatprep.subr.bf16.mxu0 0
        %887 = vmatpush1.bf16.msra.mxu0 0
        %888 = vmatprep.subr.bf16.mxu0 0
        %889 = vmatpush1.bf16.msra.mxu0 0
        %890 = vmatprep.subr.bf16.mxu0 0
        %891 = vmatpush1.bf16.msra.mxu0 0
        %892 = vmatprep.subr.bf16.mxu0 0
        %893 = vmatpush1.bf16.msra.mxu0 0
        %894 = vmatprep.subr.bf16.mxu0 0
        %895 = vmatpush1.bf16.msra.mxu0 0
        %896 = vmatprep.subr.bf16.mxu0 0
        %897 = vmatpush1.bf16.msra.mxu0 %v880
        %898 = vmatprep.subr.bf16.mxu0 0
        %899 = vmatpush2.bf16.msra.mxu0 0
        %900 = vmatprep.subr.bf16.mxu0 0
        %901 = vmatpush2.bf16.msra.mxu0 0
        %902 = vmatprep.subr.bf16.mxu0 0
        %903 = vmatpush2.bf16.msra.mxu0 0
        %904 = vmatprep.subr.bf16.mxu0 0
        %905 = vmatpush2.bf16.msra.mxu0 0
        %906 = vmatprep.subr.bf16.mxu0 0
        %907 = vmatpush2.bf16.msra.mxu0 0
        %908 = vmatprep.subr.bf16.mxu0 0
        %909 = vmatpush2.bf16.msra.mxu0 0
        %910 = vmatprep.subr.bf16.mxu0 0
        %911 = vmatpush2.bf16.msra.mxu0 0
        %912 = vmatprep.subr.bf16.mxu0 0
        %913 = vmatpush2.bf16.msra.mxu0 0
        %914 = vmatprep.mubr.bf16.mxu0 0
        %915 = vmatmul.mubr.bf16.gmra.mxu0 %v868
        %v916 = vpop.f32.mrf.mxu0
        %v917 = vadd.f32 0.0, %v916
        %v918 = vpop.f32.mrf.mxu0
        %v919 = vpop.f32.mrf.mxu0
        %v920 = vadd.f32 0.0, %v919
        %v921 = vpop.f32.mrf.mxu0
        %922 = vmatprep.mubr.bf16.mxu0 0
        %923 = vmatmul.mubr.bf16.gmra.mxu0 %v871
        %v924 = vpop.f32.mrf.mxu0
        %v925 = vadd.f32 0.0, %v924
        %v926 = vpop.f32.mrf.mxu0
        %v927 = vpop.f32.mrf.mxu0
        %v928 = vadd.f32 0.0, %v927
        %v929 = vpop.f32.mrf.mxu0
        %930 = vmatprep.mubr.bf16.mxu0 0
        %931 = vmatmul.mubr.bf16.gmra.mxu0 %v874
        %v932 = vpop.f32.mrf.mxu0
        %v933 = vadd.f32 0.0, %v932
        %v934 = vpop.f32.mrf.mxu0
        %v935 = vpop.f32.mrf.mxu0
        %v936 = vadd.f32 0.0, %v935
        %v937 = vpop.f32.mrf.mxu0
        %938 = vmatprep.mubr.bf16.mxu0 0
        %939 = vmatmul.mubr.bf16.gmra.mxu0 %v877
        %v940 = vpop.f32.mrf.mxu0
        %v941 = vadd.f32 0.0, %v940
        %v942 = vpop.f32.mrf.mxu0
        %v943 = vpop.f32.mrf.mxu0
        %v944 = vadd.f32 0.0, %v943
        %v945 = vpop.f32.mrf.mxu0
        %946 = vdwg.mxu0
        %v947 = vadd.f32 %v845, %v917
        %v948 = vadd.f32 %v846, %v920
        %v949 = vadd.f32 %v847, %v925
        %v950 = vadd.f32 %v848, %v928
        %v951 = vadd.f32 %v849, %v933
        %v952 = vadd.f32 %v850, %v936
        %v953 = vadd.f32 %v851, %v941
        %v954 = vadd.f32 %v852, %v944
        %v955 = vld [vmem:[%s428 + $0x1] sm:$0xff]
        %v956 = vld [vmem:[%s428 + $0x11] sm:$0xff]
        %v957 = vld [vmem:[%s428 + $0x21] sm:$0xff]
        %v958 = vld [vmem:[%s428 + $0x31] sm:$0xff]
        %v959 = vld [vmem:[%s428 + $0x41] sm:$0xff]
        %v960 = vld [vmem:[%s428 + $0x51] sm:$0xff]
        %v961 = vld [vmem:[%s428 + $0x61] sm:$0xff]
        %v962 = vld [vmem:[%s428 + $0x71] sm:$0xff]
        %v963 = vpack.c.bf16 %v956, %v955
        %v964 = vpack.c.bf16 %v958, %v957
        %v965 = vpack.c.bf16 %v960, %v959
        %v966 = vpack.c.bf16 %v962, %v961
        %s967 = scalar_lea.vmem %s3, 8
        %v968 = vld [vmem:[%s967] sm:$0x3]
        %v970 = vsel %vm344, %v963, 0
        %v973 = vsel %vm344, %v964, 0
        %v976 = vsel %vm344, %v965, 0
        %v979 = vsel %vm344, %v966, 0
        %v982 = vsel %vm602, %v968, 0
        %984 = vmatprep.subr.bf16.mxu0 0
        %985 = vmatpush1.bf16.msra.mxu0 0
        %986 = vmatprep.subr.bf16.mxu0 0
        %987 = vmatpush1.bf16.msra.mxu0 0
        %988 = vmatprep.subr.bf16.mxu0 0
        %989 = vmatpush1.bf16.msra.mxu0 0
        %990 = vmatprep.subr.bf16.mxu0 0
        %991 = vmatpush1.bf16.msra.mxu0 0
        %992 = vmatprep.subr.bf16.mxu0 0
        %993 = vmatpush1.bf16.msra.mxu0 0
        %994 = vmatprep.subr.bf16.mxu0 0
        %995 = vmatpush1.bf16.msra.mxu0 0
        %996 = vmatprep.subr.bf16.mxu0 0
        %997 = vmatpush1.bf16.msra.mxu0 0
        %998 = vmatprep.subr.bf16.mxu0 0
        %999 = vmatpush1.bf16.msra.mxu0 %v982
        %1000 = vmatprep.subr.bf16.mxu0 0
        %1001 = vmatpush2.bf16.msra.mxu0 0
        %1002 = vmatprep.subr.bf16.mxu0 0
        %1003 = vmatpush2.bf16.msra.mxu0 0
        %1004 = vmatprep.subr.bf16.mxu0 0
        %1005 = vmatpush2.bf16.msra.mxu0 0
        %1006 = vmatprep.subr.bf16.mxu0 0
        %1007 = vmatpush2.bf16.msra.mxu0 0
        %1008 = vmatprep.subr.bf16.mxu0 0
        %1009 = vmatpush2.bf16.msra.mxu0 0
        %1010 = vmatprep.subr.bf16.mxu0 0
        %1011 = vmatpush2.bf16.msra.mxu0 0
        %1012 = vmatprep.subr.bf16.mxu0 0
        %1013 = vmatpush2.bf16.msra.mxu0 0
        %1014 = vmatprep.subr.bf16.mxu0 0
        %1015 = vmatpush2.bf16.msra.mxu0 0
        %1016 = vmatprep.mubr.bf16.mxu0 0
        %1017 = vmatmul.mubr.bf16.gmra.mxu0 %v970
        %v1018 = vpop.f32.mrf.mxu0
        %v1019 = vadd.f32 0.0, %v1018
        %v1020 = vpop.f32.mrf.mxu0
        %v1021 = vpop.f32.mrf.mxu0
        %v1022 = vadd.f32 0.0, %v1021
        %v1023 = vpop.f32.mrf.mxu0
        %1024 = vmatprep.mubr.bf16.mxu0 0
        %1025 = vmatmul.mubr.bf16.gmra.mxu0 %v973
        %v1026 = vpop.f32.mrf.mxu0
        %v1027 = vadd.f32 0.0, %v1026
        %v1028 = vpop.f32.mrf.mxu0
        %v1029 = vpop.f32.mrf.mxu0
        %v1030 = vadd.f32 0.0, %v1029
        %v1031 = vpop.f32.mrf.mxu0
        %1032 = vmatprep.mubr.bf16.mxu0 0
        %1033 = vmatmul.mubr.bf16.gmra.mxu0 %v976
        %v1034 = vpop.f32.mrf.mxu0
        %v1035 = vadd.f32 0.0, %v1034
        %v1036 = vpop.f32.mrf.mxu0
        %v1037 = vpop.f32.mrf.mxu0
        %v1038 = vadd.f32 0.0, %v1037
        %v1039 = vpop.f32.mrf.mxu0
        %1040 = vmatprep.mubr.bf16.mxu0 0
        %1041 = vmatmul.mubr.bf16.gmra.mxu0 %v979
        %v1042 = vpop.f32.mrf.mxu0
        %v1043 = vadd.f32 0.0, %v1042
        %v1044 = vpop.f32.mrf.mxu0
        %v1045 = vpop.f32.mrf.mxu0
        %v1046 = vadd.f32 0.0, %v1045
        %v1047 = vpop.f32.mrf.mxu0
        %1048 = vdwg.mxu0
        %v1049 = vadd.f32 %v947, %v1019
        %v1050 = vadd.f32 %v948, %v1022
        %v1051 = vadd.f32 %v949, %v1027
        %v1052 = vadd.f32 %v950, %v1030
        %v1053 = vadd.f32 %v951, %v1035
        %v1054 = vadd.f32 %v952, %v1038
        %v1055 = vadd.f32 %v953, %v1043
        %v1056 = vadd.f32 %v954, %v1046
        %v1057 = vld [vmem:[%s470 + $0x1] sm:$0xff]
        %v1058 = vld [vmem:[%s470 + $0x11] sm:$0xff]
        %v1059 = vld [vmem:[%s470 + $0x21] sm:$0xff]
        %v1060 = vld [vmem:[%s470 + $0x31] sm:$0xff]
        %v1061 = vld [vmem:[%s470 + $0x41] sm:$0xff]
        %v1062 = vld [vmem:[%s470 + $0x51] sm:$0xff]
        %v1063 = vld [vmem:[%s470 + $0x61] sm:$0xff]
        %v1064 = vld [vmem:[%s470 + $0x71] sm:$0xff]
        %v1065 = vpack.c.bf16 %v1058, %v1057
        %v1066 = vpack.c.bf16 %v1060, %v1059
        %v1067 = vpack.c.bf16 %v1062, %v1061
        %v1068 = vpack.c.bf16 %v1064, %v1063
        %s1069 = scalar_lea.vmem %s3, 10
        %v1070 = vld [vmem:[%s1069] sm:$0x3]
        %v1072 = vsel %vm344, %v1065, 0
        %v1075 = vsel %vm344, %v1066, 0
        %v1078 = vsel %vm344, %v1067, 0
        %v1081 = vsel %vm344, %v1068, 0
        %v1084 = vsel %vm602, %v1070, 0
        %1086 = vmatprep.subr.bf16.mxu0 0
        %1087 = vmatpush1.bf16.msra.mxu0 0
        %1088 = vmatprep.subr.bf16.mxu0 0
        %1089 = vmatpush1.bf16.msra.mxu0 0
        %1090 = vmatprep.subr.bf16.mxu0 0
        %1091 = vmatpush1.bf16.msra.mxu0 0
        %1092 = vmatprep.subr.bf16.mxu0 0
        %1093 = vmatpush1.bf16.msra.mxu0 0
        %1094 = vmatprep.subr.bf16.mxu0 0
        %1095 = vmatpush1.bf16.msra.mxu0 0
        %1096 = vmatprep.subr.bf16.mxu0 0
        %1097 = vmatpush1.bf16.msra.mxu0 0
        %1098 = vmatprep.subr.bf16.mxu0 0
        %1099 = vmatpush1.bf16.msra.mxu0 0
        %1100 = vmatprep.subr.bf16.mxu0 0
        %1101 = vmatpush1.bf16.msra.mxu0 %v1084
        %1102 = vmatprep.subr.bf16.mxu0 0
        %1103 = vmatpush2.bf16.msra.mxu0 0
        %1104 = vmatprep.subr.bf16.mxu0 0
        %1105 = vmatpush2.bf16.msra.mxu0 0
        %1106 = vmatprep.subr.bf16.mxu0 0
        %1107 = vmatpush2.bf16.msra.mxu0 0
        %1108 = vmatprep.subr.bf16.mxu0 0
        %1109 = vmatpush2.bf16.msra.mxu0 0
        %1110 = vmatprep.subr.bf16.mxu0 0
        %1111 = vmatpush2.bf16.msra.mxu0 0
        %1112 = vmatprep.subr.bf16.mxu0 0
        %1113 = vmatpush2.bf16.msra.mxu0 0
        %1114 = vmatprep.subr.bf16.mxu0 0
        %1115 = vmatpush2.bf16.msra.mxu0 0
        %1116 = vmatprep.subr.bf16.mxu0 0
        %1117 = vmatpush2.bf16.msra.mxu0 0
        %1118 = vmatprep.mubr.bf16.mxu0 0
        %1119 = vmatmul.mubr.bf16.gmra.mxu0 %v1072
        %v1120 = vpop.f32.mrf.mxu0
        %v1121 = vadd.f32 0.0, %v1120
        %v1122 = vpop.f32.mrf.mxu0
        %v1123 = vpop.f32.mrf.mxu0
        %v1124 = vadd.f32 0.0, %v1123
        %v1125 = vpop.f32.mrf.mxu0
        %1126 = vmatprep.mubr.bf16.mxu0 0
        %1127 = vmatmul.mubr.bf16.gmra.mxu0 %v1075
        %v1128 = vpop.f32.mrf.mxu0
        %v1129 = vadd.f32 0.0, %v1128
        %v1130 = vpop.f32.mrf.mxu0
        %v1131 = vpop.f32.mrf.mxu0
        %v1132 = vadd.f32 0.0, %v1131
        %v1133 = vpop.f32.mrf.mxu0
        %1134 = vmatprep.mubr.bf16.mxu0 0
        %1135 = vmatmul.mubr.bf16.gmra.mxu0 %v1078
        %v1136 = vpop.f32.mrf.mxu0
        %v1137 = vadd.f32 0.0, %v1136
        %v1138 = vpop.f32.mrf.mxu0
        %v1139 = vpop.f32.mrf.mxu0
        %v1140 = vadd.f32 0.0, %v1139
        %v1141 = vpop.f32.mrf.mxu0
        %1142 = vmatprep.mubr.bf16.mxu0 0
        %1143 = vmatmul.mubr.bf16.gmra.mxu0 %v1081
        %v1144 = vpop.f32.mrf.mxu0
        %v1145 = vadd.f32 0.0, %v1144
        %v1146 = vpop.f32.mrf.mxu0
        %v1147 = vpop.f32.mrf.mxu0
        %v1148 = vadd.f32 0.0, %v1147
        %v1149 = vpop.f32.mrf.mxu0
        %1150 = vdwg.mxu0
        %v1151 = vadd.f32 %v1049, %v1121
        %v1152 = vadd.f32 %v1050, %v1124
        %v1153 = vadd.f32 %v1051, %v1129
        %v1154 = vadd.f32 %v1052, %v1132
        %v1155 = vadd.f32 %v1053, %v1137
        %v1156 = vadd.f32 %v1054, %v1140
        %v1157 = vadd.f32 %v1055, %v1145
        %v1158 = vadd.f32 %v1056, %v1148
        %v1159 = vld [vmem:[%s554] sm:$0xff]
        %v1160 = vld [vmem:[%s554 + $0x10] sm:$0xff]
        %v1161 = vld [vmem:[%s554 + $0x20] sm:$0xff]
        %v1162 = vld [vmem:[%s554 + $0x30] sm:$0xff]
        %v1163 = vld [vmem:[%s554 + $0x40] sm:$0xff]
        %v1164 = vld [vmem:[%s554 + $0x50] sm:$0xff]
        %v1165 = vld [vmem:[%s554 + $0x60] sm:$0xff]
        %v1166 = vld [vmem:[%s554 + $0x70] sm:$0xff]
        %v1167 = vpack.c.bf16 %v1160, %v1159
        %v1168 = vpack.c.bf16 %v1162, %v1161
        %v1169 = vpack.c.bf16 %v1164, %v1163
        %v1170 = vpack.c.bf16 %v1166, %v1165
        %s1171 = scalar_lea.vmem %s3, 12
        %v1172 = vld [vmem:[%s1171] sm:$0x3]
        %v1174 = vsel %vm344, %v1167, 0
        %v1177 = vsel %vm344, %v1168, 0
        %v1180 = vsel %vm344, %v1169, 0
        %v1183 = vsel %vm344, %v1170, 0
        %v1186 = vsel %vm602, %v1172, 0
        %1188 = vmatprep.subr.bf16.mxu0 0
        %1189 = vmatpush1.bf16.msra.mxu0 0
        %1190 = vmatprep.subr.bf16.mxu0 0
        %1191 = vmatpush1.bf16.msra.mxu0 0
        %1192 = vmatprep.subr.bf16.mxu0 0
        %1193 = vmatpush1.bf16.msra.mxu0 0
        %1194 = vmatprep.subr.bf16.mxu0 0
        %1195 = vmatpush1.bf16.msra.mxu0 0
        %1196 = vmatprep.subr.bf16.mxu0 0
        %1197 = vmatpush1.bf16.msra.mxu0 0
        %1198 = vmatprep.subr.bf16.mxu0 0
        %1199 = vmatpush1.bf16.msra.mxu0 0
        %1200 = vmatprep.subr.bf16.mxu0 0
        %1201 = vmatpush1.bf16.msra.mxu0 0
        %1202 = vmatprep.subr.bf16.mxu0 0
        %1203 = vmatpush1.bf16.msra.mxu0 %v1186
        %1204 = vmatprep.subr.bf16.mxu0 0
        %1205 = vmatpush2.bf16.msra.mxu0 0
        %1206 = vmatprep.subr.bf16.mxu0 0
        %1207 = vmatpush2.bf16.msra.mxu0 0
        %1208 = vmatprep.subr.bf16.mxu0 0
        %1209 = vmatpush2.bf16.msra.mxu0 0
        %1210 = vmatprep.subr.bf16.mxu0 0
        %1211 = vmatpush2.bf16.msra.mxu0 0
        %1212 = vmatprep.subr.bf16.mxu0 0
        %1213 = vmatpush2.bf16.msra.mxu0 0
        %1214 = vmatprep.subr.bf16.mxu0 0
        %1215 = vmatpush2.bf16.msra.mxu0 0
        %1216 = vmatprep.subr.bf16.mxu0 0
        %1217 = vmatpush2.bf16.msra.mxu0 0
        %1218 = vmatprep.subr.bf16.mxu0 0
        %1219 = vmatpush2.bf16.msra.mxu0 0
        %1220 = vmatprep.mubr.bf16.mxu0 0
        %1221 = vmatmul.mubr.bf16.gmra.mxu0 %v1174
        %v1222 = vpop.f32.mrf.mxu0
        %v1223 = vadd.f32 0.0, %v1222
        %v1224 = vpop.f32.mrf.mxu0
        %v1225 = vpop.f32.mrf.mxu0
        %v1226 = vadd.f32 0.0, %v1225
        %v1227 = vpop.f32.mrf.mxu0
        %1228 = vmatprep.mubr.bf16.mxu0 0
        %1229 = vmatmul.mubr.bf16.gmra.mxu0 %v1177
        %v1230 = vpop.f32.mrf.mxu0
        %v1231 = vadd.f32 0.0, %v1230
        %v1232 = vpop.f32.mrf.mxu0
        %v1233 = vpop.f32.mrf.mxu0
        %v1234 = vadd.f32 0.0, %v1233
        %v1235 = vpop.f32.mrf.mxu0
        %1236 = vmatprep.mubr.bf16.mxu0 0
        %1237 = vmatmul.mubr.bf16.gmra.mxu0 %v1180
        %v1238 = vpop.f32.mrf.mxu0
        %v1239 = vadd.f32 0.0, %v1238
        %v1240 = vpop.f32.mrf.mxu0
        %v1241 = vpop.f32.mrf.mxu0
        %v1242 = vadd.f32 0.0, %v1241
        %v1243 = vpop.f32.mrf.mxu0
        %1244 = vmatprep.mubr.bf16.mxu0 0
        %1245 = vmatmul.mubr.bf16.gmra.mxu0 %v1183
        %v1246 = vpop.f32.mrf.mxu0
        %v1247 = vadd.f32 0.0, %v1246
        %v1248 = vpop.f32.mrf.mxu0
        %v1249 = vpop.f32.mrf.mxu0
        %v1250 = vadd.f32 0.0, %v1249
        %v1251 = vpop.f32.mrf.mxu0
        %1252 = vdwg.mxu0
        %v1253 = vadd.f32 %v1151, %v1223
        %v1254 = vadd.f32 %v1152, %v1226
        %v1255 = vadd.f32 %v1153, %v1231
        %v1256 = vadd.f32 %v1154, %v1234
        %v1257 = vadd.f32 %v1155, %v1239
        %v1258 = vadd.f32 %v1156, %v1242
        %v1259 = vadd.f32 %v1157, %v1247
        %v1260 = vadd.f32 %v1158, %v1250
        %v1261 = vld [vmem:[%s512 + $0x1] sm:$0xff]
        %v1262 = vld [vmem:[%s512 + $0x11] sm:$0xff]
        %v1263 = vld [vmem:[%s512 + $0x21] sm:$0xff]
        %v1264 = vld [vmem:[%s512 + $0x31] sm:$0xff]
        %v1265 = vld [vmem:[%s512 + $0x41] sm:$0xff]
        %v1266 = vld [vmem:[%s512 + $0x51] sm:$0xff]
        %v1267 = vld [vmem:[%s512 + $0x61] sm:$0xff]
        %v1268 = vld [vmem:[%s512 + $0x71] sm:$0xff]
        %v1269 = vpack.c.bf16 %v1262, %v1261
        %v1270 = vpack.c.bf16 %v1264, %v1263
        %v1271 = vpack.c.bf16 %v1266, %v1265
        %v1272 = vpack.c.bf16 %v1268, %v1267
        %s1273 = scalar_lea.vmem %s3, 14
        %v1274 = vld [vmem:[%s1273] sm:$0x3]
        %v1276 = vsel %vm344, %v1269, 0
        %v1279 = vsel %vm344, %v1270, 0
        %v1282 = vsel %vm344, %v1271, 0
        %v1285 = vsel %vm344, %v1272, 0
        %v1288 = vsel %vm602, %v1274, 0
        %1290 = vmatprep.subr.bf16.mxu0 0
        %1291 = vmatpush1.bf16.msra.mxu0 0
        %1292 = vmatprep.subr.bf16.mxu0 0
        %1293 = vmatpush1.bf16.msra.mxu0 0
        %1294 = vmatprep.subr.bf16.mxu0 0
        %1295 = vmatpush1.bf16.msra.mxu0 0
        %1296 = vmatprep.subr.bf16.mxu0 0
        %1297 = vmatpush1.bf16.msra.mxu0 0
        %1298 = vmatprep.subr.bf16.mxu0 0
        %1299 = vmatpush1.bf16.msra.mxu0 0
        %1300 = vmatprep.subr.bf16.mxu0 0
        %1301 = vmatpush1.bf16.msra.mxu0 0
        %1302 = vmatprep.subr.bf16.mxu0 0
        %1303 = vmatpush1.bf16.msra.mxu0 0
        %1304 = vmatprep.subr.bf16.mxu0 0
        %1305 = vmatpush1.bf16.msra.mxu0 %v1288
        %1306 = vmatprep.subr.bf16.mxu0 0
        %1307 = vmatpush2.bf16.msra.mxu0 0
        %1308 = vmatprep.subr.bf16.mxu0 0
        %1309 = vmatpush2.bf16.msra.mxu0 0
        %1310 = vmatprep.subr.bf16.mxu0 0
        %1311 = vmatpush2.bf16.msra.mxu0 0
        %1312 = vmatprep.subr.bf16.mxu0 0
        %1313 = vmatpush2.bf16.msra.mxu0 0
        %1314 = vmatprep.subr.bf16.mxu0 0
        %1315 = vmatpush2.bf16.msra.mxu0 0
        %1316 = vmatprep.subr.bf16.mxu0 0
        %1317 = vmatpush2.bf16.msra.mxu0 0
        %1318 = vmatprep.subr.bf16.mxu0 0
        %1319 = vmatpush2.bf16.msra.mxu0 0
        %1320 = vmatprep.subr.bf16.mxu0 0
        %1321 = vmatpush2.bf16.msra.mxu0 0
        %1322 = vmatprep.mubr.bf16.mxu0 0
        %1323 = vmatmul.mubr.bf16.gmra.mxu0 %v1276
        %v1324 = vpop.f32.mrf.mxu0
        %v1325 = vadd.f32 0.0, %v1324
        %v1326 = vpop.f32.mrf.mxu0
        %v1327 = vpop.f32.mrf.mxu0
        %v1328 = vadd.f32 0.0, %v1327
        %v1329 = vpop.f32.mrf.mxu0
        %1330 = vmatprep.mubr.bf16.mxu0 0
        %1331 = vmatmul.mubr.bf16.gmra.mxu0 %v1279
        %v1332 = vpop.f32.mrf.mxu0
        %v1333 = vadd.f32 0.0, %v1332
        %v1334 = vpop.f32.mrf.mxu0
        %v1335 = vpop.f32.mrf.mxu0
        %v1336 = vadd.f32 0.0, %v1335
        %v1337 = vpop.f32.mrf.mxu0
        %1338 = vmatprep.mubr.bf16.mxu0 0
        %1339 = vmatmul.mubr.bf16.gmra.mxu0 %v1282
        %v1340 = vpop.f32.mrf.mxu0
        %v1341 = vadd.f32 0.0, %v1340
        %v1342 = vpop.f32.mrf.mxu0
        %v1343 = vpop.f32.mrf.mxu0
        %v1344 = vadd.f32 0.0, %v1343
        %v1345 = vpop.f32.mrf.mxu0
        %1346 = vmatprep.mubr.bf16.mxu0 0
        %1347 = vmatmul.mubr.bf16.gmra.mxu0 %v1285
        %v1348 = vpop.f32.mrf.mxu0
        %v1349 = vadd.f32 0.0, %v1348
        %v1350 = vpop.f32.mrf.mxu0
        %v1351 = vpop.f32.mrf.mxu0
        %v1352 = vadd.f32 0.0, %v1351
        %v1353 = vpop.f32.mrf.mxu0
        %1354 = vdwg.mxu0
        %v1355 = vadd.f32 %v1253, %v1325
        %v1356 = vadd.f32 %v1254, %v1328
        %v1357 = vadd.f32 %v1255, %v1333
        %v1358 = vadd.f32 %v1256, %v1336
        %v1359 = vadd.f32 %v1257, %v1341
        %v1360 = vadd.f32 %v1258, %v1344
        %v1361 = vadd.f32 %v1259, %v1349
        %v1362 = vadd.f32 %v1260, %v1352
        %v1363 = vld [vmem:[%s554 + $0x1] sm:$0xff]
        %v1364 = vld [vmem:[%s554 + $0x11] sm:$0xff]
        %v1365 = vld [vmem:[%s554 + $0x21] sm:$0xff]
        %v1366 = vld [vmem:[%s554 + $0x31] sm:$0xff]
        %v1367 = vld [vmem:[%s554 + $0x41] sm:$0xff]
        %v1368 = vld [vmem:[%s554 + $0x51] sm:$0xff]
        %v1369 = vld [vmem:[%s554 + $0x61] sm:$0xff]
        %v1370 = vld [vmem:[%s554 + $0x71] sm:$0xff]
        %v1371 = vpack.c.bf16 %v1364, %v1363
        %v1372 = vpack.c.bf16 %v1366, %v1365
        %v1373 = vpack.c.bf16 %v1368, %v1367
        %v1374 = vpack.c.bf16 %v1370, %v1369
        %s1375 = scalar_lea.vmem %s3, 16
        %v1376 = vld [vmem:[%s1375] sm:$0x3]
        %v1378 = vsel %vm344, %v1371, 0
        %v1381 = vsel %vm344, %v1372, 0
        %v1384 = vsel %vm344, %v1373, 0
        %v1387 = vsel %vm344, %v1374, 0
        %v1390 = vsel %vm602, %v1376, 0
        %1392 = vmatprep.subr.bf16.mxu0 0
        %1393 = vmatpush1.bf16.msra.mxu0 0
        %1394 = vmatprep.subr.bf16.mxu0 0
        %1395 = vmatpush1.bf16.msra.mxu0 0
        %1396 = vmatprep.subr.bf16.mxu0 0
        %1397 = vmatpush1.bf16.msra.mxu0 0
        %1398 = vmatprep.subr.bf16.mxu0 0
        %1399 = vmatpush1.bf16.msra.mxu0 0
        %1400 = vmatprep.subr.bf16.mxu0 0
        %1401 = vmatpush1.bf16.msra.mxu0 0
        %1402 = vmatprep.subr.bf16.mxu0 0
        %1403 = vmatpush1.bf16.msra.mxu0 0
        %1404 = vmatprep.subr.bf16.mxu0 0
        %1405 = vmatpush1.bf16.msra.mxu0 0
        %1406 = vmatprep.subr.bf16.mxu0 0
        %1407 = vmatpush1.bf16.msra.mxu0 %v1390
        %1408 = vmatprep.subr.bf16.mxu0 0
        %1409 = vmatpush2.bf16.msra.mxu0 0
        %1410 = vmatprep.subr.bf16.mxu0 0
        %1411 = vmatpush2.bf16.msra.mxu0 0
        %1412 = vmatprep.subr.bf16.mxu0 0
        %1413 = vmatpush2.bf16.msra.mxu0 0
        %1414 = vmatprep.subr.bf16.mxu0 0
        %1415 = vmatpush2.bf16.msra.mxu0 0
        %1416 = vmatprep.subr.bf16.mxu0 0
        %1417 = vmatpush2.bf16.msra.mxu0 0
        %1418 = vmatprep.subr.bf16.mxu0 0
        %1419 = vmatpush2.bf16.msra.mxu0 0
        %1420 = vmatprep.subr.bf16.mxu0 0
        %1421 = vmatpush2.bf16.msra.mxu0 0
        %1422 = vmatprep.subr.bf16.mxu0 0
        %1423 = vmatpush2.bf16.msra.mxu0 0
        %1424 = vmatprep.mubr.bf16.mxu0 0
        %1425 = vmatmul.mubr.bf16.gmra.mxu0 %v1378
        %v1426 = vpop.f32.mrf.mxu0
        %v1427 = vadd.f32 0.0, %v1426
        %v1428 = vpop.f32.mrf.mxu0
        %v1429 = vpop.f32.mrf.mxu0
        %v1430 = vadd.f32 0.0, %v1429
        %v1431 = vpop.f32.mrf.mxu0
        %1432 = vmatprep.mubr.bf16.mxu0 0
        %1433 = vmatmul.mubr.bf16.gmra.mxu0 %v1381
        %v1434 = vpop.f32.mrf.mxu0
        %v1435 = vadd.f32 0.0, %v1434
        %v1436 = vpop.f32.mrf.mxu0
        %v1437 = vpop.f32.mrf.mxu0
        %v1438 = vadd.f32 0.0, %v1437
        %v1439 = vpop.f32.mrf.mxu0
        %1440 = vmatprep.mubr.bf16.mxu0 0
        %1441 = vmatmul.mubr.bf16.gmra.mxu0 %v1384
        %v1442 = vpop.f32.mrf.mxu0
        %v1443 = vadd.f32 0.0, %v1442
        %v1444 = vpop.f32.mrf.mxu0
        %v1445 = vpop.f32.mrf.mxu0
        %v1446 = vadd.f32 0.0, %v1445
        %v1447 = vpop.f32.mrf.mxu0
        %1448 = vmatprep.mubr.bf16.mxu0 0
        %1449 = vmatmul.mubr.bf16.gmra.mxu0 %v1387
        %v1450 = vpop.f32.mrf.mxu0
        %v1451 = vadd.f32 0.0, %v1450
        %v1452 = vpop.f32.mrf.mxu0
        %v1453 = vpop.f32.mrf.mxu0
        %v1454 = vadd.f32 0.0, %v1453
        %v1455 = vpop.f32.mrf.mxu0
        %1456 = vdwg.mxu0
        %v1457 = vadd.f32 %v1355, %v1427
        %v1458 = vadd.f32 %v1356, %v1430
        %v1459 = vadd.f32 %v1357, %v1435
        %v1460 = vadd.f32 %v1358, %v1438
        %v1461 = vadd.f32 %v1359, %v1443
        %v1462 = vadd.f32 %v1360, %v1446
        %v1463 = vadd.f32 %v1361, %v1451
        %v1464 = vadd.f32 %v1362, %v1454
        %v1465 = vld [vmem:[%s4] sm:$0x1]
        %v1467 = vlaneseq
        %v1468 = vshrl.u32 %v1467, 7
        %v1469 = vsub.s32 0, %v1468
        %v1470 = vrot.slane %v1465, %v1469
        %v1472 = vmul.f32 %v1457, %v1470
        %v1473 = vmul.f32 %v1458, %v1470
        %v1474 = vmul.f32 %v1459, %v1470
        %v1475 = vmul.f32 %v1460, %v1470
        %v1476 = vmul.f32 %v1461, %v1470
        %v1477 = vmul.f32 %v1462, %v1470
        %v1478 = vmul.f32 %v1463, %v1470
        %v1479 = vmul.f32 %v1464, %v1470
        %v1480 = vld [vmem:[%s5] sm:$0x1]
        %v1482 = vlaneseq
        %v1483 = vshrl.u32 %v1482, 7
        %v1484 = vsub.s32 0, %v1483
        %v1485 = vrot.slane %v1480, %v1484
        %v1487 = vadd.f32 %v1472, %v1485
        %v1488 = vadd.f32 %v1473, %v1485
        %v1489 = vadd.f32 %v1474, %v1485
        %v1490 = vadd.f32 %v1475, %v1485
        %v1491 = vadd.f32 %v1476, %v1485
        %v1492 = vadd.f32 %v1477, %v1485
        %v1493 = vadd.f32 %v1478, %v1485
        %v1494 = vadd.f32 %v1479, %v1485
        %v1495 = vmax.f32 %v1487, 0.0
        %v1496 = vmax.f32 %v1488, 0.0
        %v1497 = vmax.f32 %v1489, 0.0
        %v1498 = vmax.f32 %v1490, 0.0
        %v1499 = vmax.f32 %v1491, 0.0
        %v1500 = vmax.f32 %v1492, 0.0
        %v1501 = vmax.f32 %v1493, 0.0
        %v1502 = vmax.f32 %v1494, 0.0
        %s1503 = scalar_lea.vmem [#allocation3], 16
        %1504 = vst.msk [vmem:[%s1503 + $0x1] sm:$0xff] %vm356, %v1495
        %1505 = vst.msk [vmem:[%s1503 + $0x11] sm:$0xff] %vm356, %v1496
        %1506 = vst.msk [vmem:[%s1503 + $0x21] sm:$0xff] %vm356, %v1497
        %1507 = vst.msk [vmem:[%s1503 + $0x31] sm:$0xff] %vm356, %v1498
        %1508 = vst.msk [vmem:[%s1503 + $0x41] sm:$0xff] %vm356, %v1499
        %1509 = vst.msk [vmem:[%s1503 + $0x51] sm:$0xff] %vm356, %v1500
        %1510 = vst.msk [vmem:[%s1503 + $0x61] sm:$0xff] %vm356, %v1501
        %1511 = vst.msk [vmem:[%s1503 + $0x71] sm:$0xff] %vm356, %v1502
        %v1512 = vld [vmem:[#allocation3] sm:$0xff]
        %v1513 = vld [vmem:[#allocation3 + $0x10] sm:$0xff]
        %v1514 = vld [vmem:[#allocation3 + $0x20] sm:$0xff]
        %v1515 = vld [vmem:[#allocation3 + $0x30] sm:$0xff]
        %v1516 = vld [vmem:[#allocation3 + $0x40] sm:$0xff]
        %v1517 = vld [vmem:[#allocation3 + $0x50] sm:$0xff]
        %v1518 = vld [vmem:[#allocation3 + $0x60] sm:$0xff]
        %v1519 = vld [vmem:[#allocation3 + $0x70] sm:$0xff]
        %v1520 = vpack.c.bf16 %v1513, %v1512
        %v1521 = vpack.c.bf16 %v1515, %v1514
        %v1522 = vpack.c.bf16 %v1517, %v1516
        %v1523 = vpack.c.bf16 %v1519, %v1518
        %v1524 = vld [vmem:[%s6] sm:$0xf]
        %v1525 = vld [vmem:[#allocation3 + $0x1] sm:$0xff]
        %v1526 = vld [vmem:[#allocation3 + $0x11] sm:$0xff]
        %v1527 = vld [vmem:[#allocation3 + $0x21] sm:$0xff]
        %v1528 = vld [vmem:[#allocation3 + $0x31] sm:$0xff]
        %v1529 = vld [vmem:[#allocation3 + $0x41] sm:$0xff]
        %v1530 = vld [vmem:[#allocation3 + $0x51] sm:$0xff]
        %v1531 = vld [vmem:[#allocation3 + $0x61] sm:$0xff]
        %v1532 = vld [vmem:[#allocation3 + $0x71] sm:$0xff]
        %v1533 = vpack.c.bf16 %v1526, %v1525
        %v1534 = vpack.c.bf16 %v1528, %v1527
        %v1535 = vpack.c.bf16 %v1530, %v1529
        %v1536 = vpack.c.bf16 %v1532, %v1531
        %s1537 = scalar_lea.vmem %s6, 4
        %v1538 = vld [vmem:[%s1537] sm:$0xf]
        %v1540 = vsel %vm356, %v1533, 0
        %v1543 = vsel %vm356, %v1534, 0
        %v1546 = vsel %vm356, %v1535, 0
        %v1549 = vsel %vm356, %v1536, 0
        %vm1551 = vcmask 1043456
        %v1553 = vsel %vm1551, %v1538, 0
        %1555 = vmatprep.subr.bf16.mxu0 0
        %1556 = vmatpush1.bf16.msra.mxu0 0
        %1557 = vmatprep.subr.bf16.mxu0 0
        %1558 = vmatpush1.bf16.msra.mxu0 0
        %1559 = vmatprep.subr.bf16.mxu0 0
        %1560 = vmatpush1.bf16.msra.mxu0 0
        %1561 = vmatprep.subr.bf16.mxu0 0
        %1562 = vmatpush1.bf16.msra.mxu0 0
        %1563 = vmatprep.subr.bf16.mxu0 0
        %1564 = vmatpush1.bf16.msra.mxu0 0
        %1565 = vmatprep.subr.bf16.mxu0 0
        %1566 = vmatpush1.bf16.msra.mxu0 0
        %1567 = vmatprep.subr.bf16.mxu0 0
        %1568 = vmatpush1.bf16.msra.mxu0 0
        %1569 = vmatprep.subr.bf16.mxu0 0
        %1570 = vmatpush1.bf16.msra.mxu0 %v1553
        %1571 = vmatprep.subr.bf16.mxu0 0
        %1572 = vmatpush2.bf16.msra.mxu0 0
        %1573 = vmatprep.subr.bf16.mxu0 0
        %1574 = vmatpush2.bf16.msra.mxu0 0
        %1575 = vmatprep.subr.bf16.mxu0 0
        %1576 = vmatpush2.bf16.msra.mxu0 0
        %1577 = vmatprep.subr.bf16.mxu0 0
        %1578 = vmatpush2.bf16.msra.mxu0 0
        %1579 = vmatprep.subr.bf16.mxu0 0
        %1580 = vmatpush2.bf16.msra.mxu0 0
        %1581 = vmatprep.subr.bf16.mxu0 0
        %1582 = vmatpush2.bf16.msra.mxu0 0
        %1583 = vmatprep.subr.bf16.mxu0 0
        %1584 = vmatpush2.bf16.msra.mxu0 0
        %1585 = vmatprep.subr.bf16.mxu0 0
        %1586 = vmatpush2.bf16.msra.mxu0 0
        %1587 = vmatprep.mubr.bf16.mxu0 0
        %1588 = vmatmul.mubr.bf16.gmra.mxu0 %v1540
        %v1589 = vpop.f32.mrf.mxu0
        %v1590 = vadd.f32 0.0, %v1589
        %v1591 = vpop.f32.mrf.mxu0
        %v1592 = vpop.f32.mrf.mxu0
        %v1593 = vadd.f32 0.0, %v1592
        %v1594 = vpop.f32.mrf.mxu0
        %1595 = vmatprep.mubr.bf16.mxu0 0
        %1596 = vmatmul.mubr.bf16.gmra.mxu0 %v1543
        %v1597 = vpop.f32.mrf.mxu0
        %v1598 = vadd.f32 0.0, %v1597
        %v1599 = vpop.f32.mrf.mxu0
        %v1600 = vpop.f32.mrf.mxu0
        %v1601 = vadd.f32 0.0, %v1600
        %v1602 = vpop.f32.mrf.mxu0
        %1603 = vmatprep.mubr.bf16.mxu0 0
        %1604 = vmatmul.mubr.bf16.gmra.mxu0 %v1546
        %v1605 = vpop.f32.mrf.mxu0
        %v1606 = vadd.f32 0.0, %v1605
        %v1607 = vpop.f32.mrf.mxu0
        %v1608 = vpop.f32.mrf.mxu0
        %v1609 = vadd.f32 0.0, %v1608
        %v1610 = vpop.f32.mrf.mxu0
        %1611 = vmatprep.mubr.bf16.mxu0 0
        %1612 = vmatmul.mubr.bf16.gmra.mxu0 %v1549
        %v1613 = vpop.f32.mrf.mxu0
        %v1614 = vadd.f32 0.0, %v1613
        %v1615 = vpop.f32.mrf.mxu0
        %v1616 = vpop.f32.mrf.mxu0
        %v1617 = vadd.f32 0.0, %v1616
        %v1618 = vpop.f32.mrf.mxu0
        %1619 = vdwg.mxu0
        %v1621 = vsel %vm356, %v1520, 0
        %v1624 = vsel %vm356, %v1521, 0
        %v1627 = vsel %vm356, %v1522, 0
        %v1630 = vsel %vm356, %v1523, 0
        %v1633 = vsel %vm1551, %v1524, 0
        %1635 = vmatprep.subr.bf16.mxu0 0
        %1636 = vmatpush1.bf16.msra.mxu0 0
        %1637 = vmatprep.subr.bf16.mxu0 0
        %1638 = vmatpush1.bf16.msra.mxu0 0
        %1639 = vmatprep.subr.bf16.mxu0 0
        %1640 = vmatpush1.bf16.msra.mxu0 0
        %1641 = vmatprep.subr.bf16.mxu0 0
        %1642 = vmatpush1.bf16.msra.mxu0 0
        %1643 = vmatprep.subr.bf16.mxu0 0
        %1644 = vmatpush1.bf16.msra.mxu0 0
        %1645 = vmatprep.subr.bf16.mxu0 0
        %1646 = vmatpush1.bf16.msra.mxu0 0
        %1647 = vmatprep.subr.bf16.mxu0 0
        %1648 = vmatpush1.bf16.msra.mxu0 0
        %1649 = vmatprep.subr.bf16.mxu0 0
        %1650 = vmatpush1.bf16.msra.mxu0 %v1633
        %1651 = vmatprep.subr.bf16.mxu0 0
        %1652 = vmatpush2.bf16.msra.mxu0 0
        %1653 = vmatprep.subr.bf16.mxu0 0
        %1654 = vmatpush2.bf16.msra.mxu0 0
        %1655 = vmatprep.subr.bf16.mxu0 0
        %1656 = vmatpush2.bf16.msra.mxu0 0
        %1657 = vmatprep.subr.bf16.mxu0 0
        %1658 = vmatpush2.bf16.msra.mxu0 0
        %1659 = vmatprep.subr.bf16.mxu0 0
        %1660 = vmatpush2.bf16.msra.mxu0 0
        %1661 = vmatprep.subr.bf16.mxu0 0
        %1662 = vmatpush2.bf16.msra.mxu0 0
        %1663 = vmatprep.subr.bf16.mxu0 0
        %1664 = vmatpush2.bf16.msra.mxu0 0
        %1665 = vmatprep.subr.bf16.mxu0 0
        %1666 = vmatpush2.bf16.msra.mxu0 0
        %1667 = vmatprep.mubr.bf16.mxu0 0
        %1668 = vmatmul.mubr.bf16.gmra.mxu0 %v1621
        %v1669 = vpop.f32.mrf.mxu0
        %v1670 = vadd.f32 %v1590, %v1669
        %v1671 = vpop.f32.mrf.mxu0
        %v1672 = vpop.f32.mrf.mxu0
        %v1673 = vadd.f32 %v1593, %v1672
        %v1674 = vpop.f32.mrf.mxu0
        %1675 = vmatprep.mubr.bf16.mxu0 0
        %1676 = vmatmul.mubr.bf16.gmra.mxu0 %v1624
        %v1677 = vpop.f32.mrf.mxu0
        %v1678 = vadd.f32 %v1598, %v1677
        %v1679 = vpop.f32.mrf.mxu0
        %v1680 = vpop.f32.mrf.mxu0
        %v1681 = vadd.f32 %v1601, %v1680
        %v1682 = vpop.f32.mrf.mxu0
        %1683 = vmatprep.mubr.bf16.mxu0 0
        %1684 = vmatmul.mubr.bf16.gmra.mxu0 %v1627
        %v1685 = vpop.f32.mrf.mxu0
        %v1686 = vadd.f32 %v1606, %v1685
        %v1687 = vpop.f32.mrf.mxu0
        %v1688 = vpop.f32.mrf.mxu0
        %v1689 = vadd.f32 %v1609, %v1688
        %v1690 = vpop.f32.mrf.mxu0
        %1691 = vmatprep.mubr.bf16.mxu0 0
        %1692 = vmatmul.mubr.bf16.gmra.mxu0 %v1630
        %v1693 = vpop.f32.mrf.mxu0
        %v1694 = vadd.f32 %v1614, %v1693
        %v1695 = vpop.f32.mrf.mxu0
        %v1696 = vpop.f32.mrf.mxu0
        %v1697 = vadd.f32 %v1617, %v1696
        %v1698 = vpop.f32.mrf.mxu0
        %1699 = vdwg.mxu0
        %v1700 = vld [vmem:[#allocation3 + $0x2] sm:$0xff]
        %v1701 = vld [vmem:[#allocation3 + $0x12] sm:$0xff]
        %v1702 = vld [vmem:[#allocation3 + $0x22] sm:$0xff]
        %v1703 = vld [vmem:[#allocation3 + $0x32] sm:$0xff]
        %v1704 = vld [vmem:[#allocation3 + $0x42] sm:$0xff]
        %v1705 = vld [vmem:[#allocation3 + $0x52] sm:$0xff]
        %v1706 = vld [vmem:[#allocation3 + $0x62] sm:$0xff]
        %v1707 = vld [vmem:[#allocation3 + $0x72] sm:$0xff]
        %v1708 = vpack.c.bf16 %v1701, %v1700
        %v1709 = vpack.c.bf16 %v1703, %v1702
        %v1710 = vpack.c.bf16 %v1705, %v1704
        %v1711 = vpack.c.bf16 %v1707, %v1706
        %s1712 = scalar_lea.vmem %s6, 8
        %v1713 = vld [vmem:[%s1712] sm:$0xf]
        %v1715 = vsel %vm356, %v1708, 0
        %v1718 = vsel %vm356, %v1709, 0
        %v1721 = vsel %vm356, %v1710, 0
        %v1724 = vsel %vm356, %v1711, 0
        %v1727 = vsel %vm1551, %v1713, 0
        %1729 = vmatprep.subr.bf16.mxu0 0
        %1730 = vmatpush1.bf16.msra.mxu0 0
        %1731 = vmatprep.subr.bf16.mxu0 0
        %1732 = vmatpush1.bf16.msra.mxu0 0
        %1733 = vmatprep.subr.bf16.mxu0 0
        %1734 = vmatpush1.bf16.msra.mxu0 0
        %1735 = vmatprep.subr.bf16.mxu0 0
        %1736 = vmatpush1.bf16.msra.mxu0 0
        %1737 = vmatprep.subr.bf16.mxu0 0
        %1738 = vmatpush1.bf16.msra.mxu0 0
        %1739 = vmatprep.subr.bf16.mxu0 0
        %1740 = vmatpush1.bf16.msra.mxu0 0
        %1741 = vmatprep.subr.bf16.mxu0 0
        %1742 = vmatpush1.bf16.msra.mxu0 0
        %1743 = vmatprep.subr.bf16.mxu0 0
        %1744 = vmatpush1.bf16.msra.mxu0 %v1727
        %1745 = vmatprep.subr.bf16.mxu0 0
        %1746 = vmatpush2.bf16.msra.mxu0 0
        %1747 = vmatprep.subr.bf16.mxu0 0
        %1748 = vmatpush2.bf16.msra.mxu0 0
        %1749 = vmatprep.subr.bf16.mxu0 0
        %1750 = vmatpush2.bf16.msra.mxu0 0
        %1751 = vmatprep.subr.bf16.mxu0 0
        %1752 = vmatpush2.bf16.msra.mxu0 0
        %1753 = vmatprep.subr.bf16.mxu0 0
        %1754 = vmatpush2.bf16.msra.mxu0 0
        %1755 = vmatprep.subr.bf16.mxu0 0
        %1756 = vmatpush2.bf16.msra.mxu0 0
        %1757 = vmatprep.subr.bf16.mxu0 0
        %1758 = vmatpush2.bf16.msra.mxu0 0
        %1759 = vmatprep.subr.bf16.mxu0 0
        %1760 = vmatpush2.bf16.msra.mxu0 0
        %1761 = vmatprep.mubr.bf16.mxu0 0
        %1762 = vmatmul.mubr.bf16.gmra.mxu0 %v1715
        %v1763 = vpop.f32.mrf.mxu0
        %v1764 = vadd.f32 0.0, %v1763
        %v1765 = vpop.f32.mrf.mxu0
        %v1766 = vpop.f32.mrf.mxu0
        %v1767 = vadd.f32 0.0, %v1766
        %v1768 = vpop.f32.mrf.mxu0
        %1769 = vmatprep.mubr.bf16.mxu0 0
        %1770 = vmatmul.mubr.bf16.gmra.mxu0 %v1718
        %v1771 = vpop.f32.mrf.mxu0
        %v1772 = vadd.f32 0.0, %v1771
        %v1773 = vpop.f32.mrf.mxu0
        %v1774 = vpop.f32.mrf.mxu0
        %v1775 = vadd.f32 0.0, %v1774
        %v1776 = vpop.f32.mrf.mxu0
        %1777 = vmatprep.mubr.bf16.mxu0 0
        %1778 = vmatmul.mubr.bf16.gmra.mxu0 %v1721
        %v1779 = vpop.f32.mrf.mxu0
        %v1780 = vadd.f32 0.0, %v1779
        %v1781 = vpop.f32.mrf.mxu0
        %v1782 = vpop.f32.mrf.mxu0
        %v1783 = vadd.f32 0.0, %v1782
        %v1784 = vpop.f32.mrf.mxu0
        %1785 = vmatprep.mubr.bf16.mxu0 0
        %1786 = vmatmul.mubr.bf16.gmra.mxu0 %v1724
        %v1787 = vpop.f32.mrf.mxu0
        %v1788 = vadd.f32 0.0, %v1787
        %v1789 = vpop.f32.mrf.mxu0
        %v1790 = vpop.f32.mrf.mxu0
        %v1791 = vadd.f32 0.0, %v1790
        %v1792 = vpop.f32.mrf.mxu0
        %1793 = vdwg.mxu0
        %v1794 = vadd.f32 %v1670, %v1764
        %v1795 = vadd.f32 %v1673, %v1767
        %v1796 = vadd.f32 %v1678, %v1772
        %v1797 = vadd.f32 %v1681, %v1775
        %v1798 = vadd.f32 %v1686, %v1780
        %v1799 = vadd.f32 %v1689, %v1783
        %v1800 = vadd.f32 %v1694, %v1788
        %v1801 = vadd.f32 %v1697, %v1791
        %v1802 = vld [vmem:[%s1503] sm:$0xff]
        %v1803 = vld [vmem:[%s1503 + $0x10] sm:$0xff]
        %v1804 = vld [vmem:[%s1503 + $0x20] sm:$0xff]
        %v1805 = vld [vmem:[%s1503 + $0x30] sm:$0xff]
        %v1806 = vld [vmem:[%s1503 + $0x40] sm:$0xff]
        %v1807 = vld [vmem:[%s1503 + $0x50] sm:$0xff]
        %v1808 = vld [vmem:[%s1503 + $0x60] sm:$0xff]
        %v1809 = vld [vmem:[%s1503 + $0x70] sm:$0xff]
        %v1810 = vpack.c.bf16 %v1803, %v1802
        %v1811 = vpack.c.bf16 %v1805, %v1804
        %v1812 = vpack.c.bf16 %v1807, %v1806
        %v1813 = vpack.c.bf16 %v1809, %v1808
        %s1814 = scalar_lea.vmem %s6, 12
        %v1815 = vld [vmem:[%s1814] sm:$0xf]
        %v1817 = vsel %vm356, %v1810, 0
        %v1820 = vsel %vm356, %v1811, 0
        %v1823 = vsel %vm356, %v1812, 0
        %v1826 = vsel %vm356, %v1813, 0
        %v1829 = vsel %vm1551, %v1815, 0
        %1831 = vmatprep.subr.bf16.mxu0 0
        %1832 = vmatpush1.bf16.msra.mxu0 0
        %1833 = vmatprep.subr.bf16.mxu0 0
        %1834 = vmatpush1.bf16.msra.mxu0 0
        %1835 = vmatprep.subr.bf16.mxu0 0
        %1836 = vmatpush1.bf16.msra.mxu0 0
        %1837 = vmatprep.subr.bf16.mxu0 0
        %1838 = vmatpush1.bf16.msra.mxu0 0
        %1839 = vmatprep.subr.bf16.mxu0 0
        %1840 = vmatpush1.bf16.msra.mxu0 0
        %1841 = vmatprep.subr.bf16.mxu0 0
        %1842 = vmatpush1.bf16.msra.mxu0 0
        %1843 = vmatprep.subr.bf16.mxu0 0
        %1844 = vmatpush1.bf16.msra.mxu0 0
        %1845 = vmatprep.subr.bf16.mxu0 0
        %1846 = vmatpush1.bf16.msra.mxu0 %v1829
        %1847 = vmatprep.subr.bf16.mxu0 0
        %1848 = vmatpush2.bf16.msra.mxu0 0
        %1849 = vmatprep.subr.bf16.mxu0 0
        %1850 = vmatpush2.bf16.msra.mxu0 0
        %1851 = vmatprep.subr.bf16.mxu0 0
        %1852 = vmatpush2.bf16.msra.mxu0 0
        %1853 = vmatprep.subr.bf16.mxu0 0
        %1854 = vmatpush2.bf16.msra.mxu0 0
        %1855 = vmatprep.subr.bf16.mxu0 0
        %1856 = vmatpush2.bf16.msra.mxu0 0
        %1857 = vmatprep.subr.bf16.mxu0 0
        %1858 = vmatpush2.bf16.msra.mxu0 0
        %1859 = vmatprep.subr.bf16.mxu0 0
        %1860 = vmatpush2.bf16.msra.mxu0 0
        %1861 = vmatprep.subr.bf16.mxu0 0
        %1862 = vmatpush2.bf16.msra.mxu0 0
        %1863 = vmatprep.mubr.bf16.mxu0 0
        %1864 = vmatmul.mubr.bf16.gmra.mxu0 %v1817
        %v1865 = vpop.f32.mrf.mxu0
        %v1866 = vadd.f32 0.0, %v1865
        %v1867 = vpop.f32.mrf.mxu0
        %v1868 = vpop.f32.mrf.mxu0
        %v1869 = vadd.f32 0.0, %v1868
        %v1870 = vpop.f32.mrf.mxu0
        %1871 = vmatprep.mubr.bf16.mxu0 0
        %1872 = vmatmul.mubr.bf16.gmra.mxu0 %v1820
        %v1873 = vpop.f32.mrf.mxu0
        %v1874 = vadd.f32 0.0, %v1873
        %v1875 = vpop.f32.mrf.mxu0
        %v1876 = vpop.f32.mrf.mxu0
        %v1877 = vadd.f32 0.0, %v1876
        %v1878 = vpop.f32.mrf.mxu0
        %1879 = vmatprep.mubr.bf16.mxu0 0
        %1880 = vmatmul.mubr.bf16.gmra.mxu0 %v1823
        %v1881 = vpop.f32.mrf.mxu0
        %v1882 = vadd.f32 0.0, %v1881
        %v1883 = vpop.f32.mrf.mxu0
        %v1884 = vpop.f32.mrf.mxu0
        %v1885 = vadd.f32 0.0, %v1884
        %v1886 = vpop.f32.mrf.mxu0
        %1887 = vmatprep.mubr.bf16.mxu0 0
        %1888 = vmatmul.mubr.bf16.gmra.mxu0 %v1826
        %v1889 = vpop.f32.mrf.mxu0
        %v1890 = vadd.f32 0.0, %v1889
        %v1891 = vpop.f32.mrf.mxu0
        %v1892 = vpop.f32.mrf.mxu0
        %v1893 = vadd.f32 0.0, %v1892
        %v1894 = vpop.f32.mrf.mxu0
        %1895 = vdwg.mxu0
        %v1896 = vadd.f32 %v1794, %v1866
        %v1897 = vadd.f32 %v1795, %v1869
        %v1898 = vadd.f32 %v1796, %v1874
        %v1899 = vadd.f32 %v1797, %v1877
        %v1900 = vadd.f32 %v1798, %v1882
        %v1901 = vadd.f32 %v1799, %v1885
        %v1902 = vadd.f32 %v1800, %v1890
        %v1903 = vadd.f32 %v1801, %v1893
        %v1904 = vld [vmem:[%s1503 + $0x1] sm:$0xff]
        %v1905 = vld [vmem:[%s1503 + $0x11] sm:$0xff]
        %v1906 = vld [vmem:[%s1503 + $0x21] sm:$0xff]
        %v1907 = vld [vmem:[%s1503 + $0x31] sm:$0xff]
        %v1908 = vld [vmem:[%s1503 + $0x41] sm:$0xff]
        %v1909 = vld [vmem:[%s1503 + $0x51] sm:$0xff]
        %v1910 = vld [vmem:[%s1503 + $0x61] sm:$0xff]
        %v1911 = vld [vmem:[%s1503 + $0x71] sm:$0xff]
        %v1912 = vpack.c.bf16 %v1905, %v1904
        %v1913 = vpack.c.bf16 %v1907, %v1906
        %v1914 = vpack.c.bf16 %v1909, %v1908
        %v1915 = vpack.c.bf16 %v1911, %v1910
        %s1916 = scalar_lea.vmem %s6, 16
        %v1917 = vld [vmem:[%s1916] sm:$0xf]
        %v1919 = vsel %vm356, %v1912, 0
        %v1922 = vsel %vm356, %v1913, 0
        %v1925 = vsel %vm356, %v1914, 0
        %v1928 = vsel %vm356, %v1915, 0
        %v1931 = vsel %vm1551, %v1917, 0
        %1933 = vmatprep.subr.bf16.mxu0 0
        %1934 = vmatpush1.bf16.msra.mxu0 0
        %1935 = vmatprep.subr.bf16.mxu0 0
        %1936 = vmatpush1.bf16.msra.mxu0 0
        %1937 = vmatprep.subr.bf16.mxu0 0
        %1938 = vmatpush1.bf16.msra.mxu0 0
        %1939 = vmatprep.subr.bf16.mxu0 0
        %1940 = vmatpush1.bf16.msra.mxu0 0
        %1941 = vmatprep.subr.bf16.mxu0 0
        %1942 = vmatpush1.bf16.msra.mxu0 0
        %1943 = vmatprep.subr.bf16.mxu0 0
        %1944 = vmatpush1.bf16.msra.mxu0 0
        %1945 = vmatprep.subr.bf16.mxu0 0
        %1946 = vmatpush1.bf16.msra.mxu0 0
        %1947 = vmatprep.subr.bf16.mxu0 0
        %1948 = vmatpush1.bf16.msra.mxu0 %v1931
        %1949 = vmatprep.subr.bf16.mxu0 0
        %1950 = vmatpush2.bf16.msra.mxu0 0
        %1951 = vmatprep.subr.bf16.mxu0 0
        %1952 = vmatpush2.bf16.msra.mxu0 0
        %1953 = vmatprep.subr.bf16.mxu0 0
        %1954 = vmatpush2.bf16.msra.mxu0 0
        %1955 = vmatprep.subr.bf16.mxu0 0
        %1956 = vmatpush2.bf16.msra.mxu0 0
        %1957 = vmatprep.subr.bf16.mxu0 0
        %1958 = vmatpush2.bf16.msra.mxu0 0
        %1959 = vmatprep.subr.bf16.mxu0 0
        %1960 = vmatpush2.bf16.msra.mxu0 0
        %1961 = vmatprep.subr.bf16.mxu0 0
        %1962 = vmatpush2.bf16.msra.mxu0 0
        %1963 = vmatprep.subr.bf16.mxu0 0
        %1964 = vmatpush2.bf16.msra.mxu0 0
        %1965 = vmatprep.mubr.bf16.mxu0 0
        %1966 = vmatmul.mubr.bf16.gmra.mxu0 %v1919
        %v1967 = vpop.f32.mrf.mxu0
        %v1968 = vadd.f32 0.0, %v1967
        %v1969 = vpop.f32.mrf.mxu0
        %v1970 = vpop.f32.mrf.mxu0
        %v1971 = vadd.f32 0.0, %v1970
        %v1972 = vpop.f32.mrf.mxu0
        %1973 = vmatprep.mubr.bf16.mxu0 0
        %1974 = vmatmul.mubr.bf16.gmra.mxu0 %v1922
        %v1975 = vpop.f32.mrf.mxu0
        %v1976 = vadd.f32 0.0, %v1975
        %v1977 = vpop.f32.mrf.mxu0
        %v1978 = vpop.f32.mrf.mxu0
        %v1979 = vadd.f32 0.0, %v1978
        %v1980 = vpop.f32.mrf.mxu0
        %1981 = vmatprep.mubr.bf16.mxu0 0
        %1982 = vmatmul.mubr.bf16.gmra.mxu0 %v1925
        %v1983 = vpop.f32.mrf.mxu0
        %v1984 = vadd.f32 0.0, %v1983
        %v1985 = vpop.f32.mrf.mxu0
        %v1986 = vpop.f32.mrf.mxu0
        %v1987 = vadd.f32 0.0, %v1986
        %v1988 = vpop.f32.mrf.mxu0
        %1989 = vmatprep.mubr.bf16.mxu0 0
        %1990 = vmatmul.mubr.bf16.gmra.mxu0 %v1928
        %v1991 = vpop.f32.mrf.mxu0
        %v1992 = vadd.f32 0.0, %v1991
        %v1993 = vpop.f32.mrf.mxu0
        %v1994 = vpop.f32.mrf.mxu0
        %v1995 = vadd.f32 0.0, %v1994
        %v1996 = vpop.f32.mrf.mxu0
        %1997 = vdwg.mxu0
        %v1998 = vadd.f32 %v1896, %v1968
        %v1999 = vadd.f32 %v1897, %v1971
        %v2000 = vadd.f32 %v1898, %v1976
        %v2001 = vadd.f32 %v1899, %v1979
        %v2002 = vadd.f32 %v1900, %v1984
        %v2003 = vadd.f32 %v1901, %v1987
        %v2004 = vadd.f32 %v1902, %v1992
        %v2005 = vadd.f32 %v1903, %v1995
        %v2006 = vld [vmem:[%s1503 + $0x2] sm:$0xff]
        %v2007 = vld [vmem:[%s1503 + $0x12] sm:$0xff]
        %v2008 = vld [vmem:[%s1503 + $0x22] sm:$0xff]
        %v2009 = vld [vmem:[%s1503 + $0x32] sm:$0xff]
        %v2010 = vld [vmem:[%s1503 + $0x42] sm:$0xff]
        %v2011 = vld [vmem:[%s1503 + $0x52] sm:$0xff]
        %v2012 = vld [vmem:[%s1503 + $0x62] sm:$0xff]
        %v2013 = vld [vmem:[%s1503 + $0x72] sm:$0xff]
        %v2014 = vpack.c.bf16 %v2007, %v2006
        %v2015 = vpack.c.bf16 %v2009, %v2008
        %v2016 = vpack.c.bf16 %v2011, %v2010
        %v2017 = vpack.c.bf16 %v2013, %v2012
        %s2018 = scalar_lea.vmem %s6, 20
        %v2019 = vld [vmem:[%s2018] sm:$0xf]
        %v2021 = vsel %vm356, %v2014, 0
        %v2024 = vsel %vm356, %v2015, 0
        %v2027 = vsel %vm356, %v2016, 0
        %v2030 = vsel %vm356, %v2017, 0
        %v2033 = vsel %vm1551, %v2019, 0
        %2035 = vmatprep.subr.bf16.mxu0 0
        %2036 = vmatpush1.bf16.msra.mxu0 0
        %2037 = vmatprep.subr.bf16.mxu0 0
        %2038 = vmatpush1.bf16.msra.mxu0 0
        %2039 = vmatprep.subr.bf16.mxu0 0
        %2040 = vmatpush1.bf16.msra.mxu0 0
        %2041 = vmatprep.subr.bf16.mxu0 0
        %2042 = vmatpush1.bf16.msra.mxu0 0
        %2043 = vmatprep.subr.bf16.mxu0 0
        %2044 = vmatpush1.bf16.msra.mxu0 0
        %2045 = vmatprep.subr.bf16.mxu0 0
        %2046 = vmatpush1.bf16.msra.mxu0 0
        %2047 = vmatprep.subr.bf16.mxu0 0
        %2048 = vmatpush1.bf16.msra.mxu0 0
        %2049 = vmatprep.subr.bf16.mxu0 0
        %2050 = vmatpush1.bf16.msra.mxu0 %v2033
        %2051 = vmatprep.subr.bf16.mxu0 0
        %2052 = vmatpush2.bf16.msra.mxu0 0
        %2053 = vmatprep.subr.bf16.mxu0 0
        %2054 = vmatpush2.bf16.msra.mxu0 0
        %2055 = vmatprep.subr.bf16.mxu0 0
        %2056 = vmatpush2.bf16.msra.mxu0 0
        %2057 = vmatprep.subr.bf16.mxu0 0
        %2058 = vmatpush2.bf16.msra.mxu0 0
        %2059 = vmatprep.subr.bf16.mxu0 0
        %2060 = vmatpush2.bf16.msra.mxu0 0
        %2061 = vmatprep.subr.bf16.mxu0 0
        %2062 = vmatpush2.bf16.msra.mxu0 0
        %2063 = vmatprep.subr.bf16.mxu0 0
        %2064 = vmatpush2.bf16.msra.mxu0 0
        %2065 = vmatprep.subr.bf16.mxu0 0
        %2066 = vmatpush2.bf16.msra.mxu0 0
        %2067 = vmatprep.mubr.bf16.mxu0 0
        %2068 = vmatmul.mubr.bf16.gmra.mxu0 %v2021
        %v2069 = vpop.f32.mrf.mxu0
        %v2070 = vadd.f32 0.0, %v2069
        %v2071 = vpop.f32.mrf.mxu0
        %v2072 = vpop.f32.mrf.mxu0
        %v2073 = vadd.f32 0.0, %v2072
        %v2074 = vpop.f32.mrf.mxu0
        %2075 = vmatprep.mubr.bf16.mxu0 0
        %2076 = vmatmul.mubr.bf16.gmra.mxu0 %v2024
        %v2077 = vpop.f32.mrf.mxu0
        %v2078 = vadd.f32 0.0, %v2077
        %v2079 = vpop.f32.mrf.mxu0
        %v2080 = vpop.f32.mrf.mxu0
        %v2081 = vadd.f32 0.0, %v2080
        %v2082 = vpop.f32.mrf.mxu0
        %2083 = vmatprep.mubr.bf16.mxu0 0
        %2084 = vmatmul.mubr.bf16.gmra.mxu0 %v2027
        %v2085 = vpop.f32.mrf.mxu0
        %v2086 = vadd.f32 0.0, %v2085
        %v2087 = vpop.f32.mrf.mxu0
        %v2088 = vpop.f32.mrf.mxu0
        %v2089 = vadd.f32 0.0, %v2088
        %v2090 = vpop.f32.mrf.mxu0
        %2091 = vmatprep.mubr.bf16.mxu0 0
        %2092 = vmatmul.mubr.bf16.gmra.mxu0 %v2030
        %v2093 = vpop.f32.mrf.mxu0
        %v2094 = vadd.f32 0.0, %v2093
        %v2095 = vpop.f32.mrf.mxu0
        %v2096 = vpop.f32.mrf.mxu0
        %v2097 = vadd.f32 0.0, %v2096
        %v2098 = vpop.f32.mrf.mxu0
        %2099 = vdwg.mxu0
        %v2100 = vadd.f32 %v1998, %v2070
        %v2101 = vadd.f32 %v1999, %v2073
        %v2102 = vadd.f32 %v2000, %v2078
        %v2103 = vadd.f32 %v2001, %v2081
        %v2104 = vadd.f32 %v2002, %v2086
        %v2105 = vadd.f32 %v2003, %v2089
        %v2106 = vadd.f32 %v2004, %v2094
        %v2107 = vadd.f32 %v2005, %v2097
        %s2108 = scalar_lea.vmem [#allocation3], 32
        %v2109 = vld [vmem:[%s2108] sm:$0xff]
        %v2110 = vld [vmem:[%s2108 + $0x10] sm:$0xff]
        %v2111 = vld [vmem:[%s2108 + $0x20] sm:$0xff]
        %v2112 = vld [vmem:[%s2108 + $0x30] sm:$0xff]
        %v2113 = vld [vmem:[%s2108 + $0x40] sm:$0xff]
        %v2114 = vld [vmem:[%s2108 + $0x50] sm:$0xff]
        %v2115 = vld [vmem:[%s2108 + $0x60] sm:$0xff]
        %v2116 = vld [vmem:[%s2108 + $0x70] sm:$0xff]
        %v2117 = vpack.c.bf16 %v2110, %v2109
        %v2118 = vpack.c.bf16 %v2112, %v2111
        %v2119 = vpack.c.bf16 %v2114, %v2113
        %v2120 = vpack.c.bf16 %v2116, %v2115
        %s2121 = scalar_lea.vmem %s6, 24
        %v2122 = vld [vmem:[%s2121] sm:$0xf]
        %v2124 = vsel %vm356, %v2117, 0
        %v2127 = vsel %vm356, %v2118, 0
        %v2130 = vsel %vm356, %v2119, 0
        %v2133 = vsel %vm356, %v2120, 0
        %v2136 = vsel %vm1551, %v2122, 0
        %2138 = vmatprep.subr.bf16.mxu0 0
        %2139 = vmatpush1.bf16.msra.mxu0 0
        %2140 = vmatprep.subr.bf16.mxu0 0
        %2141 = vmatpush1.bf16.msra.mxu0 0
        %2142 = vmatprep.subr.bf16.mxu0 0
        %2143 = vmatpush1.bf16.msra.mxu0 0
        %2144 = vmatprep.subr.bf16.mxu0 0
        %2145 = vmatpush1.bf16.msra.mxu0 0
        %2146 = vmatprep.subr.bf16.mxu0 0
        %2147 = vmatpush1.bf16.msra.mxu0 0
        %2148 = vmatprep.subr.bf16.mxu0 0
        %2149 = vmatpush1.bf16.msra.mxu0 0
        %2150 = vmatprep.subr.bf16.mxu0 0
        %2151 = vmatpush1.bf16.msra.mxu0 0
        %2152 = vmatprep.subr.bf16.mxu0 0
        %2153 = vmatpush1.bf16.msra.mxu0 %v2136
        %2154 = vmatprep.subr.bf16.mxu0 0
        %2155 = vmatpush2.bf16.msra.mxu0 0
        %2156 = vmatprep.subr.bf16.mxu0 0
        %2157 = vmatpush2.bf16.msra.mxu0 0
        %2158 = vmatprep.subr.bf16.mxu0 0
        %2159 = vmatpush2.bf16.msra.mxu0 0
        %2160 = vmatprep.subr.bf16.mxu0 0
        %2161 = vmatpush2.bf16.msra.mxu0 0
        %2162 = vmatprep.subr.bf16.mxu0 0
        %2163 = vmatpush2.bf16.msra.mxu0 0
        %2164 = vmatprep.subr.bf16.mxu0 0
        %2165 = vmatpush2.bf16.msra.mxu0 0
        %2166 = vmatprep.subr.bf16.mxu0 0
        %2167 = vmatpush2.bf16.msra.mxu0 0
        %2168 = vmatprep.subr.bf16.mxu0 0
        %2169 = vmatpush2.bf16.msra.mxu0 0
        %2170 = vmatprep.mubr.bf16.mxu0 0
        %2171 = vmatmul.mubr.bf16.gmra.mxu0 %v2124
        %v2172 = vpop.f32.mrf.mxu0
        %v2173 = vadd.f32 0.0, %v2172
        %v2174 = vpop.f32.mrf.mxu0
        %v2175 = vpop.f32.mrf.mxu0
        %v2176 = vadd.f32 0.0, %v2175
        %v2177 = vpop.f32.mrf.mxu0
        %2178 = vmatprep.mubr.bf16.mxu0 0
        %2179 = vmatmul.mubr.bf16.gmra.mxu0 %v2127
        %v2180 = vpop.f32.mrf.mxu0
        %v2181 = vadd.f32 0.0, %v2180
        %v2182 = vpop.f32.mrf.mxu0
        %v2183 = vpop.f32.mrf.mxu0
        %v2184 = vadd.f32 0.0, %v2183
        %v2185 = vpop.f32.mrf.mxu0
        %2186 = vmatprep.mubr.bf16.mxu0 0
        %2187 = vmatmul.mubr.bf16.gmra.mxu0 %v2130
        %v2188 = vpop.f32.mrf.mxu0
        %v2189 = vadd.f32 0.0, %v2188
        %v2190 = vpop.f32.mrf.mxu0
        %v2191 = vpop.f32.mrf.mxu0
        %v2192 = vadd.f32 0.0, %v2191
        %v2193 = vpop.f32.mrf.mxu0
        %2194 = vmatprep.mubr.bf16.mxu0 0
        %2195 = vmatmul.mubr.bf16.gmra.mxu0 %v2133
        %v2196 = vpop.f32.mrf.mxu0
        %v2197 = vadd.f32 0.0, %v2196
        %v2198 = vpop.f32.mrf.mxu0
        %v2199 = vpop.f32.mrf.mxu0
        %v2200 = vadd.f32 0.0, %v2199
        %v2201 = vpop.f32.mrf.mxu0
        %2202 = vdwg.mxu0
        %v2203 = vadd.f32 %v2100, %v2173
        %v2204 = vadd.f32 %v2101, %v2176
        %v2205 = vadd.f32 %v2102, %v2181
        %v2206 = vadd.f32 %v2103, %v2184
        %v2207 = vadd.f32 %v2104, %v2189
        %v2208 = vadd.f32 %v2105, %v2192
        %v2209 = vadd.f32 %v2106, %v2197
        %v2210 = vadd.f32 %v2107, %v2200
        %v2211 = vld [vmem:[%s2108 + $0x1] sm:$0xff]
        %v2212 = vld [vmem:[%s2108 + $0x11] sm:$0xff]
        %v2213 = vld [vmem:[%s2108 + $0x21] sm:$0xff]
        %v2214 = vld [vmem:[%s2108 + $0x31] sm:$0xff]
        %v2215 = vld [vmem:[%s2108 + $0x41] sm:$0xff]
        %v2216 = vld [vmem:[%s2108 + $0x51] sm:$0xff]
        %v2217 = vld [vmem:[%s2108 + $0x61] sm:$0xff]
        %v2218 = vld [vmem:[%s2108 + $0x71] sm:$0xff]
        %v2219 = vpack.c.bf16 %v2212, %v2211
        %v2220 = vpack.c.bf16 %v2214, %v2213
        %v2221 = vpack.c.bf16 %v2216, %v2215
        %v2222 = vpack.c.bf16 %v2218, %v2217
        %s2223 = scalar_lea.vmem %s6, 28
        %v2224 = vld [vmem:[%s2223] sm:$0xf]
        %v2226 = vsel %vm356, %v2219, 0
        %v2229 = vsel %vm356, %v2220, 0
        %v2232 = vsel %vm356, %v2221, 0
        %v2235 = vsel %vm356, %v2222, 0
        %v2238 = vsel %vm1551, %v2224, 0
        %2240 = vmatprep.subr.bf16.mxu0 0
        %2241 = vmatpush1.bf16.msra.mxu0 0
        %2242 = vmatprep.subr.bf16.mxu0 0
        %2243 = vmatpush1.bf16.msra.mxu0 0
        %2244 = vmatprep.subr.bf16.mxu0 0
        %2245 = vmatpush1.bf16.msra.mxu0 0
        %2246 = vmatprep.subr.bf16.mxu0 0
        %2247 = vmatpush1.bf16.msra.mxu0 0
        %2248 = vmatprep.subr.bf16.mxu0 0
        %2249 = vmatpush1.bf16.msra.mxu0 0
        %2250 = vmatprep.subr.bf16.mxu0 0
        %2251 = vmatpush1.bf16.msra.mxu0 0
        %2252 = vmatprep.subr.bf16.mxu0 0
        %2253 = vmatpush1.bf16.msra.mxu0 0
        %2254 = vmatprep.subr.bf16.mxu0 0
        %2255 = vmatpush1.bf16.msra.mxu0 %v2238
        %2256 = vmatprep.subr.bf16.mxu0 0
        %2257 = vmatpush2.bf16.msra.mxu0 0
        %2258 = vmatprep.subr.bf16.mxu0 0
        %2259 = vmatpush2.bf16.msra.mxu0 0
        %2260 = vmatprep.subr.bf16.mxu0 0
        %2261 = vmatpush2.bf16.msra.mxu0 0
        %2262 = vmatprep.subr.bf16.mxu0 0
        %2263 = vmatpush2.bf16.msra.mxu0 0
        %2264 = vmatprep.subr.bf16.mxu0 0
        %2265 = vmatpush2.bf16.msra.mxu0 0
        %2266 = vmatprep.subr.bf16.mxu0 0
        %2267 = vmatpush2.bf16.msra.mxu0 0
        %2268 = vmatprep.subr.bf16.mxu0 0
        %2269 = vmatpush2.bf16.msra.mxu0 0
        %2270 = vmatprep.subr.bf16.mxu0 0
        %2271 = vmatpush2.bf16.msra.mxu0 0
        %2272 = vmatprep.mubr.bf16.mxu0 0
        %2273 = vmatmul.mubr.bf16.gmra.mxu0 %v2226
        %v2274 = vpop.f32.mrf.mxu0
        %v2275 = vadd.f32 0.0, %v2274
        %v2276 = vpop.f32.mrf.mxu0
        %v2277 = vpop.f32.mrf.mxu0
        %v2278 = vadd.f32 0.0, %v2277
        %v2279 = vpop.f32.mrf.mxu0
        %2280 = vmatprep.mubr.bf16.mxu0 0
        %2281 = vmatmul.mubr.bf16.gmra.mxu0 %v2229
        %v2282 = vpop.f32.mrf.mxu0
        %v2283 = vadd.f32 0.0, %v2282
        %v2284 = vpop.f32.mrf.mxu0
        %v2285 = vpop.f32.mrf.mxu0
        %v2286 = vadd.f32 0.0, %v2285
        %v2287 = vpop.f32.mrf.mxu0
        %2288 = vmatprep.mubr.bf16.mxu0 0
        %2289 = vmatmul.mubr.bf16.gmra.mxu0 %v2232
        %v2290 = vpop.f32.mrf.mxu0
        %v2291 = vadd.f32 0.0, %v2290
        %v2292 = vpop.f32.mrf.mxu0
        %v2293 = vpop.f32.mrf.mxu0
        %v2294 = vadd.f32 0.0, %v2293
        %v2295 = vpop.f32.mrf.mxu0
        %2296 = vmatprep.mubr.bf16.mxu0 0
        %2297 = vmatmul.mubr.bf16.gmra.mxu0 %v2235
        %v2298 = vpop.f32.mrf.mxu0
        %v2299 = vadd.f32 0.0, %v2298
        %v2300 = vpop.f32.mrf.mxu0
        %v2301 = vpop.f32.mrf.mxu0
        %v2302 = vadd.f32 0.0, %v2301
        %v2303 = vpop.f32.mrf.mxu0
        %2304 = vdwg.mxu0
        %v2305 = vadd.f32 %v2203, %v2275
        %v2306 = vadd.f32 %v2204, %v2278
        %v2307 = vadd.f32 %v2205, %v2283
        %v2308 = vadd.f32 %v2206, %v2286
        %v2309 = vadd.f32 %v2207, %v2291
        %v2310 = vadd.f32 %v2208, %v2294
        %v2311 = vadd.f32 %v2209, %v2299
        %v2312 = vadd.f32 %v2210, %v2302
        %v2313 = vld [vmem:[%s2108 + $0x2] sm:$0xff]
        %v2314 = vld [vmem:[%s2108 + $0x12] sm:$0xff]
        %v2315 = vld [vmem:[%s2108 + $0x22] sm:$0xff]
        %v2316 = vld [vmem:[%s2108 + $0x32] sm:$0xff]
        %v2317 = vld [vmem:[%s2108 + $0x42] sm:$0xff]
        %v2318 = vld [vmem:[%s2108 + $0x52] sm:$0xff]
        %v2319 = vld [vmem:[%s2108 + $0x62] sm:$0xff]
        %v2320 = vld [vmem:[%s2108 + $0x72] sm:$0xff]
        %v2321 = vpack.c.bf16 %v2314, %v2313
        %v2322 = vpack.c.bf16 %v2316, %v2315
        %v2323 = vpack.c.bf16 %v2318, %v2317
        %v2324 = vpack.c.bf16 %v2320, %v2319
        %s2325 = scalar_lea.vmem %s6, 32
        %v2326 = vld [vmem:[%s2325] sm:$0xf]
        %v2328 = vsel %vm356, %v2321, 0
        %v2331 = vsel %vm356, %v2322, 0
        %v2334 = vsel %vm356, %v2323, 0
        %v2337 = vsel %vm356, %v2324, 0
        %v2340 = vsel %vm1551, %v2326, 0
        %2342 = vmatprep.subr.bf16.mxu0 0
        %2343 = vmatpush1.bf16.msra.mxu0 0
        %2344 = vmatprep.subr.bf16.mxu0 0
        %2345 = vmatpush1.bf16.msra.mxu0 0
        %2346 = vmatprep.subr.bf16.mxu0 0
        %2347 = vmatpush1.bf16.msra.mxu0 0
        %2348 = vmatprep.subr.bf16.mxu0 0
        %2349 = vmatpush1.bf16.msra.mxu0 0
        %2350 = vmatprep.subr.bf16.mxu0 0
        %2351 = vmatpush1.bf16.msra.mxu0 0
        %2352 = vmatprep.subr.bf16.mxu0 0
        %2353 = vmatpush1.bf16.msra.mxu0 0
        %2354 = vmatprep.subr.bf16.mxu0 0
        %2355 = vmatpush1.bf16.msra.mxu0 0
        %2356 = vmatprep.subr.bf16.mxu0 0
        %2357 = vmatpush1.bf16.msra.mxu0 %v2340
        %2358 = vmatprep.subr.bf16.mxu0 0
        %2359 = vmatpush2.bf16.msra.mxu0 0
        %2360 = vmatprep.subr.bf16.mxu0 0
        %2361 = vmatpush2.bf16.msra.mxu0 0
        %2362 = vmatprep.subr.bf16.mxu0 0
        %2363 = vmatpush2.bf16.msra.mxu0 0
        %2364 = vmatprep.subr.bf16.mxu0 0
        %2365 = vmatpush2.bf16.msra.mxu0 0
        %2366 = vmatprep.subr.bf16.mxu0 0
        %2367 = vmatpush2.bf16.msra.mxu0 0
        %2368 = vmatprep.subr.bf16.mxu0 0
        %2369 = vmatpush2.bf16.msra.mxu0 0
        %2370 = vmatprep.subr.bf16.mxu0 0
        %2371 = vmatpush2.bf16.msra.mxu0 0
        %2372 = vmatprep.subr.bf16.mxu0 0
        %2373 = vmatpush2.bf16.msra.mxu0 0
        %2374 = vmatprep.mubr.bf16.mxu0 0
        %2375 = vmatmul.mubr.bf16.gmra.mxu0 %v2328
        %v2376 = vpop.f32.mrf.mxu0
        %v2377 = vadd.f32 0.0, %v2376
        %v2378 = vpop.f32.mrf.mxu0
        %v2379 = vpop.f32.mrf.mxu0
        %v2380 = vadd.f32 0.0, %v2379
        %v2381 = vpop.f32.mrf.mxu0
        %2382 = vmatprep.mubr.bf16.mxu0 0
        %2383 = vmatmul.mubr.bf16.gmra.mxu0 %v2331
        %v2384 = vpop.f32.mrf.mxu0
        %v2385 = vadd.f32 0.0, %v2384
        %v2386 = vpop.f32.mrf.mxu0
        %v2387 = vpop.f32.mrf.mxu0
        %v2388 = vadd.f32 0.0, %v2387
        %v2389 = vpop.f32.mrf.mxu0
        %2390 = vmatprep.mubr.bf16.mxu0 0
        %2391 = vmatmul.mubr.bf16.gmra.mxu0 %v2334
        %v2392 = vpop.f32.mrf.mxu0
        %v2393 = vadd.f32 0.0, %v2392
        %v2394 = vpop.f32.mrf.mxu0
        %v2395 = vpop.f32.mrf.mxu0
        %v2396 = vadd.f32 0.0, %v2395
        %v2397 = vpop.f32.mrf.mxu0
        %2398 = vmatprep.mubr.bf16.mxu0 0
        %2399 = vmatmul.mubr.bf16.gmra.mxu0 %v2337
        %v2400 = vpop.f32.mrf.mxu0
        %v2401 = vadd.f32 0.0, %v2400
        %v2402 = vpop.f32.mrf.mxu0
        %v2403 = vpop.f32.mrf.mxu0
        %v2404 = vadd.f32 0.0, %v2403
        %v2405 = vpop.f32.mrf.mxu0
        %2406 = vdwg.mxu0
        %v2407 = vadd.f32 %v2305, %v2377
        %v2408 = vadd.f32 %v2306, %v2380
        %v2409 = vadd.f32 %v2307, %v2385
        %v2410 = vadd.f32 %v2308, %v2388
        %v2411 = vadd.f32 %v2309, %v2393
        %v2412 = vadd.f32 %v2310, %v2396
        %v2413 = vadd.f32 %v2311, %v2401
        %v2414 = vadd.f32 %v2312, %v2404
        %v2415 = vld [vmem:[%s303] sm:$0xff]
        %v2416 = vld [vmem:[%s303 + $0x8] sm:$0xff]
        %v2417 = vld [vmem:[%s303 + $0x10] sm:$0xff]
        %v2418 = vld [vmem:[%s303 + $0x18] sm:$0xff]
        %v2419 = vld [vmem:[%s303 + $0x20] sm:$0xff]
        %v2420 = vld [vmem:[%s303 + $0x28] sm:$0xff]
        %v2421 = vld [vmem:[%s303 + $0x30] sm:$0xff]
        %v2422 = vld [vmem:[%s303 + $0x38] sm:$0xff]
        %v2423 = vpack.c.bf16 %v2416, %v2415
        %v2424 = vpack.c.bf16 %v2418, %v2417
        %v2425 = vpack.c.bf16 %v2420, %v2419
        %v2426 = vpack.c.bf16 %v2422, %v2421
        %v2427 = vld [vmem:[%s7] sm:$0x3]
        %v2429 = vsel %vm344, %v2423, 0
        %v2432 = vsel %vm344, %v2424, 0
        %v2435 = vsel %vm344, %v2425, 0
        %v2438 = vsel %vm344, %v2426, 0
        %v2441 = vsel %vm602, %v2427, 0
        %2443 = vmatprep.subr.bf16.mxu0 0
        %2444 = vmatpush1.bf16.msra.mxu0 0
        %2445 = vmatprep.subr.bf16.mxu0 0
        %2446 = vmatpush1.bf16.msra.mxu0 0
        %2447 = vmatprep.subr.bf16.mxu0 0
        %2448 = vmatpush1.bf16.msra.mxu0 0
        %2449 = vmatprep.subr.bf16.mxu0 0
        %2450 = vmatpush1.bf16.msra.mxu0 0
        %2451 = vmatprep.subr.bf16.mxu0 0
        %2452 = vmatpush1.bf16.msra.mxu0 0
        %2453 = vmatprep.subr.bf16.mxu0 0
        %2454 = vmatpush1.bf16.msra.mxu0 0
        %2455 = vmatprep.subr.bf16.mxu0 0
        %2456 = vmatpush1.bf16.msra.mxu0 0
        %2457 = vmatprep.subr.bf16.mxu0 0
        %2458 = vmatpush1.bf16.msra.mxu0 %v2441
        %2459 = vmatprep.subr.bf16.mxu0 0
        %2460 = vmatpush2.bf16.msra.mxu0 0
        %2461 = vmatprep.subr.bf16.mxu0 0
        %2462 = vmatpush2.bf16.msra.mxu0 0
        %2463 = vmatprep.subr.bf16.mxu0 0
        %2464 = vmatpush2.bf16.msra.mxu0 0
        %2465 = vmatprep.subr.bf16.mxu0 0
        %2466 = vmatpush2.bf16.msra.mxu0 0
        %2467 = vmatprep.subr.bf16.mxu0 0
        %2468 = vmatpush2.bf16.msra.mxu0 0
        %2469 = vmatprep.subr.bf16.mxu0 0
        %2470 = vmatpush2.bf16.msra.mxu0 0
        %2471 = vmatprep.subr.bf16.mxu0 0
        %2472 = vmatpush2.bf16.msra.mxu0 0
        %2473 = vmatprep.subr.bf16.mxu0 0
        %2474 = vmatpush2.bf16.msra.mxu0 0
        %2475 = vmatprep.mubr.bf16.mxu0 0
        %2476 = vmatmul.mubr.bf16.gmra.mxu0 %v2429
        %v2477 = vpop.f32.mrf.mxu0
        %v2478 = vadd.f32 0.0, %v2477
        %v2479 = vpop.f32.mrf.mxu0
        %v2480 = vpop.f32.mrf.mxu0
        %v2481 = vadd.f32 0.0, %v2480
        %v2482 = vpop.f32.mrf.mxu0
        %2483 = vmatprep.mubr.bf16.mxu0 0
        %2484 = vmatmul.mubr.bf16.gmra.mxu0 %v2432
        %v2485 = vpop.f32.mrf.mxu0
        %v2486 = vadd.f32 0.0, %v2485
        %v2487 = vpop.f32.mrf.mxu0
        %v2488 = vpop.f32.mrf.mxu0
        %v2489 = vadd.f32 0.0, %v2488
        %v2490 = vpop.f32.mrf.mxu0
        %2491 = vmatprep.mubr.bf16.mxu0 0
        %2492 = vmatmul.mubr.bf16.gmra.mxu0 %v2435
        %v2493 = vpop.f32.mrf.mxu0
        %v2494 = vadd.f32 0.0, %v2493
        %v2495 = vpop.f32.mrf.mxu0
        %v2496 = vpop.f32.mrf.mxu0
        %v2497 = vadd.f32 0.0, %v2496
        %v2498 = vpop.f32.mrf.mxu0
        %2499 = vmatprep.mubr.bf16.mxu0 0
        %2500 = vmatmul.mubr.bf16.gmra.mxu0 %v2438
        %v2501 = vpop.f32.mrf.mxu0
        %v2502 = vadd.f32 0.0, %v2501
        %v2503 = vpop.f32.mrf.mxu0
        %v2504 = vpop.f32.mrf.mxu0
        %v2505 = vadd.f32 0.0, %v2504
        %v2506 = vpop.f32.mrf.mxu0
        %2507 = vdwg.mxu0
        %v2508 = vadd.f32 %v2407, %v2478
        %v2509 = vadd.f32 %v2408, %v2481
        %v2510 = vadd.f32 %v2409, %v2486
        %v2511 = vadd.f32 %v2410, %v2489
        %v2512 = vadd.f32 %v2411, %v2494
        %v2513 = vadd.f32 %v2412, %v2497
        %v2514 = vadd.f32 %v2413, %v2502
        %v2515 = vadd.f32 %v2414, %v2505
        %2516 = vst.msk [vmem:[%s298] sm:$0xff] %vm356, %v2508
        %2517 = vst.msk [vmem:[%s298 + $0x8] sm:$0xff] %vm356, %v2509
        %2518 = vst.msk [vmem:[%s298 + $0x10] sm:$0xff] %vm356, %v2510
        %2519 = vst.msk [vmem:[%s298 + $0x18] sm:$0xff] %vm356, %v2511
        %2520 = vst.msk [vmem:[%s298 + $0x20] sm:$0xff] %vm356, %v2512
        %2521 = vst.msk [vmem:[%s298 + $0x28] sm:$0xff] %vm356, %v2513
        %2522 = vst.msk [vmem:[%s298 + $0x30] sm:$0xff] %vm356, %v2514
        %2523 = vst.msk [vmem:[%s298 + $0x38] sm:$0xff] %vm356, %v2515
        %s2524 = sand.u32 %s203, 1
        %s2525 = scalar_lea.sflag [#allocation5], %s2524
        %s2526 = sand.u32 %s203, 1
        %s2527 = smul.addr %s2526, 64
        %s2528 = scalar_lea.vmem [#allocation4], %s2527
        // Predicated region
        $region53: #{tpu_custom_call.1} parent=51 // pred_check
          %p2529 = pneg %p213
        $region54: #{tpu_custom_call.1} parent=51 // pred_check_branch
          %2531 = sbr.rel (%p2529) target = $region56
        $region55: #{tpu_custom_call.1} parent=51 // pred_region
          %s2533 = ssub.s32 1024, 1024
          %2534 = vsyncadd %s2525, %s2533
          %s2535 = smul.addr %s22, 8
          %s2536 = smul.addr %s2535, 128
          %s2537 = scalar_lea.hbm %s8, %s2536
          %s2538 = sshll.u32 %s2528, 4
          %s2539 = int_to_ptr.vmem [resolvable:$true] %s2538
          %2544 = dma.vmem_to_hbm [thread:$0]  %s2539, 1024, %s2537, %s2525, 128, 128, 8
        $region56: #{tpu_custom_call.1} parent=51 // pred_fallthru
          _
      $region52: #{tpu_custom_call.1} parent=5 // pred_fallthru
        _
      %p2545 = scmp.le.s32.totalorder 2, %s17
      // Predicated region
      $region57: #{tpu_custom_call.1} parent=5 // pred_check
        %p2546 = pneg %p2545
      $region58: #{tpu_custom_call.1} parent=5 // pred_check_branch
        %2548 = sbr.rel (%p2546) target = $region60
      $region59: #{tpu_custom_call.1} parent=5 // pred_region
        %s2549 = ssub.s32 %s17, 2
        // Predicated region
        $region61: #{tpu_custom_call.1} parent=59 // pred_check
          %p2550 = pneg %p219
        $region62: #{tpu_custom_call.1} parent=59 // pred_check_branch
          %2552 = sbr.rel (%p2550) target = $region64
        $region63: #{tpu_custom_call.1} parent=59 // pred_region
          %s2553 = sand.u32 %s204, 1
          %s2554 = scalar_lea.sflag [#allocation5], %s2553
          %s2555 = sand.u32 %s204, 1
          %s2556 = smul.addr %s2555, 64
          %s2557 = scalar_lea.vmem [#allocation4], %s2556
          %2558 = dma.done %s2554, 1024
        $region64: #{tpu_custom_call.1} parent=59 // pred_fallthru
          _
      $region60: #{tpu_custom_call.1} parent=5 // pred_fallthru
        _
    $region6: #{tpu_custom_call.1} parent=1 // loop_footer
      %s21 = sadd.s32 1, %s17
    $region7: #{tpu_custom_call.1} parent=1 // loop_footer_branch
      %16 = sbr.rel target = $region3
    $region8: #{tpu_custom_call.1} parent=1 // loop_exit
      _
    %2559 = vsyncpa [#allocation5], 1
    %s2560 = scalar_lea.sflag [#allocation5], 1
    %2561 = vsyncpa %s2560, 1

</llo_original>
